<compile_context>
chip_gen: v5e
topology: v5e:2x2
jax: 0.10.0
libtpu: 0.0.40
codegen_flags: <defaults>
</compile_context>

<pallas_src>
import functools

import jax
import jax.numpy as jnp
from jax import lax
from jax.experimental import pallas as pl
from jax.experimental.pallas import tpu as pltpu

# ---------------- scaled-down Image2Token config (PyTorch defaults in ()) ----
VIS_HIDDEN = 64          # visual_hidden_size (1024)
TEXT_HIDDEN = 128        # text_hidden_size   (2048)
MAX_LEN = 8              # max_length         (77)
NUM_LAYERS = 2           # num_layers         (3)
NHEAD = TEXT_HIDDEN // 64            # nhead = text_hidden_size // 64
HEAD_DIM = TEXT_HIDDEN // NHEAD
FFN_DIM = 256            # dim_feedforward    (2048)
LN_EPS = 1e-5            # nn.LayerNorm default eps

# ---- packed per-layer WEIGHT slab row offsets (last dim = 2*D = 256 lanes) --
_R_SA_QV = 0                     # (D, 2D): [w_q * scale | w_v]      (self-attn)
_R_SA_KT_O = TEXT_HIDDEN         # (D, 2D): [w_k^T       | w_o]      (self-attn)
_R_CA_Q_KT = 2 * TEXT_HIDDEN     # (D, 2D): [w_q * scale | w_k^T]    (cross-attn)
_R_CA_V_O = 3 * TEXT_HIDDEN      # (D, 2D): [w_v         | w_o]      (cross-attn)
_R_FFN1 = 4 * TEXT_HIDDEN        # (D, F)
_R_FFN2 = 5 * TEXT_HIDDEN        # (F, D) | zero padding
_R_W_TOTAL = 5 * TEXT_HIDDEN + FFN_DIM          # 896 rows

# ---- packed per-layer BIAS/LN slab rows (last dim = 2*D = 256 lanes) --------
_B_SA_QV = 0        # [sa b_q*scale | sa b_v]   (fused Q|V bias)
_B_SA_O_CA_Q = 1    # [sa b_o       | ca b_q*scale]
_B_CA_V_O = 2       # [ca b_v       | ca b_o]
_B_FFN1 = 3         # ffn b1 (full 256)
_B_FFN2 = 4         # [ffn b2       | 0]
_B_LN1 = 5          # [gamma | beta]
_B_LN2 = 6
_B_LN3 = 7
_R_B_TOTAL = 8


# ------------------------- in-kernel helper functions ------------------------
def _softmax_lastdim(s):
    m = jnp.max(s, axis=-1, keepdims=True)
    p = jnp.exp(s - m)
    return p / jnp.sum(p, axis=-1, keepdims=True)      # exact division


def _layer_norm(y, gamma, beta):
    mu = jnp.mean(y, axis=-1, keepdims=True)
    d = y - mu
    var = jnp.mean(d * d, axis=-1, keepdims=True)
    return d * lax.rsqrt(var + LN_EPS) * gamma + beta


# --------------------------- fully fused Pallas kernel -----------------------
def _img2token_kernel(x_ref, base_ref, w_ref, b_ref, o_ref, *,
                      batch, s_img, num_layers):
    d = TEXT_HIDDEN
    hd = HEAD_DIM
    f32 = jnp.float32

    # ---- constants hoisted once: head masks + block-diagonal batch masks ----
    lane = lax.broadcasted_iota(jnp.int32, (1, d), 1)
    head_lane = [(lane >= h * hd) & (lane < (h + 1) * hd) for h in range(NHEAD)]
    row = lax.broadcasted_iota(jnp.int32, (d, 1), 0)
    head_row = [(row >= h * hd) & (row < (h + 1) * hd) for h in range(NHEAD)]

    def block_diag_mask(sq, sk):
        # additive mask: 0 on same-batch blocks, -1e30 on cross-batch blocks.
        r = lax.broadcasted_iota(jnp.int32, (batch * sq, batch * sk), 0)
        c = lax.broadcasted_iota(jnp.int32, (batch * sq, batch * sk), 1)
        same = (r < 0)                              # all-False, right shape
        for b in range(batch):                      # static unroll (no int div)
            same = same | (((r >= b * sq) & (r < (b + 1) * sq)) &
                           ((c >= b * sk) & (c < (b + 1) * sk)))
        return jnp.where(same, f32(0.0), f32(-1e30))

    self_mask = block_diag_mask(MAX_LEN, MAX_LEN)      # (B*L, B*L)
    cross_mask = block_diag_mask(MAX_LEN, s_img)       # (B*L, B*S_img)

    def attn_core(q, kT, v, bmask):
        """All batches at once. q:(Mq,D) scale folded, kT:(D,Mk), v:(Mk,D)."""
        out = jnp.zeros_like(q)
        for h in range(NHEAD):                         # NHEAD=2, static unroll
            # zero the other head's ROWS of K^T: full-D contraction then gives
            # exactly head-h scores with no 64-lane slicing of q or k.
            kT_h = jnp.where(head_row[h], kT, f32(0.0))
            s = jnp.dot(q, kT_h, preferred_element_type=f32) + bmask
            p = _softmax_lastdim(s)
            o_h = jnp.dot(p, v, preferred_element_type=f32)   # full-width V
            out = out + jnp.where(head_lane[h], o_h, f32(0.0))
        return out

    # ---- visual_proj: decoder memory for cross-attention (stays in VMEM) ----
    vp_w = base_ref[0:VIS_HIDDEN, :]
    query = base_ref[VIS_HIDDEN:VIS_HIDDEN + MAX_LEN, :]
    vp_b = base_ref[VIS_HIDDEN + MAX_LEN:VIS_HIDDEN + MAX_LEN + 1, :]
    mem = jnp.dot(x_ref[...], vp_w, preferred_element_type=f32) + vp_b

    # self.query.repeat(b, 1, 1), flattened to (B*MAX_LEN, D)
    x = jnp.concatenate([query] * batch, axis=0)

    for l in range(num_layers):                        # 2 layers, static unroll
        # ---------------- self-attention (fused Q|V projection) -------------
        qv = (jnp.dot(x, w_ref[l, _R_SA_QV:_R_SA_QV + d, :],
                      preferred_element_type=f32)
              + b_ref[l, _B_SA_QV:_B_SA_QV + 1, :])
        q, v = qv[:, :d], qv[:, d:]                    # 128-lane tile split
        # K^T emitted straight from the projection (weight pre-transposed).
        # K bias dropped: softmax is exactly invariant to it (see header).
        kT = lax.dot_general(w_ref[l, _R_SA_KT_O:_R_SA_KT_O + d, 0:d], x,
                             (((1,), (1,)), ((), ())),
                             preferred_element_type=f32)        # (D, B*L)
        attn = attn_core(q, kT, v, self_mask)
        sa = (jnp.dot(attn, w_ref[l, _R_SA_KT_O:_R_SA_KT_O + d, d:2 * d],
                      preferred_element_type=f32)
              + b_ref[l, _B_SA_O_CA_Q:_B_SA_O_CA_Q + 1, 0:d])
        x = _layer_norm(x + sa,
                        b_ref[l, _B_LN1:_B_LN1 + 1, 0:d],
                        b_ref[l, _B_LN1:_B_LN1 + 1, d:2 * d])

        # ---------------- cross-attention over projected image embeds -------
        q = (jnp.dot(x, w_ref[l, _R_CA_Q_KT:_R_CA_Q_KT + d, 0:d],
                     preferred_element_type=f32)
             + b_ref[l, _B_SA_O_CA_Q:_B_SA_O_CA_Q + 1, d:2 * d])
        kT = lax.dot_general(w_ref[l, _R_CA_Q_KT:_R_CA_Q_KT + d, d:2 * d], mem,
                             (((1,), (1,)), ((), ())),
                             preferred_element_type=f32)        # (D, B*S_img)
        v = (jnp.dot(mem, w_ref[l, _R_CA_V_O:_R_CA_V_O + d, 0:d],
                     preferred_element_type=f32)
             + b_ref[l, _B_CA_V_O:_B_CA_V_O + 1, 0:d])
        attn = attn_core(q, kT, v, cross_mask)
        ca = (jnp.dot(attn, w_ref[l, _R_CA_V_O:_R_CA_V_O + d, d:2 * d],
                      preferred_element_type=f32)
              + b_ref[l, _B_CA_V_O:_B_CA_V_O + 1, d:2 * d])
        x = _layer_norm(x + ca,
                        b_ref[l, _B_LN2:_B_LN2 + 1, 0:d],
                        b_ref[l, _B_LN2:_B_LN2 + 1, d:2 * d])

        # ---------------- FFN (relu); hidden (M, 256) never leaves VMEM -----
        h = jnp.maximum(
            jnp.dot(x, w_ref[l, _R_FFN1:_R_FFN1 + d, :],
                    preferred_element_type=f32)
            + b_ref[l, _B_FFN1:_B_FFN1 + 1, :], 0.0)
        y = (jnp.dot(h, w_ref[l, _R_FFN2:_R_FFN2 + FFN_DIM, 0:d],
                     preferred_element_type=f32)
             + b_ref[l, _B_FFN2:_B_FFN2 + 1, 0:d])
        x = _layer_norm(x + y,
                        b_ref[l, _B_LN3:_B_LN3 + 1, 0:d],
                        b_ref[l, _B_LN3:_B_LN3 + 1, d:2 * d])

    o_ref[...] = x.astype(o_ref.dtype)           # lane-dense (B*MAX_LEN, 128)


# ----------------------- host-side one-time parameter repack -----------------
def pack_img2token_params(p):
    """19 small tensors -> 3 HBM slabs (4 kernel DMAs total).

    Folds the attention scale into W_q / b_q, stores K projection weights
    pre-transposed, drops the (softmax-invariant) K biases, and packs all
    biases + LayerNorm params into one (NUM_LAYERS, 8, 2D) slab.
    """
    d, f = TEXT_HIDDEN, FFN_DIM
    scale = 1.0 / (HEAD_DIM ** 0.5)

    base = jnp.concatenate(
        [p["visual_proj_w"], p["query"], p["visual_proj_b"]], axis=0)  # (73,128)

    w_layers, b_layers = [], []
    for l in range(NUM_LAYERS):
        sa_w, sa_b = p["sa_wqkv"][l], p["sa_bqkv"][l]
        ca_w, ca_b = p["ca_wqkv"][l], p["ca_bqkv"][l]
        wl = jnp.concatenate([
            jnp.concatenate([sa_w[:, :d] * scale, sa_w[:, 2 * d:]], axis=1),
            jnp.concatenate([sa_w[:, d:2 * d].T, p["sa_wo"][l]], axis=1),
            jnp.concatenate([ca_w[:, :d] * scale, ca_w[:, d:2 * d].T], axis=1),
            jnp.concatenate([ca_w[:, 2 * d:], p["ca_wo"][l]], axis=1),
            p["ffn_w1"][l],
            jnp.concatenate([p["ffn_w2"][l],
                             jnp.zeros((f, d), jnp.float32)], axis=1),
        ], axis=0)                                                    # (896,256)
        bl = jnp.concatenate([
            jnp.concatenate([sa_b[:, :d] * scale, sa_b[:, 2 * d:]], axis=1),
            jnp.concatenate([p["sa_bo"][l], ca_b[:, :d] * scale], axis=1),
            jnp.concatenate([ca_b[:, 2 * d:], p["ca_bo"][l]], axis=1),
            p["ffn_b1"][l],
            jnp.concatenate([p["ffn_b2"][l],
                             jnp.zeros((1, d), jnp.float32)], axis=1),
            jnp.concatenate([p["ln_g"][l, 0:1], p["ln_b"][l, 0:1]], axis=1),
            jnp.concatenate([p["ln_g"][l, 1:2], p["ln_b"][l, 1:2]], axis=1),
            jnp.concatenate([p["ln_g"][l, 2:3], p["ln_b"][l, 2:3]], axis=1),
        ], axis=0)                                                    # (8,256)
        w_layers.append(wl)
        b_layers.append(bl)
    return dict(base=base,
                w=jnp.stack(w_layers, axis=0),     # (NUM_LAYERS, 896, 256)
                b=jnp.stack(b_layers, axis=0))     # (NUM_LAYERS,   8, 256)


# ------------------------------- forward wrappers ----------------------------
def image2token_forward_packed(packed, image_embeds):
    """Image2Token.forward on pre-packed params: one fused pallas_call."""
    B, S, Dv = image_embeds.shape
    out2d = pl.pallas_call(
        functools.partial(_img2token_kernel, batch=B, s_img=S,
                          num_layers=NUM_LAYERS),
        # grid=() -> single invocation; all operands are whole-array VMEM blocks.
        out_shape=jax.ShapeDtypeStruct((B * MAX_LEN, TEXT_HIDDEN), jnp.float32),
        compiler_params=pltpu.CompilerParams(vmem_limit_bytes=32 * 1024 * 1024),
    )(image_embeds.reshape(B * S, Dv), packed["base"], packed["w"], packed["b"])
    return out2d.reshape(B, MAX_LEN, TEXT_HIDDEN)


def img_embedding_forward(params, image_embeds):
    # TODO(synk): down_block_additional_residuals = self.t2i_adapters(img) and
    # the external unet(...) call are third-party networks; this returns
    # encoder_hidden_states, the module's own compute.
    return image2token_forward_packed(
        pack_img2token_params(params["img2token"]), image_embeds)


# ------------------------------ parameter init -------------------------------
def init_params(key):
    """PyTorch-layout weights (Din, Dout); per-layer tensors stacked leading."""
    scale = 0.02

    def dense(k, din, dout):
        kw, kb = jax.random.split(k)
        return (jax.random.normal(kw, (din, dout), jnp.float32) * scale,
                jax.random.normal(kb, (1, dout), jnp.float32) * scale)

    keys = jax.random.split(key, 2 + NUM_LAYERS)
    vp_w, vp_b = dense(keys[0], VIS_HIDDEN, TEXT_HIDDEN)
    query = jax.random.normal(keys[1], (MAX_LEN, TEXT_HIDDEN), jnp.float32)

    names = ("sa_wqkv", "sa_bqkv", "sa_wo", "sa_bo",
             "ca_wqkv", "ca_bqkv", "ca_wo", "ca_bo",
             "ffn_w1", "ffn_b1", "ffn_w2", "ffn_b2", "ln_g", "ln_b")
    per_layer = {n: [] for n in names}
    for li in range(NUM_LAYERS):
        lk = jax.random.split(keys[2 + li], 6)
        v = {}
        v["sa_wqkv"], v["sa_bqkv"] = dense(lk[0], TEXT_HIDDEN, 3 * TEXT_HIDDEN)
        v["sa_wo"], v["sa_bo"] = dense(lk[1], TEXT_HIDDEN, TEXT_HIDDEN)
        v["ca_wqkv"], v["ca_bqkv"] = dense(lk[2], TEXT_HIDDEN, 3 * TEXT_HIDDEN)
        v["ca_wo"], v["ca_bo"] = dense(lk[3], TEXT_HIDDEN, TEXT_HIDDEN)
        v["ffn_w1"], v["ffn_b1"] = dense(lk[4], TEXT_HIDDEN, FFN_DIM)
        v["ffn_w2"], v["ffn_b2"] = dense(lk[5], FFN_DIM, TEXT_HIDDEN)
        v["ln_g"] = jnp.ones((3, TEXT_HIDDEN), jnp.float32)   # ln1, ln2, ln3
        v["ln_b"] = jnp.zeros((3, TEXT_HIDDEN), jnp.float32)
        for n in names:
            per_layer[n].append(v[n])
    stacked = {n: jnp.stack(per_layer[n], axis=0) for n in names}
    return dict(img2token=dict(visual_proj_w=vp_w, visual_proj_b=vp_b,
                               query=query, **stacked))


# -------------------------- pure-JAX reference (check) ------------------------
def _mm(a, b):
    return jnp.matmul(a, b, precision=lax.Precision.HIGHEST)


def _ln_ref(y, g, b):
    mu = y.mean(-1, keepdims=True)
    var = ((y - mu) ** 2).mean(-1, keepdims=True)
    return (y - mu) * lax.rsqrt(var + LN_EPS) * g + b


def _mha_ref(x_q, x_kv, wqkv, bqkv, wo, bo):
    B, Sq, D = x_q.shape
    Sk = x_kv.shape[1]
    q = _mm(x_q, wqkv[:, :D]) + bqkv[:, :D]
    k = _mm(x_kv, wqkv[:, D:2 * D]) + bqkv[:, D:2 * D]
    v = _mm(x_kv, wqkv[:, 2 * D:]) + bqkv[:, 2 * D:]
    q = q.reshape(B, Sq, NHEAD, HEAD_DIM).transpose(0, 2, 1, 3)
    k = k.reshape(B, Sk, NHEAD, HEAD_DIM).transpose(0, 2, 1, 3)
    v = v.reshape(B, Sk, NHEAD, HEAD_DIM).transpose(0, 2, 1, 3)
    s = jnp.einsum("bhqd,bhkd->bhqk", q, k,
                   precision=lax.Precision.HIGHEST) / (HEAD_DIM ** 0.5)
    p = jax.nn.softmax(s, axis=-1)
    o = jnp.einsum("bhqk,bhkd->bhqd", p, v, precision=lax.Precision.HIGHEST)
    o = o.transpose(0, 2, 1, 3).reshape(B, Sq, D)
    return _mm(o, wo) + bo


def image2token_reference(params, image_embeds):
    p = params["img2token"]
    B, S, Dv = image_embeds.shape
    mem = _mm(image_embeds.reshape(B * S, Dv), p["visual_proj_w"]) + p["visual_proj_b"]
    mem = mem.reshape(B, S, TEXT_HIDDEN)
    x = jnp.broadcast_to(p["query"][None], (B, MAX_LEN, TEXT_HIDDEN))
    for l in range(NUM_LAYERS):
        sa = _mha_ref(x, x, p["sa_wqkv"][l], p["sa_bqkv"][l],
                      p["sa_wo"][l], p["sa_bo"][l])
        x = _ln_ref(x + sa, p["ln_g"][l, 0], p["ln_b"][l, 0])
        ca = _mha_ref(x, mem, p["ca_wqkv"][l], p["ca_bqkv"][l],
                      p["ca_wo"][l], p["ca_bo"][l])
        x = _ln_ref(x + ca, p["ln_g"][l, 1], p["ln_b"][l, 1])
        h = jax.nn.relu(_mm(x, p["ffn_w1"][l]) + p["ffn_b1"][l])
        y = _mm(h, p["ffn_w2"][l]) + p["ffn_b2"][l]
        x = _ln_ref(x + y, p["ln_g"][l, 2], p["ln_b"][l, 2])
    return x


# ------------------------------------ main ------------------------------------
if __name__ == "__main__":
    key = jax.random.PRNGKey(0)
    kp, kx = jax.random.split(key)
    params = init_params(kp)

    B, S_IMG = 2, 16
    image_embeds = jax.random.normal(kx, (B, S_IMG, VIS_HIDDEN), jnp.float32)

    # one-time host-side repack (not part of the per-call hot path)
    packed = pack_img2token_params(params["img2token"])

    fwd = jax.jit(image2token_forward_packed)
    out = jax.block_until_ready(fwd(packed, image_embeds))

    assert out.shape == (B, MAX_LEN, TEXT_HIDDEN), out.shape
    assert bool(jnp.all(jnp.isfinite(out)))

    ref = image2token_reference(params, image_embeds)
    max_err = float(jnp.max(jnp.abs(out - ref)))
    assert max_err < 5e-2, f"mismatch vs pure-JAX reference: {max_err}"

    print("KERNEL_OK")
</pallas_src>

<mosaic_0001>
module attributes {stable_mosaic.version = 11 : i64} {
  func.func @_img2token_kernel(%arg0: memref<32x64xf32, #tpu.memory_space<vmem>>, %arg1: memref<73x128xf32, #tpu.memory_space<vmem>>, %arg2: memref<2x896x256xf32, #tpu.memory_space<vmem>>, %arg3: memref<2x8x256xf32, #tpu.memory_space<vmem>>, %arg4: memref<16x128xf32, #tpu.memory_space<vmem>>) attributes {dimension_semantics = [], scalar_prefetch = 0 : i64, scratch_operands = 0 : i64, tpu.core_type = #tpu.core_type<tc>} {
    %0 = tpu.iota {dimensions = array<i32: 1>} : vector<1x128xi32>
    %c0_i32 = arith.constant 0 : i32
    %1 = vector.broadcast %c0_i32 : i32 to vector<1x128xi32>
    %2 = arith.cmpi sge, %0, %1 : vector<1x128xi32>
    %c64_i32 = arith.constant 64 : i32
    %3 = vector.broadcast %c64_i32 : i32 to vector<1x128xi32>
    %4 = arith.cmpi slt, %0, %3 : vector<1x128xi32>
    %5 = arith.andi %2, %4 : vector<1x128xi1>
    %c64_i32_0 = arith.constant 64 : i32
    %6 = vector.broadcast %c64_i32_0 : i32 to vector<1x128xi32>
    %7 = arith.cmpi sge, %0, %6 : vector<1x128xi32>
    %c128_i32 = arith.constant 128 : i32
    %8 = vector.broadcast %c128_i32 : i32 to vector<1x128xi32>
    %9 = arith.cmpi slt, %0, %8 : vector<1x128xi32>
    %10 = arith.andi %7, %9 : vector<1x128xi1>
    %11 = tpu.iota {dimensions = array<i32: 0>} : vector<128x1xi32>
    %c0_i32_1 = arith.constant 0 : i32
    %12 = vector.broadcast %c0_i32_1 : i32 to vector<128x1xi32>
    %13 = arith.cmpi sge, %11, %12 : vector<128x1xi32>
    %c64_i32_2 = arith.constant 64 : i32
    %14 = vector.broadcast %c64_i32_2 : i32 to vector<128x1xi32>
    %15 = arith.cmpi slt, %11, %14 : vector<128x1xi32>
    %16 = arith.andi %13, %15 : vector<128x1xi1>
    %c64_i32_3 = arith.constant 64 : i32
    %17 = vector.broadcast %c64_i32_3 : i32 to vector<128x1xi32>
    %18 = arith.cmpi sge, %11, %17 : vector<128x1xi32>
    %c128_i32_4 = arith.constant 128 : i32
    %19 = vector.broadcast %c128_i32_4 : i32 to vector<128x1xi32>
    %20 = arith.cmpi slt, %11, %19 : vector<128x1xi32>
    %21 = arith.andi %18, %20 : vector<128x1xi1>
    %22 = tpu.iota {dimensions = array<i32: 0>} : vector<16x16xi32>
    %23 = tpu.iota {dimensions = array<i32: 1>} : vector<16x16xi32>
    %c0_i32_5 = arith.constant 0 : i32
    %24 = vector.broadcast %c0_i32_5 : i32 to vector<16x16xi32>
    %25 = arith.cmpi slt, %22, %24 : vector<16x16xi32>
    %c0_i32_6 = arith.constant 0 : i32
    %26 = vector.broadcast %c0_i32_6 : i32 to vector<16x16xi32>
    %27 = arith.cmpi sge, %22, %26 : vector<16x16xi32>
    %c8_i32 = arith.constant 8 : i32
    %28 = vector.broadcast %c8_i32 : i32 to vector<16x16xi32>
    %29 = arith.cmpi slt, %22, %28 : vector<16x16xi32>
    %30 = arith.andi %27, %29 : vector<16x16xi1>
    %c0_i32_7 = arith.constant 0 : i32
    %31 = vector.broadcast %c0_i32_7 : i32 to vector<16x16xi32>
    %32 = arith.cmpi sge, %23, %31 : vector<16x16xi32>
    %c8_i32_8 = arith.constant 8 : i32
    %33 = vector.broadcast %c8_i32_8 : i32 to vector<16x16xi32>
    %34 = arith.cmpi slt, %23, %33 : vector<16x16xi32>
    %35 = arith.andi %32, %34 : vector<16x16xi1>
    %36 = arith.andi %30, %35 : vector<16x16xi1>
    %37 = arith.ori %25, %36 : vector<16x16xi1>
    %c8_i32_9 = arith.constant 8 : i32
    %38 = vector.broadcast %c8_i32_9 : i32 to vector<16x16xi32>
    %39 = arith.cmpi sge, %22, %38 : vector<16x16xi32>
    %c16_i32 = arith.constant 16 : i32
    %40 = vector.broadcast %c16_i32 : i32 to vector<16x16xi32>
    %41 = arith.cmpi slt, %22, %40 : vector<16x16xi32>
    %42 = arith.andi %39, %41 : vector<16x16xi1>
    %c8_i32_10 = arith.constant 8 : i32
    %43 = vector.broadcast %c8_i32_10 : i32 to vector<16x16xi32>
    %44 = arith.cmpi sge, %23, %43 : vector<16x16xi32>
    %c16_i32_11 = arith.constant 16 : i32
    %45 = vector.broadcast %c16_i32_11 : i32 to vector<16x16xi32>
    %46 = arith.cmpi slt, %23, %45 : vector<16x16xi32>
    %47 = arith.andi %44, %46 : vector<16x16xi1>
    %48 = arith.andi %42, %47 : vector<16x16xi1>
    %49 = arith.ori %37, %48 : vector<16x16xi1>
    %cst = arith.constant 0.000000e+00 : f32
    %cst_12 = arith.constant -1.000000e+30 : f32
    %50 = vector.broadcast %cst : f32 to vector<16x16xf32>
    %51 = vector.broadcast %cst_12 : f32 to vector<16x16xf32>
    %52 = arith.select %49, %50, %51 : vector<16x16xi1>, vector<16x16xf32>
    %53 = tpu.iota {dimensions = array<i32: 0>} : vector<16x32xi32>
    %54 = tpu.iota {dimensions = array<i32: 1>} : vector<16x32xi32>
    %c0_i32_13 = arith.constant 0 : i32
    %55 = vector.broadcast %c0_i32_13 : i32 to vector<16x32xi32>
    %56 = arith.cmpi slt, %53, %55 : vector<16x32xi32>
    %c0_i32_14 = arith.constant 0 : i32
    %57 = vector.broadcast %c0_i32_14 : i32 to vector<16x32xi32>
    %58 = arith.cmpi sge, %53, %57 : vector<16x32xi32>
    %c8_i32_15 = arith.constant 8 : i32
    %59 = vector.broadcast %c8_i32_15 : i32 to vector<16x32xi32>
    %60 = arith.cmpi slt, %53, %59 : vector<16x32xi32>
    %61 = arith.andi %58, %60 : vector<16x32xi1>
    %c0_i32_16 = arith.constant 0 : i32
    %62 = vector.broadcast %c0_i32_16 : i32 to vector<16x32xi32>
    %63 = arith.cmpi sge, %54, %62 : vector<16x32xi32>
    %c16_i32_17 = arith.constant 16 : i32
    %64 = vector.broadcast %c16_i32_17 : i32 to vector<16x32xi32>
    %65 = arith.cmpi slt, %54, %64 : vector<16x32xi32>
    %66 = arith.andi %63, %65 : vector<16x32xi1>
    %67 = arith.andi %61, %66 : vector<16x32xi1>
    %68 = arith.ori %56, %67 : vector<16x32xi1>
    %c8_i32_18 = arith.constant 8 : i32
    %69 = vector.broadcast %c8_i32_18 : i32 to vector<16x32xi32>
    %70 = arith.cmpi sge, %53, %69 : vector<16x32xi32>
    %c16_i32_19 = arith.constant 16 : i32
    %71 = vector.broadcast %c16_i32_19 : i32 to vector<16x32xi32>
    %72 = arith.cmpi slt, %53, %71 : vector<16x32xi32>
    %73 = arith.andi %70, %72 : vector<16x32xi1>
    %c16_i32_20 = arith.constant 16 : i32
    %74 = vector.broadcast %c16_i32_20 : i32 to vector<16x32xi32>
    %75 = arith.cmpi sge, %54, %74 : vector<16x32xi32>
    %c32_i32 = arith.constant 32 : i32
    %76 = vector.broadcast %c32_i32 : i32 to vector<16x32xi32>
    %77 = arith.cmpi slt, %54, %76 : vector<16x32xi32>
    %78 = arith.andi %75, %77 : vector<16x32xi1>
    %79 = arith.andi %73, %78 : vector<16x32xi1>
    %80 = arith.ori %68, %79 : vector<16x32xi1>
    %cst_21 = arith.constant 0.000000e+00 : f32
    %cst_22 = arith.constant -1.000000e+30 : f32
    %81 = vector.broadcast %cst_21 : f32 to vector<16x32xf32>
    %82 = vector.broadcast %cst_22 : f32 to vector<16x32xf32>
    %83 = arith.select %80, %81, %82 : vector<16x32xi1>, vector<16x32xf32>
    %c0 = arith.constant 0 : index
    %c0_23 = arith.constant 0 : index
    %84 = vector.load %arg1[%c0, %c0_23] : memref<73x128xf32, #tpu.memory_space<vmem>>, vector<64x128xf32>
    %c64 = arith.constant 64 : index
    %c0_24 = arith.constant 0 : index
    %85 = vector.load %arg1[%c64, %c0_24] : memref<73x128xf32, #tpu.memory_space<vmem>>, vector<8x128xf32>
    %c72 = arith.constant 72 : index
    %c0_25 = arith.constant 0 : index
    %86 = vector.load %arg1[%c72, %c0_25] : memref<73x128xf32, #tpu.memory_space<vmem>>, vector<1x128xf32>
    %c0_26 = arith.constant 0 : index
    %c0_27 = arith.constant 0 : index
    %87 = vector.load %arg0[%c0_26, %c0_27] : memref<32x64xf32, #tpu.memory_space<vmem>>, vector<32x64xf32>
    %cst_28 = arith.constant dense<0.000000e+00> : vector<32x128xf32>
    %88 = tpu.matmul %87, %84, %cst_28 {dimension_numbers = #tpu.dot_dimension_numbers<[1], [0], [0], [1], [0, 0, 1, 1], [], []>} : vector<32x64xf32>, vector<64x128xf32>, vector<32x128xf32> -> vector<32x128xf32>
    %89 = vector.broadcast %86 : vector<1x128xf32> to vector<32x128xf32>
    %90 = arith.addf %88, %89 : vector<32x128xf32>
    %91 = tpu.concatenate %85, %85 in 0 : vector<8x128xf32>, vector<8x128xf32> -> vector<16x128xf32>
    %c0_29 = arith.constant 0 : index
    %c0_30 = arith.constant 0 : index
    %c0_31 = arith.constant 0 : index
    %92 = vector.load %arg2[%c0_29, %c0_30, %c0_31] : memref<2x896x256xf32, #tpu.memory_space<vmem>>, vector<1x128x256xf32>
    %93 = vector.shape_cast %92 : vector<1x128x256xf32> to vector<128x256xf32>
    %cst_32 = arith.constant dense<0.000000e+00> : vector<16x256xf32>
    %94 = tpu.matmul %91, %93, %cst_32 {dimension_numbers = #tpu.dot_dimension_numbers<[1], [0], [0], [1], [0, 0, 1, 1], [], []>} : vector<16x128xf32>, vector<128x256xf32>, vector<16x256xf32> -> vector<16x256xf32>
    %c0_33 = arith.constant 0 : index
    %c0_34 = arith.constant 0 : index
    %c0_35 = arith.constant 0 : index
    %95 = vector.load %arg3[%c0_33, %c0_34, %c0_35] : memref<2x8x256xf32, #tpu.memory_space<vmem>>, vector<1x1x256xf32>
    %96 = vector.shape_cast %95 : vector<1x1x256xf32> to vector<1x256xf32>
    %97 = vector.broadcast %96 : vector<1x256xf32> to vector<16x256xf32>
    %98 = arith.addf %94, %97 : vector<16x256xf32>
    %99 = vector.extract_strided_slice %98 {offsets = [0, 0], sizes = [16, 128], strides = [1, 1]} : vector<16x256xf32> to vector<16x128xf32>
    %100 = vector.extract_strided_slice %98 {offsets = [0, 128], sizes = [16, 128], strides = [1, 1]} : vector<16x256xf32> to vector<16x128xf32>
    %c0_36 = arith.constant 0 : index
    %c128 = arith.constant 128 : index
    %c0_37 = arith.constant 0 : index
    %101 = vector.load %arg2[%c0_36, %c128, %c0_37] : memref<2x896x256xf32, #tpu.memory_space<vmem>>, vector<1x128x128xf32>
    %102 = vector.shape_cast %101 : vector<1x128x128xf32> to vector<128x128xf32>
    %cst_38 = arith.constant dense<0.000000e+00> : vector<128x16xf32>
    %103 = tpu.matmul %102, %91, %cst_38 {dimension_numbers = #tpu.dot_dimension_numbers<[1], [1], [0], [0], [0, 0, 1, 0], [], []>} : vector<128x128xf32>, vector<16x128xf32>, vector<128x16xf32> -> vector<128x16xf32>
    %cst_39 = arith.constant 0.000000e+00 : f32
    %104 = vector.broadcast %cst_39 : f32 to vector<16x128xf32>
    %cst_40 = arith.constant 0.000000e+00 : f32
    %105 = vector.shape_cast %16 : vector<128x1xi1> to vector<128x1xi1>
    %106 = vector.broadcast %105 : vector<128x1xi1> to vector<128x16xi1>
    %107 = vector.broadcast %cst_40 : f32 to vector<128x16xf32>
    %108 = arith.select %106, %103, %107 : vector<128x16xi1>, vector<128x16xf32>
    %cst_41 = arith.constant dense<0.000000e+00> : vector<16x16xf32>
    %109 = tpu.matmul %99, %108, %cst_41 {dimension_numbers = #tpu.dot_dimension_numbers<[1], [0], [0], [1], [0, 0, 1, 1], [], []>} : vector<16x128xf32>, vector<128x16xf32>, vector<16x16xf32> -> vector<16x16xf32>
    %110 = arith.addf %109, %52 : vector<16x16xf32>
    %cst_42 = arith.constant dense<0xFF800000> : vector<16xf32>
    %111 = vector.multi_reduction <maximumf>, %110, %cst_42 [1] : vector<16x16xf32> to vector<16xf32>
    %112 = vector.shape_cast %111 : vector<16xf32> to vector<16x1xf32>
    %113 = vector.broadcast %112 : vector<16x1xf32> to vector<16x16xf32>
    %114 = arith.subf %110, %113 : vector<16x16xf32>
    %115 = math.exp %114 : vector<16x16xf32>
    %cst_43 = arith.constant dense<0.000000e+00> : vector<16xf32>
    %116 = vector.multi_reduction <add>, %115, %cst_43 [1] : vector<16x16xf32> to vector<16xf32>
    %117 = vector.shape_cast %116 : vector<16xf32> to vector<16x1xf32>
    %118 = vector.broadcast %117 : vector<16x1xf32> to vector<16x16xf32>
    %119 = arith.divf %115, %118 : vector<16x16xf32>
    %cst_44 = arith.constant dense<0.000000e+00> : vector<16x128xf32>
    %120 = tpu.matmul %119, %100, %cst_44 {dimension_numbers = #tpu.dot_dimension_numbers<[1], [0], [0], [1], [0, 0, 1, 1], [], []>} : vector<16x16xf32>, vector<16x128xf32>, vector<16x128xf32> -> vector<16x128xf32>
    %cst_45 = arith.constant 0.000000e+00 : f32
    %121 = vector.shape_cast %5 : vector<1x128xi1> to vector<1x128xi1>
    %122 = vector.broadcast %121 : vector<1x128xi1> to vector<16x128xi1>
    %123 = vector.broadcast %cst_45 : f32 to vector<16x128xf32>
    %124 = arith.select %122, %120, %123 : vector<16x128xi1>, vector<16x128xf32>
    %125 = arith.addf %104, %124 : vector<16x128xf32>
    %cst_46 = arith.constant 0.000000e+00 : f32
    %126 = vector.shape_cast %21 : vector<128x1xi1> to vector<128x1xi1>
    %127 = vector.broadcast %126 : vector<128x1xi1> to vector<128x16xi1>
    %128 = vector.broadcast %cst_46 : f32 to vector<128x16xf32>
    %129 = arith.select %127, %103, %128 : vector<128x16xi1>, vector<128x16xf32>
    %cst_47 = arith.constant dense<0.000000e+00> : vector<16x16xf32>
    %130 = tpu.matmul %99, %129, %cst_47 {dimension_numbers = #tpu.dot_dimension_numbers<[1], [0], [0], [1], [0, 0, 1, 1], [], []>} : vector<16x128xf32>, vector<128x16xf32>, vector<16x16xf32> -> vector<16x16xf32>
    %131 = arith.addf %130, %52 : vector<16x16xf32>
    %cst_48 = arith.constant dense<0xFF800000> : vector<16xf32>
    %132 = vector.multi_reduction <maximumf>, %131, %cst_48 [1] : vector<16x16xf32> to vector<16xf32>
    %133 = vector.shape_cast %132 : vector<16xf32> to vector<16x1xf32>
    %134 = vector.broadcast %133 : vector<16x1xf32> to vector<16x16xf32>
    %135 = arith.subf %131, %134 : vector<16x16xf32>
    %136 = math.exp %135 : vector<16x16xf32>
    %cst_49 = arith.constant dense<0.000000e+00> : vector<16xf32>
    %137 = vector.multi_reduction <add>, %136, %cst_49 [1] : vector<16x16xf32> to vector<16xf32>
    %138 = vector.shape_cast %137 : vector<16xf32> to vector<16x1xf32>
    %139 = vector.broadcast %138 : vector<16x1xf32> to vector<16x16xf32>
    %140 = arith.divf %136, %139 : vector<16x16xf32>
    %cst_50 = arith.constant dense<0.000000e+00> : vector<16x128xf32>
    %141 = tpu.matmul %140, %100, %cst_50 {dimension_numbers = #tpu.dot_dimension_numbers<[1], [0], [0], [1], [0, 0, 1, 1], [], []>} : vector<16x16xf32>, vector<16x128xf32>, vector<16x128xf32> -> vector<16x128xf32>
    %cst_51 = arith.constant 0.000000e+00 : f32
    %142 = vector.shape_cast %10 : vector<1x128xi1> to vector<1x128xi1>
    %143 = vector.broadcast %142 : vector<1x128xi1> to vector<16x128xi1>
    %144 = vector.broadcast %cst_51 : f32 to vector<16x128xf32>
    %145 = arith.select %143, %141, %144 : vector<16x128xi1>, vector<16x128xf32>
    %146 = arith.addf %125, %145 : vector<16x128xf32>
    %c0_52 = arith.constant 0 : index
    %c128_53 = arith.constant 128 : index
    %c128_54 = arith.constant 128 : index
    %147 = vector.load %arg2[%c0_52, %c128_53, %c128_54] : memref<2x896x256xf32, #tpu.memory_space<vmem>>, vector<1x128x128xf32>
    %148 = vector.shape_cast %147 : vector<1x128x128xf32> to vector<128x128xf32>
    %cst_55 = arith.constant dense<0.000000e+00> : vector<16x128xf32>
    %149 = tpu.matmul %146, %148, %cst_55 {dimension_numbers = #tpu.dot_dimension_numbers<[1], [0], [0], [1], [0, 0, 1, 1], [], []>} : vector<16x128xf32>, vector<128x128xf32>, vector<16x128xf32> -> vector<16x128xf32>
    %c0_56 = arith.constant 0 : index
    %c1 = arith.constant 1 : index
    %c0_57 = arith.constant 0 : index
    %150 = vector.load %arg3[%c0_56, %c1, %c0_57] : memref<2x8x256xf32, #tpu.memory_space<vmem>>, vector<1x1x128xf32>
    %151 = vector.shape_cast %150 : vector<1x1x128xf32> to vector<1x128xf32>
    %152 = vector.broadcast %151 : vector<1x128xf32> to vector<16x128xf32>
    %153 = arith.addf %149, %152 : vector<16x128xf32>
    %154 = arith.addf %91, %153 : vector<16x128xf32>
    %c0_58 = arith.constant 0 : index
    %c5 = arith.constant 5 : index
    %c0_59 = arith.constant 0 : index
    %155 = vector.load %arg3[%c0_58, %c5, %c0_59] : memref<2x8x256xf32, #tpu.memory_space<vmem>>, vector<1x1x128xf32>
    %156 = vector.shape_cast %155 : vector<1x1x128xf32> to vector<1x128xf32>
    %c0_60 = arith.constant 0 : index
    %c5_61 = arith.constant 5 : index
    %c128_62 = arith.constant 128 : index
    %157 = vector.load %arg3[%c0_60, %c5_61, %c128_62] : memref<2x8x256xf32, #tpu.memory_space<vmem>>, vector<1x1x128xf32>
    %158 = vector.shape_cast %157 : vector<1x1x128xf32> to vector<1x128xf32>
    %cst_63 = arith.constant dense<0.000000e+00> : vector<16xf32>
    %159 = vector.multi_reduction <add>, %154, %cst_63 [1] : vector<16x128xf32> to vector<16xf32>
    %160 = vector.shape_cast %159 : vector<16xf32> to vector<16x1xf32>
    %cst_64 = arith.constant 1.280000e+02 : f32
    %161 = vector.broadcast %cst_64 : f32 to vector<16x1xf32>
    %162 = arith.divf %160, %161 : vector<16x1xf32>
    %163 = vector.broadcast %162 : vector<16x1xf32> to vector<16x128xf32>
    %164 = arith.subf %154, %163 : vector<16x128xf32>
    %165 = arith.mulf %164, %164 : vector<16x128xf32>
    %cst_65 = arith.constant dense<0.000000e+00> : vector<16xf32>
    %166 = vector.multi_reduction <add>, %165, %cst_65 [1] : vector<16x128xf32> to vector<16xf32>
    %167 = vector.shape_cast %166 : vector<16xf32> to vector<16x1xf32>
    %cst_66 = arith.constant 1.280000e+02 : f32
    %168 = vector.broadcast %cst_66 : f32 to vector<16x1xf32>
    %169 = arith.divf %167, %168 : vector<16x1xf32>
    %cst_67 = arith.constant 9.99999974E-6 : f32
    %170 = vector.broadcast %cst_67 : f32 to vector<16x1xf32>
    %171 = arith.addf %169, %170 : vector<16x1xf32>
    %172 = math.rsqrt %171 : vector<16x1xf32>
    %173 = vector.broadcast %172 : vector<16x1xf32> to vector<16x128xf32>
    %174 = arith.mulf %164, %173 : vector<16x128xf32>
    %175 = vector.broadcast %156 : vector<1x128xf32> to vector<16x128xf32>
    %176 = arith.mulf %174, %175 : vector<16x128xf32>
    %177 = vector.broadcast %158 : vector<1x128xf32> to vector<16x128xf32>
    %178 = arith.addf %176, %177 : vector<16x128xf32>
    %c0_68 = arith.constant 0 : index
    %c256 = arith.constant 256 : index
    %c0_69 = arith.constant 0 : index
    %179 = vector.load %arg2[%c0_68, %c256, %c0_69] : memref<2x896x256xf32, #tpu.memory_space<vmem>>, vector<1x128x128xf32>
    %180 = vector.shape_cast %179 : vector<1x128x128xf32> to vector<128x128xf32>
    %cst_70 = arith.constant dense<0.000000e+00> : vector<16x128xf32>
    %181 = tpu.matmul %178, %180, %cst_70 {dimension_numbers = #tpu.dot_dimension_numbers<[1], [0], [0], [1], [0, 0, 1, 1], [], []>} : vector<16x128xf32>, vector<128x128xf32>, vector<16x128xf32> -> vector<16x128xf32>
    %c0_71 = arith.constant 0 : index
    %c1_72 = arith.constant 1 : index
    %c128_73 = arith.constant 128 : index
    %182 = vector.load %arg3[%c0_71, %c1_72, %c128_73] : memref<2x8x256xf32, #tpu.memory_space<vmem>>, vector<1x1x128xf32>
    %183 = vector.shape_cast %182 : vector<1x1x128xf32> to vector<1x128xf32>
    %184 = vector.broadcast %183 : vector<1x128xf32> to vector<16x128xf32>
    %185 = arith.addf %181, %184 : vector<16x128xf32>
    %c0_74 = arith.constant 0 : index
    %c256_75 = arith.constant 256 : index
    %c128_76 = arith.constant 128 : index
    %186 = vector.load %arg2[%c0_74, %c256_75, %c128_76] : memref<2x896x256xf32, #tpu.memory_space<vmem>>, vector<1x128x128xf32>
    %187 = vector.shape_cast %186 : vector<1x128x128xf32> to vector<128x128xf32>
    %cst_77 = arith.constant dense<0.000000e+00> : vector<128x32xf32>
    %188 = tpu.matmul %187, %90, %cst_77 {dimension_numbers = #tpu.dot_dimension_numbers<[1], [1], [0], [0], [0, 0, 1, 0], [], []>} : vector<128x128xf32>, vector<32x128xf32>, vector<128x32xf32> -> vector<128x32xf32>
    %c0_78 = arith.constant 0 : index
    %c384 = arith.constant 384 : index
    %c0_79 = arith.constant 0 : index
    %189 = vector.load %arg2[%c0_78, %c384, %c0_79] : memref<2x896x256xf32, #tpu.memory_space<vmem>>, vector<1x128x128xf32>
    %190 = vector.shape_cast %189 : vector<1x128x128xf32> to vector<128x128xf32>
    %cst_80 = arith.constant dense<0.000000e+00> : vector<32x128xf32>
    %191 = tpu.matmul %90, %190, %cst_80 {dimension_numbers = #tpu.dot_dimension_numbers<[1], [0], [0], [1], [0, 0, 1, 1], [], []>} : vector<32x128xf32>, vector<128x128xf32>, vector<32x128xf32> -> vector<32x128xf32>
    %c0_81 = arith.constant 0 : index
    %c2 = arith.constant 2 : index
    %c0_82 = arith.constant 0 : index
    %192 = vector.load %arg3[%c0_81, %c2, %c0_82] : memref<2x8x256xf32, #tpu.memory_space<vmem>>, vector<1x1x128xf32>
    %193 = vector.shape_cast %192 : vector<1x1x128xf32> to vector<1x128xf32>
    %194 = vector.broadcast %193 : vector<1x128xf32> to vector<32x128xf32>
    %195 = arith.addf %191, %194 : vector<32x128xf32>
    %cst_83 = arith.constant 0.000000e+00 : f32
    %196 = vector.broadcast %cst_83 : f32 to vector<16x128xf32>
    %cst_84 = arith.constant 0.000000e+00 : f32
    %197 = vector.shape_cast %16 : vector<128x1xi1> to vector<128x1xi1>
    %198 = vector.broadcast %197 : vector<128x1xi1> to vector<128x32xi1>
    %199 = vector.broadcast %cst_84 : f32 to vector<128x32xf32>
    %200 = arith.select %198, %188, %199 : vector<128x32xi1>, vector<128x32xf32>
    %cst_85 = arith.constant dense<0.000000e+00> : vector<16x32xf32>
    %201 = tpu.matmul %185, %200, %cst_85 {dimension_numbers = #tpu.dot_dimension_numbers<[1], [0], [0], [1], [0, 0, 1, 1], [], []>} : vector<16x128xf32>, vector<128x32xf32>, vector<16x32xf32> -> vector<16x32xf32>
    %202 = arith.addf %201, %83 : vector<16x32xf32>
    %cst_86 = arith.constant dense<0xFF800000> : vector<16xf32>
    %203 = vector.multi_reduction <maximumf>, %202, %cst_86 [1] : vector<16x32xf32> to vector<16xf32>
    %204 = vector.shape_cast %203 : vector<16xf32> to vector<16x1xf32>
    %205 = vector.broadcast %204 : vector<16x1xf32> to vector<16x32xf32>
    %206 = arith.subf %202, %205 : vector<16x32xf32>
    %207 = math.exp %206 : vector<16x32xf32>
    %cst_87 = arith.constant dense<0.000000e+00> : vector<16xf32>
    %208 = vector.multi_reduction <add>, %207, %cst_87 [1] : vector<16x32xf32> to vector<16xf32>
    %209 = vector.shape_cast %208 : vector<16xf32> to vector<16x1xf32>
    %210 = vector.broadcast %209 : vector<16x1xf32> to vector<16x32xf32>
    %211 = arith.divf %207, %210 : vector<16x32xf32>
    %cst_88 = arith.constant dense<0.000000e+00> : vector<16x128xf32>
    %212 = tpu.matmul %211, %195, %cst_88 {dimension_numbers = #tpu.dot_dimension_numbers<[1], [0], [0], [1], [0, 0, 1, 1], [], []>} : vector<16x32xf32>, vector<32x128xf32>, vector<16x128xf32> -> vector<16x128xf32>
    %cst_89 = arith.constant 0.000000e+00 : f32
    %213 = vector.shape_cast %5 : vector<1x128xi1> to vector<1x128xi1>
    %214 = vector.broadcast %213 : vector<1x128xi1> to vector<16x128xi1>
    %215 = vector.broadcast %cst_89 : f32 to vector<16x128xf32>
    %216 = arith.select %214, %212, %215 : vector<16x128xi1>, vector<16x128xf32>
    %217 = arith.addf %196, %216 : vector<16x128xf32>
    %cst_90 = arith.constant 0.000000e+00 : f32
    %218 = vector.shape_cast %21 : vector<128x1xi1> to vector<128x1xi1>
    %219 = vector.broadcast %218 : vector<128x1xi1> to vector<128x32xi1>
    %220 = vector.broadcast %cst_90 : f32 to vector<128x32xf32>
    %221 = arith.select %219, %188, %220 : vector<128x32xi1>, vector<128x32xf32>
    %cst_91 = arith.constant dense<0.000000e+00> : vector<16x32xf32>
    %222 = tpu.matmul %185, %221, %cst_91 {dimension_numbers = #tpu.dot_dimension_numbers<[1], [0], [0], [1], [0, 0, 1, 1], [], []>} : vector<16x128xf32>, vector<128x32xf32>, vector<16x32xf32> -> vector<16x32xf32>
    %223 = arith.addf %222, %83 : vector<16x32xf32>
    %cst_92 = arith.constant dense<0xFF800000> : vector<16xf32>
    %224 = vector.multi_reduction <maximumf>, %223, %cst_92 [1] : vector<16x32xf32> to vector<16xf32>
    %225 = vector.shape_cast %224 : vector<16xf32> to vector<16x1xf32>
    %226 = vector.broadcast %225 : vector<16x1xf32> to vector<16x32xf32>
    %227 = arith.subf %223, %226 : vector<16x32xf32>
    %228 = math.exp %227 : vector<16x32xf32>
    %cst_93 = arith.constant dense<0.000000e+00> : vector<16xf32>
    %229 = vector.multi_reduction <add>, %228, %cst_93 [1] : vector<16x32xf32> to vector<16xf32>
    %230 = vector.shape_cast %229 : vector<16xf32> to vector<16x1xf32>
    %231 = vector.broadcast %230 : vector<16x1xf32> to vector<16x32xf32>
    %232 = arith.divf %228, %231 : vector<16x32xf32>
    %cst_94 = arith.constant dense<0.000000e+00> : vector<16x128xf32>
    %233 = tpu.matmul %232, %195, %cst_94 {dimension_numbers = #tpu.dot_dimension_numbers<[1], [0], [0], [1], [0, 0, 1, 1], [], []>} : vector<16x32xf32>, vector<32x128xf32>, vector<16x128xf32> -> vector<16x128xf32>
    %cst_95 = arith.constant 0.000000e+00 : f32
    %234 = vector.shape_cast %10 : vector<1x128xi1> to vector<1x128xi1>
    %235 = vector.broadcast %234 : vector<1x128xi1> to vector<16x128xi1>
    %236 = vector.broadcast %cst_95 : f32 to vector<16x128xf32>
    %237 = arith.select %235, %233, %236 : vector<16x128xi1>, vector<16x128xf32>
    %238 = arith.addf %217, %237 : vector<16x128xf32>
    %c0_96 = arith.constant 0 : index
    %c384_97 = arith.constant 384 : index
    %c128_98 = arith.constant 128 : index
    %239 = vector.load %arg2[%c0_96, %c384_97, %c128_98] : memref<2x896x256xf32, #tpu.memory_space<vmem>>, vector<1x128x128xf32>
    %240 = vector.shape_cast %239 : vector<1x128x128xf32> to vector<128x128xf32>
    %cst_99 = arith.constant dense<0.000000e+00> : vector<16x128xf32>
    %241 = tpu.matmul %238, %240, %cst_99 {dimension_numbers = #tpu.dot_dimension_numbers<[1], [0], [0], [1], [0, 0, 1, 1], [], []>} : vector<16x128xf32>, vector<128x128xf32>, vector<16x128xf32> -> vector<16x128xf32>
    %c0_100 = arith.constant 0 : index
    %c2_101 = arith.constant 2 : index
    %c128_102 = arith.constant 128 : index
    %242 = vector.load %arg3[%c0_100, %c2_101, %c128_102] : memref<2x8x256xf32, #tpu.memory_space<vmem>>, vector<1x1x128xf32>
    %243 = vector.shape_cast %242 : vector<1x1x128xf32> to vector<1x128xf32>
    %244 = vector.broadcast %243 : vector<1x128xf32> to vector<16x128xf32>
    %245 = arith.addf %241, %244 : vector<16x128xf32>
    %246 = arith.addf %178, %245 : vector<16x128xf32>
    %c0_103 = arith.constant 0 : index
    %c6 = arith.constant 6 : index
    %c0_104 = arith.constant 0 : index
    %247 = vector.load %arg3[%c0_103, %c6, %c0_104] : memref<2x8x256xf32, #tpu.memory_space<vmem>>, vector<1x1x128xf32>
    %248 = vector.shape_cast %247 : vector<1x1x128xf32> to vector<1x128xf32>
    %c0_105 = arith.constant 0 : index
    %c6_106 = arith.constant 6 : index
    %c128_107 = arith.constant 128 : index
    %249 = vector.load %arg3[%c0_105, %c6_106, %c128_107] : memref<2x8x256xf32, #tpu.memory_space<vmem>>, vector<1x1x128xf32>
    %250 = vector.shape_cast %249 : vector<1x1x128xf32> to vector<1x128xf32>
    %cst_108 = arith.constant dense<0.000000e+00> : vector<16xf32>
    %251 = vector.multi_reduction <add>, %246, %cst_108 [1] : vector<16x128xf32> to vector<16xf32>
    %252 = vector.shape_cast %251 : vector<16xf32> to vector<16x1xf32>
    %cst_109 = arith.constant 1.280000e+02 : f32
    %253 = vector.broadcast %cst_109 : f32 to vector<16x1xf32>
    %254 = arith.divf %252, %253 : vector<16x1xf32>
    %255 = vector.broadcast %254 : vector<16x1xf32> to vector<16x128xf32>
    %256 = arith.subf %246, %255 : vector<16x128xf32>
    %257 = arith.mulf %256, %256 : vector<16x128xf32>
    %cst_110 = arith.constant dense<0.000000e+00> : vector<16xf32>
    %258 = vector.multi_reduction <add>, %257, %cst_110 [1] : vector<16x128xf32> to vector<16xf32>
    %259 = vector.shape_cast %258 : vector<16xf32> to vector<16x1xf32>
    %cst_111 = arith.constant 1.280000e+02 : f32
    %260 = vector.broadcast %cst_111 : f32 to vector<16x1xf32>
    %261 = arith.divf %259, %260 : vector<16x1xf32>
    %cst_112 = arith.constant 9.99999974E-6 : f32
    %262 = vector.broadcast %cst_112 : f32 to vector<16x1xf32>
    %263 = arith.addf %261, %262 : vector<16x1xf32>
    %264 = math.rsqrt %263 : vector<16x1xf32>
    %265 = vector.broadcast %264 : vector<16x1xf32> to vector<16x128xf32>
    %266 = arith.mulf %256, %265 : vector<16x128xf32>
    %267 = vector.broadcast %248 : vector<1x128xf32> to vector<16x128xf32>
    %268 = arith.mulf %266, %267 : vector<16x128xf32>
    %269 = vector.broadcast %250 : vector<1x128xf32> to vector<16x128xf32>
    %270 = arith.addf %268, %269 : vector<16x128xf32>
    %c0_113 = arith.constant 0 : index
    %c512 = arith.constant 512 : index
    %c0_114 = arith.constant 0 : index
    %271 = vector.load %arg2[%c0_113, %c512, %c0_114] : memref<2x896x256xf32, #tpu.memory_space<vmem>>, vector<1x128x256xf32>
    %272 = vector.shape_cast %271 : vector<1x128x256xf32> to vector<128x256xf32>
    %cst_115 = arith.constant dense<0.000000e+00> : vector<16x256xf32>
    %273 = tpu.matmul %270, %272, %cst_115 {dimension_numbers = #tpu.dot_dimension_numbers<[1], [0], [0], [1], [0, 0, 1, 1], [], []>} : vector<16x128xf32>, vector<128x256xf32>, vector<16x256xf32> -> vector<16x256xf32>
    %c0_116 = arith.constant 0 : index
    %c3 = arith.constant 3 : index
    %c0_117 = arith.constant 0 : index
    %274 = vector.load %arg3[%c0_116, %c3, %c0_117] : memref<2x8x256xf32, #tpu.memory_space<vmem>>, vector<1x1x256xf32>
    %275 = vector.shape_cast %274 : vector<1x1x256xf32> to vector<1x256xf32>
    %276 = vector.broadcast %275 : vector<1x256xf32> to vector<16x256xf32>
    %277 = arith.addf %273, %276 : vector<16x256xf32>
    %cst_118 = arith.constant 0.000000e+00 : f32
    %278 = vector.broadcast %cst_118 : f32 to vector<16x256xf32>
    %279 = arith.maximumf %277, %278 : vector<16x256xf32>
    %c0_119 = arith.constant 0 : index
    %c640 = arith.constant 640 : index
    %c0_120 = arith.constant 0 : index
    %280 = vector.load %arg2[%c0_119, %c640, %c0_120] : memref<2x896x256xf32, #tpu.memory_space<vmem>>, vector<1x256x128xf32>
    %281 = vector.shape_cast %280 : vector<1x256x128xf32> to vector<256x128xf32>
    %cst_121 = arith.constant dense<0.000000e+00> : vector<16x128xf32>
    %282 = tpu.matmul %279, %281, %cst_121 {dimension_numbers = #tpu.dot_dimension_numbers<[1], [0], [0], [1], [0, 0, 1, 1], [], []>} : vector<16x256xf32>, vector<256x128xf32>, vector<16x128xf32> -> vector<16x128xf32>
    %c0_122 = arith.constant 0 : index
    %c4 = arith.constant 4 : index
    %c0_123 = arith.constant 0 : index
    %283 = vector.load %arg3[%c0_122, %c4, %c0_123] : memref<2x8x256xf32, #tpu.memory_space<vmem>>, vector<1x1x128xf32>
    %284 = vector.shape_cast %283 : vector<1x1x128xf32> to vector<1x128xf32>
    %285 = vector.broadcast %284 : vector<1x128xf32> to vector<16x128xf32>
    %286 = arith.addf %282, %285 : vector<16x128xf32>
    %287 = arith.addf %270, %286 : vector<16x128xf32>
    %c0_124 = arith.constant 0 : index
    %c7 = arith.constant 7 : index
    %c0_125 = arith.constant 0 : index
    %288 = vector.load %arg3[%c0_124, %c7, %c0_125] : memref<2x8x256xf32, #tpu.memory_space<vmem>>, vector<1x1x128xf32>
    %289 = vector.shape_cast %288 : vector<1x1x128xf32> to vector<1x128xf32>
    %c0_126 = arith.constant 0 : index
    %c7_127 = arith.constant 7 : index
    %c128_128 = arith.constant 128 : index
    %290 = vector.load %arg3[%c0_126, %c7_127, %c128_128] : memref<2x8x256xf32, #tpu.memory_space<vmem>>, vector<1x1x128xf32>
    %291 = vector.shape_cast %290 : vector<1x1x128xf32> to vector<1x128xf32>
    %cst_129 = arith.constant dense<0.000000e+00> : vector<16xf32>
    %292 = vector.multi_reduction <add>, %287, %cst_129 [1] : vector<16x128xf32> to vector<16xf32>
    %293 = vector.shape_cast %292 : vector<16xf32> to vector<16x1xf32>
    %cst_130 = arith.constant 1.280000e+02 : f32
    %294 = vector.broadcast %cst_130 : f32 to vector<16x1xf32>
    %295 = arith.divf %293, %294 : vector<16x1xf32>
    %296 = vector.broadcast %295 : vector<16x1xf32> to vector<16x128xf32>
    %297 = arith.subf %287, %296 : vector<16x128xf32>
    %298 = arith.mulf %297, %297 : vector<16x128xf32>
    %cst_131 = arith.constant dense<0.000000e+00> : vector<16xf32>
    %299 = vector.multi_reduction <add>, %298, %cst_131 [1] : vector<16x128xf32> to vector<16xf32>
    %300 = vector.shape_cast %299 : vector<16xf32> to vector<16x1xf32>
    %cst_132 = arith.constant 1.280000e+02 : f32
    %301 = vector.broadcast %cst_132 : f32 to vector<16x1xf32>
    %302 = arith.divf %300, %301 : vector<16x1xf32>
    %cst_133 = arith.constant 9.99999974E-6 : f32
    %303 = vector.broadcast %cst_133 : f32 to vector<16x1xf32>
    %304 = arith.addf %302, %303 : vector<16x1xf32>
    %305 = math.rsqrt %304 : vector<16x1xf32>
    %306 = vector.broadcast %305 : vector<16x1xf32> to vector<16x128xf32>
    %307 = arith.mulf %297, %306 : vector<16x128xf32>
    %308 = vector.broadcast %289 : vector<1x128xf32> to vector<16x128xf32>
    %309 = arith.mulf %307, %308 : vector<16x128xf32>
    %310 = vector.broadcast %291 : vector<1x128xf32> to vector<16x128xf32>
    %311 = arith.addf %309, %310 : vector<16x128xf32>
    %c1_134 = arith.constant 1 : index
    %c0_135 = arith.constant 0 : index
    %c0_136 = arith.constant 0 : index
    %312 = vector.load %arg2[%c1_134, %c0_135, %c0_136] : memref<2x896x256xf32, #tpu.memory_space<vmem>>, vector<1x128x256xf32>
    %313 = vector.shape_cast %312 : vector<1x128x256xf32> to vector<128x256xf32>
    %cst_137 = arith.constant dense<0.000000e+00> : vector<16x256xf32>
    %314 = tpu.matmul %311, %313, %cst_137 {dimension_numbers = #tpu.dot_dimension_numbers<[1], [0], [0], [1], [0, 0, 1, 1], [], []>} : vector<16x128xf32>, vector<128x256xf32>, vector<16x256xf32> -> vector<16x256xf32>
    %c1_138 = arith.constant 1 : index
    %c0_139 = arith.constant 0 : index
    %c0_140 = arith.constant 0 : index
    %315 = vector.load %arg3[%c1_138, %c0_139, %c0_140] : memref<2x8x256xf32, #tpu.memory_space<vmem>>, vector<1x1x256xf32>
    %316 = vector.shape_cast %315 : vector<1x1x256xf32> to vector<1x256xf32>
    %317 = vector.broadcast %316 : vector<1x256xf32> to vector<16x256xf32>
    %318 = arith.addf %314, %317 : vector<16x256xf32>
    %319 = vector.extract_strided_slice %318 {offsets = [0, 0], sizes = [16, 128], strides = [1, 1]} : vector<16x256xf32> to vector<16x128xf32>
    %320 = vector.extract_strided_slice %318 {offsets = [0, 128], sizes = [16, 128], strides = [1, 1]} : vector<16x256xf32> to vector<16x128xf32>
    %c1_141 = arith.constant 1 : index
    %c128_142 = arith.constant 128 : index
    %c0_143 = arith.constant 0 : index
    %321 = vector.load %arg2[%c1_141, %c128_142, %c0_143] : memref<2x896x256xf32, #tpu.memory_space<vmem>>, vector<1x128x128xf32>
    %322 = vector.shape_cast %321 : vector<1x128x128xf32> to vector<128x128xf32>
    %cst_144 = arith.constant dense<0.000000e+00> : vector<128x16xf32>
    %323 = tpu.matmul %322, %311, %cst_144 {dimension_numbers = #tpu.dot_dimension_numbers<[1], [1], [0], [0], [0, 0, 1, 0], [], []>} : vector<128x128xf32>, vector<16x128xf32>, vector<128x16xf32> -> vector<128x16xf32>
    %cst_145 = arith.constant 0.000000e+00 : f32
    %324 = vector.broadcast %cst_145 : f32 to vector<16x128xf32>
    %cst_146 = arith.constant 0.000000e+00 : f32
    %325 = vector.shape_cast %16 : vector<128x1xi1> to vector<128x1xi1>
    %326 = vector.broadcast %325 : vector<128x1xi1> to vector<128x16xi1>
    %327 = vector.broadcast %cst_146 : f32 to vector<128x16xf32>
    %328 = arith.select %326, %323, %327 : vector<128x16xi1>, vector<128x16xf32>
    %cst_147 = arith.constant dense<0.000000e+00> : vector<16x16xf32>
    %329 = tpu.matmul %319, %328, %cst_147 {dimension_numbers = #tpu.dot_dimension_numbers<[1], [0], [0], [1], [0, 0, 1, 1], [], []>} : vector<16x128xf32>, vector<128x16xf32>, vector<16x16xf32> -> vector<16x16xf32>
    %330 = arith.addf %329, %52 : vector<16x16xf32>
    %cst_148 = arith.constant dense<0xFF800000> : vector<16xf32>
    %331 = vector.multi_reduction <maximumf>, %330, %cst_148 [1] : vector<16x16xf32> to vector<16xf32>
    %332 = vector.shape_cast %331 : vector<16xf32> to vector<16x1xf32>
    %333 = vector.broadcast %332 : vector<16x1xf32> to vector<16x16xf32>
    %334 = arith.subf %330, %333 : vector<16x16xf32>
    %335 = math.exp %334 : vector<16x16xf32>
    %cst_149 = arith.constant dense<0.000000e+00> : vector<16xf32>
    %336 = vector.multi_reduction <add>, %335, %cst_149 [1] : vector<16x16xf32> to vector<16xf32>
    %337 = vector.shape_cast %336 : vector<16xf32> to vector<16x1xf32>
    %338 = vector.broadcast %337 : vector<16x1xf32> to vector<16x16xf32>
    %339 = arith.divf %335, %338 : vector<16x16xf32>
    %cst_150 = arith.constant dense<0.000000e+00> : vector<16x128xf32>
    %340 = tpu.matmul %339, %320, %cst_150 {dimension_numbers = #tpu.dot_dimension_numbers<[1], [0], [0], [1], [0, 0, 1, 1], [], []>} : vector<16x16xf32>, vector<16x128xf32>, vector<16x128xf32> -> vector<16x128xf32>
    %cst_151 = arith.constant 0.000000e+00 : f32
    %341 = vector.shape_cast %5 : vector<1x128xi1> to vector<1x128xi1>
    %342 = vector.broadcast %341 : vector<1x128xi1> to vector<16x128xi1>
    %343 = vector.broadcast %cst_151 : f32 to vector<16x128xf32>
    %344 = arith.select %342, %340, %343 : vector<16x128xi1>, vector<16x128xf32>
    %345 = arith.addf %324, %344 : vector<16x128xf32>
    %cst_152 = arith.constant 0.000000e+00 : f32
    %346 = vector.shape_cast %21 : vector<128x1xi1> to vector<128x1xi1>
    %347 = vector.broadcast %346 : vector<128x1xi1> to vector<128x16xi1>
    %348 = vector.broadcast %cst_152 : f32 to vector<128x16xf32>
    %349 = arith.select %347, %323, %348 : vector<128x16xi1>, vector<128x16xf32>
    %cst_153 = arith.constant dense<0.000000e+00> : vector<16x16xf32>
    %350 = tpu.matmul %319, %349, %cst_153 {dimension_numbers = #tpu.dot_dimension_numbers<[1], [0], [0], [1], [0, 0, 1, 1], [], []>} : vector<16x128xf32>, vector<128x16xf32>, vector<16x16xf32> -> vector<16x16xf32>
    %351 = arith.addf %350, %52 : vector<16x16xf32>
    %cst_154 = arith.constant dense<0xFF800000> : vector<16xf32>
    %352 = vector.multi_reduction <maximumf>, %351, %cst_154 [1] : vector<16x16xf32> to vector<16xf32>
    %353 = vector.shape_cast %352 : vector<16xf32> to vector<16x1xf32>
    %354 = vector.broadcast %353 : vector<16x1xf32> to vector<16x16xf32>
    %355 = arith.subf %351, %354 : vector<16x16xf32>
    %356 = math.exp %355 : vector<16x16xf32>
    %cst_155 = arith.constant dense<0.000000e+00> : vector<16xf32>
    %357 = vector.multi_reduction <add>, %356, %cst_155 [1] : vector<16x16xf32> to vector<16xf32>
    %358 = vector.shape_cast %357 : vector<16xf32> to vector<16x1xf32>
    %359 = vector.broadcast %358 : vector<16x1xf32> to vector<16x16xf32>
    %360 = arith.divf %356, %359 : vector<16x16xf32>
    %cst_156 = arith.constant dense<0.000000e+00> : vector<16x128xf32>
    %361 = tpu.matmul %360, %320, %cst_156 {dimension_numbers = #tpu.dot_dimension_numbers<[1], [0], [0], [1], [0, 0, 1, 1], [], []>} : vector<16x16xf32>, vector<16x128xf32>, vector<16x128xf32> -> vector<16x128xf32>
    %cst_157 = arith.constant 0.000000e+00 : f32
    %362 = vector.shape_cast %10 : vector<1x128xi1> to vector<1x128xi1>
    %363 = vector.broadcast %362 : vector<1x128xi1> to vector<16x128xi1>
    %364 = vector.broadcast %cst_157 : f32 to vector<16x128xf32>
    %365 = arith.select %363, %361, %364 : vector<16x128xi1>, vector<16x128xf32>
    %366 = arith.addf %345, %365 : vector<16x128xf32>
    %c1_158 = arith.constant 1 : index
    %c128_159 = arith.constant 128 : index
    %c128_160 = arith.constant 128 : index
    %367 = vector.load %arg2[%c1_158, %c128_159, %c128_160] : memref<2x896x256xf32, #tpu.memory_space<vmem>>, vector<1x128x128xf32>
    %368 = vector.shape_cast %367 : vector<1x128x128xf32> to vector<128x128xf32>
    %cst_161 = arith.constant dense<0.000000e+00> : vector<16x128xf32>
    %369 = tpu.matmul %366, %368, %cst_161 {dimension_numbers = #tpu.dot_dimension_numbers<[1], [0], [0], [1], [0, 0, 1, 1], [], []>} : vector<16x128xf32>, vector<128x128xf32>, vector<16x128xf32> -> vector<16x128xf32>
    %c1_162 = arith.constant 1 : index
    %c1_163 = arith.constant 1 : index
    %c0_164 = arith.constant 0 : index
    %370 = vector.load %arg3[%c1_162, %c1_163, %c0_164] : memref<2x8x256xf32, #tpu.memory_space<vmem>>, vector<1x1x128xf32>
    %371 = vector.shape_cast %370 : vector<1x1x128xf32> to vector<1x128xf32>
    %372 = vector.broadcast %371 : vector<1x128xf32> to vector<16x128xf32>
    %373 = arith.addf %369, %372 : vector<16x128xf32>
    %374 = arith.addf %311, %373 : vector<16x128xf32>
    %c1_165 = arith.constant 1 : index
    %c5_166 = arith.constant 5 : index
    %c0_167 = arith.constant 0 : index
    %375 = vector.load %arg3[%c1_165, %c5_166, %c0_167] : memref<2x8x256xf32, #tpu.memory_space<vmem>>, vector<1x1x128xf32>
    %376 = vector.shape_cast %375 : vector<1x1x128xf32> to vector<1x128xf32>
    %c1_168 = arith.constant 1 : index
    %c5_169 = arith.constant 5 : index
    %c128_170 = arith.constant 128 : index
    %377 = vector.load %arg3[%c1_168, %c5_169, %c128_170] : memref<2x8x256xf32, #tpu.memory_space<vmem>>, vector<1x1x128xf32>
    %378 = vector.shape_cast %377 : vector<1x1x128xf32> to vector<1x128xf32>
    %cst_171 = arith.constant dense<0.000000e+00> : vector<16xf32>
    %379 = vector.multi_reduction <add>, %374, %cst_171 [1] : vector<16x128xf32> to vector<16xf32>
    %380 = vector.shape_cast %379 : vector<16xf32> to vector<16x1xf32>
    %cst_172 = arith.constant 1.280000e+02 : f32
    %381 = vector.broadcast %cst_172 : f32 to vector<16x1xf32>
    %382 = arith.divf %380, %381 : vector<16x1xf32>
    %383 = vector.broadcast %382 : vector<16x1xf32> to vector<16x128xf32>
    %384 = arith.subf %374, %383 : vector<16x128xf32>
    %385 = arith.mulf %384, %384 : vector<16x128xf32>
    %cst_173 = arith.constant dense<0.000000e+00> : vector<16xf32>
    %386 = vector.multi_reduction <add>, %385, %cst_173 [1] : vector<16x128xf32> to vector<16xf32>
    %387 = vector.shape_cast %386 : vector<16xf32> to vector<16x1xf32>
    %cst_174 = arith.constant 1.280000e+02 : f32
    %388 = vector.broadcast %cst_174 : f32 to vector<16x1xf32>
    %389 = arith.divf %387, %388 : vector<16x1xf32>
    %cst_175 = arith.constant 9.99999974E-6 : f32
    %390 = vector.broadcast %cst_175 : f32 to vector<16x1xf32>
    %391 = arith.addf %389, %390 : vector<16x1xf32>
    %392 = math.rsqrt %391 : vector<16x1xf32>
    %393 = vector.broadcast %392 : vector<16x1xf32> to vector<16x128xf32>
    %394 = arith.mulf %384, %393 : vector<16x128xf32>
    %395 = vector.broadcast %376 : vector<1x128xf32> to vector<16x128xf32>
    %396 = arith.mulf %394, %395 : vector<16x128xf32>
    %397 = vector.broadcast %378 : vector<1x128xf32> to vector<16x128xf32>
    %398 = arith.addf %396, %397 : vector<16x128xf32>
    %c1_176 = arith.constant 1 : index
    %c256_177 = arith.constant 256 : index
    %c0_178 = arith.constant 0 : index
    %399 = vector.load %arg2[%c1_176, %c256_177, %c0_178] : memref<2x896x256xf32, #tpu.memory_space<vmem>>, vector<1x128x128xf32>
    %400 = vector.shape_cast %399 : vector<1x128x128xf32> to vector<128x128xf32>
    %cst_179 = arith.constant dense<0.000000e+00> : vector<16x128xf32>
    %401 = tpu.matmul %398, %400, %cst_179 {dimension_numbers = #tpu.dot_dimension_numbers<[1], [0], [0], [1], [0, 0, 1, 1], [], []>} : vector<16x128xf32>, vector<128x128xf32>, vector<16x128xf32> -> vector<16x128xf32>
    %c1_180 = arith.constant 1 : index
    %c1_181 = arith.constant 1 : index
    %c128_182 = arith.constant 128 : index
    %402 = vector.load %arg3[%c1_180, %c1_181, %c128_182] : memref<2x8x256xf32, #tpu.memory_space<vmem>>, vector<1x1x128xf32>
    %403 = vector.shape_cast %402 : vector<1x1x128xf32> to vector<1x128xf32>
    %404 = vector.broadcast %403 : vector<1x128xf32> to vector<16x128xf32>
    %405 = arith.addf %401, %404 : vector<16x128xf32>
    %c1_183 = arith.constant 1 : index
    %c256_184 = arith.constant 256 : index
    %c128_185 = arith.constant 128 : index
    %406 = vector.load %arg2[%c1_183, %c256_184, %c128_185] : memref<2x896x256xf32, #tpu.memory_space<vmem>>, vector<1x128x128xf32>
    %407 = vector.shape_cast %406 : vector<1x128x128xf32> to vector<128x128xf32>
    %cst_186 = arith.constant dense<0.000000e+00> : vector<128x32xf32>
    %408 = tpu.matmul %407, %90, %cst_186 {dimension_numbers = #tpu.dot_dimension_numbers<[1], [1], [0], [0], [0, 0, 1, 0], [], []>} : vector<128x128xf32>, vector<32x128xf32>, vector<128x32xf32> -> vector<128x32xf32>
    %c1_187 = arith.constant 1 : index
    %c384_188 = arith.constant 384 : index
    %c0_189 = arith.constant 0 : index
    %409 = vector.load %arg2[%c1_187, %c384_188, %c0_189] : memref<2x896x256xf32, #tpu.memory_space<vmem>>, vector<1x128x128xf32>
    %410 = vector.shape_cast %409 : vector<1x128x128xf32> to vector<128x128xf32>
    %cst_190 = arith.constant dense<0.000000e+00> : vector<32x128xf32>
    %411 = tpu.matmul %90, %410, %cst_190 {dimension_numbers = #tpu.dot_dimension_numbers<[1], [0], [0], [1], [0, 0, 1, 1], [], []>} : vector<32x128xf32>, vector<128x128xf32>, vector<32x128xf32> -> vector<32x128xf32>
    %c1_191 = arith.constant 1 : index
    %c2_192 = arith.constant 2 : index
    %c0_193 = arith.constant 0 : index
    %412 = vector.load %arg3[%c1_191, %c2_192, %c0_193] : memref<2x8x256xf32, #tpu.memory_space<vmem>>, vector<1x1x128xf32>
    %413 = vector.shape_cast %412 : vector<1x1x128xf32> to vector<1x128xf32>
    %414 = vector.broadcast %413 : vector<1x128xf32> to vector<32x128xf32>
    %415 = arith.addf %411, %414 : vector<32x128xf32>
    %cst_194 = arith.constant 0.000000e+00 : f32
    %416 = vector.broadcast %cst_194 : f32 to vector<16x128xf32>
    %cst_195 = arith.constant 0.000000e+00 : f32
    %417 = vector.shape_cast %16 : vector<128x1xi1> to vector<128x1xi1>
    %418 = vector.broadcast %417 : vector<128x1xi1> to vector<128x32xi1>
    %419 = vector.broadcast %cst_195 : f32 to vector<128x32xf32>
    %420 = arith.select %418, %408, %419 : vector<128x32xi1>, vector<128x32xf32>
    %cst_196 = arith.constant dense<0.000000e+00> : vector<16x32xf32>
    %421 = tpu.matmul %405, %420, %cst_196 {dimension_numbers = #tpu.dot_dimension_numbers<[1], [0], [0], [1], [0, 0, 1, 1], [], []>} : vector<16x128xf32>, vector<128x32xf32>, vector<16x32xf32> -> vector<16x32xf32>
    %422 = arith.addf %421, %83 : vector<16x32xf32>
    %cst_197 = arith.constant dense<0xFF800000> : vector<16xf32>
    %423 = vector.multi_reduction <maximumf>, %422, %cst_197 [1] : vector<16x32xf32> to vector<16xf32>
    %424 = vector.shape_cast %423 : vector<16xf32> to vector<16x1xf32>
    %425 = vector.broadcast %424 : vector<16x1xf32> to vector<16x32xf32>
    %426 = arith.subf %422, %425 : vector<16x32xf32>
    %427 = math.exp %426 : vector<16x32xf32>
    %cst_198 = arith.constant dense<0.000000e+00> : vector<16xf32>
    %428 = vector.multi_reduction <add>, %427, %cst_198 [1] : vector<16x32xf32> to vector<16xf32>
    %429 = vector.shape_cast %428 : vector<16xf32> to vector<16x1xf32>
    %430 = vector.broadcast %429 : vector<16x1xf32> to vector<16x32xf32>
    %431 = arith.divf %427, %430 : vector<16x32xf32>
    %cst_199 = arith.constant dense<0.000000e+00> : vector<16x128xf32>
    %432 = tpu.matmul %431, %415, %cst_199 {dimension_numbers = #tpu.dot_dimension_numbers<[1], [0], [0], [1], [0, 0, 1, 1], [], []>} : vector<16x32xf32>, vector<32x128xf32>, vector<16x128xf32> -> vector<16x128xf32>
    %cst_200 = arith.constant 0.000000e+00 : f32
    %433 = vector.shape_cast %5 : vector<1x128xi1> to vector<1x128xi1>
    %434 = vector.broadcast %433 : vector<1x128xi1> to vector<16x128xi1>
    %435 = vector.broadcast %cst_200 : f32 to vector<16x128xf32>
    %436 = arith.select %434, %432, %435 : vector<16x128xi1>, vector<16x128xf32>
    %437 = arith.addf %416, %436 : vector<16x128xf32>
    %cst_201 = arith.constant 0.000000e+00 : f32
    %438 = vector.shape_cast %21 : vector<128x1xi1> to vector<128x1xi1>
    %439 = vector.broadcast %438 : vector<128x1xi1> to vector<128x32xi1>
    %440 = vector.broadcast %cst_201 : f32 to vector<128x32xf32>
    %441 = arith.select %439, %408, %440 : vector<128x32xi1>, vector<128x32xf32>
    %cst_202 = arith.constant dense<0.000000e+00> : vector<16x32xf32>
    %442 = tpu.matmul %405, %441, %cst_202 {dimension_numbers = #tpu.dot_dimension_numbers<[1], [0], [0], [1], [0, 0, 1, 1], [], []>} : vector<16x128xf32>, vector<128x32xf32>, vector<16x32xf32> -> vector<16x32xf32>
    %443 = arith.addf %442, %83 : vector<16x32xf32>
    %cst_203 = arith.constant dense<0xFF800000> : vector<16xf32>
    %444 = vector.multi_reduction <maximumf>, %443, %cst_203 [1] : vector<16x32xf32> to vector<16xf32>
    %445 = vector.shape_cast %444 : vector<16xf32> to vector<16x1xf32>
    %446 = vector.broadcast %445 : vector<16x1xf32> to vector<16x32xf32>
    %447 = arith.subf %443, %446 : vector<16x32xf32>
    %448 = math.exp %447 : vector<16x32xf32>
    %cst_204 = arith.constant dense<0.000000e+00> : vector<16xf32>
    %449 = vector.multi_reduction <add>, %448, %cst_204 [1] : vector<16x32xf32> to vector<16xf32>
    %450 = vector.shape_cast %449 : vector<16xf32> to vector<16x1xf32>
    %451 = vector.broadcast %450 : vector<16x1xf32> to vector<16x32xf32>
    %452 = arith.divf %448, %451 : vector<16x32xf32>
    %cst_205 = arith.constant dense<0.000000e+00> : vector<16x128xf32>
    %453 = tpu.matmul %452, %415, %cst_205 {dimension_numbers = #tpu.dot_dimension_numbers<[1], [0], [0], [1], [0, 0, 1, 1], [], []>} : vector<16x32xf32>, vector<32x128xf32>, vector<16x128xf32> -> vector<16x128xf32>
    %cst_206 = arith.constant 0.000000e+00 : f32
    %454 = vector.shape_cast %10 : vector<1x128xi1> to vector<1x128xi1>
    %455 = vector.broadcast %454 : vector<1x128xi1> to vector<16x128xi1>
    %456 = vector.broadcast %cst_206 : f32 to vector<16x128xf32>
    %457 = arith.select %455, %453, %456 : vector<16x128xi1>, vector<16x128xf32>
    %458 = arith.addf %437, %457 : vector<16x128xf32>
    %c1_207 = arith.constant 1 : index
    %c384_208 = arith.constant 384 : index
    %c128_209 = arith.constant 128 : index
    %459 = vector.load %arg2[%c1_207, %c384_208, %c128_209] : memref<2x896x256xf32, #tpu.memory_space<vmem>>, vector<1x128x128xf32>
    %460 = vector.shape_cast %459 : vector<1x128x128xf32> to vector<128x128xf32>
    %cst_210 = arith.constant dense<0.000000e+00> : vector<16x128xf32>
    %461 = tpu.matmul %458, %460, %cst_210 {dimension_numbers = #tpu.dot_dimension_numbers<[1], [0], [0], [1], [0, 0, 1, 1], [], []>} : vector<16x128xf32>, vector<128x128xf32>, vector<16x128xf32> -> vector<16x128xf32>
    %c1_211 = arith.constant 1 : index
    %c2_212 = arith.constant 2 : index
    %c128_213 = arith.constant 128 : index
    %462 = vector.load %arg3[%c1_211, %c2_212, %c128_213] : memref<2x8x256xf32, #tpu.memory_space<vmem>>, vector<1x1x128xf32>
    %463 = vector.shape_cast %462 : vector<1x1x128xf32> to vector<1x128xf32>
    %464 = vector.broadcast %463 : vector<1x128xf32> to vector<16x128xf32>
    %465 = arith.addf %461, %464 : vector<16x128xf32>
    %466 = arith.addf %398, %465 : vector<16x128xf32>
    %c1_214 = arith.constant 1 : index
    %c6_215 = arith.constant 6 : index
    %c0_216 = arith.constant 0 : index
    %467 = vector.load %arg3[%c1_214, %c6_215, %c0_216] : memref<2x8x256xf32, #tpu.memory_space<vmem>>, vector<1x1x128xf32>
    %468 = vector.shape_cast %467 : vector<1x1x128xf32> to vector<1x128xf32>
    %c1_217 = arith.constant 1 : index
    %c6_218 = arith.constant 6 : index
    %c128_219 = arith.constant 128 : index
    %469 = vector.load %arg3[%c1_217, %c6_218, %c128_219] : memref<2x8x256xf32, #tpu.memory_space<vmem>>, vector<1x1x128xf32>
    %470 = vector.shape_cast %469 : vector<1x1x128xf32> to vector<1x128xf32>
    %cst_220 = arith.constant dense<0.000000e+00> : vector<16xf32>
    %471 = vector.multi_reduction <add>, %466, %cst_220 [1] : vector<16x128xf32> to vector<16xf32>
    %472 = vector.shape_cast %471 : vector<16xf32> to vector<16x1xf32>
    %cst_221 = arith.constant 1.280000e+02 : f32
    %473 = vector.broadcast %cst_221 : f32 to vector<16x1xf32>
    %474 = arith.divf %472, %473 : vector<16x1xf32>
    %475 = vector.broadcast %474 : vector<16x1xf32> to vector<16x128xf32>
    %476 = arith.subf %466, %475 : vector<16x128xf32>
    %477 = arith.mulf %476, %476 : vector<16x128xf32>
    %cst_222 = arith.constant dense<0.000000e+00> : vector<16xf32>
    %478 = vector.multi_reduction <add>, %477, %cst_222 [1] : vector<16x128xf32> to vector<16xf32>
    %479 = vector.shape_cast %478 : vector<16xf32> to vector<16x1xf32>
    %cst_223 = arith.constant 1.280000e+02 : f32
    %480 = vector.broadcast %cst_223 : f32 to vector<16x1xf32>
    %481 = arith.divf %479, %480 : vector<16x1xf32>
    %cst_224 = arith.constant 9.99999974E-6 : f32
    %482 = vector.broadcast %cst_224 : f32 to vector<16x1xf32>
    %483 = arith.addf %481, %482 : vector<16x1xf32>
    %484 = math.rsqrt %483 : vector<16x1xf32>
    %485 = vector.broadcast %484 : vector<16x1xf32> to vector<16x128xf32>
    %486 = arith.mulf %476, %485 : vector<16x128xf32>
    %487 = vector.broadcast %468 : vector<1x128xf32> to vector<16x128xf32>
    %488 = arith.mulf %486, %487 : vector<16x128xf32>
    %489 = vector.broadcast %470 : vector<1x128xf32> to vector<16x128xf32>
    %490 = arith.addf %488, %489 : vector<16x128xf32>
    %c1_225 = arith.constant 1 : index
    %c512_226 = arith.constant 512 : index
    %c0_227 = arith.constant 0 : index
    %491 = vector.load %arg2[%c1_225, %c512_226, %c0_227] : memref<2x896x256xf32, #tpu.memory_space<vmem>>, vector<1x128x256xf32>
    %492 = vector.shape_cast %491 : vector<1x128x256xf32> to vector<128x256xf32>
    %cst_228 = arith.constant dense<0.000000e+00> : vector<16x256xf32>
    %493 = tpu.matmul %490, %492, %cst_228 {dimension_numbers = #tpu.dot_dimension_numbers<[1], [0], [0], [1], [0, 0, 1, 1], [], []>} : vector<16x128xf32>, vector<128x256xf32>, vector<16x256xf32> -> vector<16x256xf32>
    %c1_229 = arith.constant 1 : index
    %c3_230 = arith.constant 3 : index
    %c0_231 = arith.constant 0 : index
    %494 = vector.load %arg3[%c1_229, %c3_230, %c0_231] : memref<2x8x256xf32, #tpu.memory_space<vmem>>, vector<1x1x256xf32>
    %495 = vector.shape_cast %494 : vector<1x1x256xf32> to vector<1x256xf32>
    %496 = vector.broadcast %495 : vector<1x256xf32> to vector<16x256xf32>
    %497 = arith.addf %493, %496 : vector<16x256xf32>
    %cst_232 = arith.constant 0.000000e+00 : f32
    %498 = vector.broadcast %cst_232 : f32 to vector<16x256xf32>
    %499 = arith.maximumf %497, %498 : vector<16x256xf32>
    %c1_233 = arith.constant 1 : index
    %c640_234 = arith.constant 640 : index
    %c0_235 = arith.constant 0 : index
    %500 = vector.load %arg2[%c1_233, %c640_234, %c0_235] : memref<2x896x256xf32, #tpu.memory_space<vmem>>, vector<1x256x128xf32>
    %501 = vector.shape_cast %500 : vector<1x256x128xf32> to vector<256x128xf32>
    %cst_236 = arith.constant dense<0.000000e+00> : vector<16x128xf32>
    %502 = tpu.matmul %499, %501, %cst_236 {dimension_numbers = #tpu.dot_dimension_numbers<[1], [0], [0], [1], [0, 0, 1, 1], [], []>} : vector<16x256xf32>, vector<256x128xf32>, vector<16x128xf32> -> vector<16x128xf32>
    %c1_237 = arith.constant 1 : index
    %c4_238 = arith.constant 4 : index
    %c0_239 = arith.constant 0 : index
    %503 = vector.load %arg3[%c1_237, %c4_238, %c0_239] : memref<2x8x256xf32, #tpu.memory_space<vmem>>, vector<1x1x128xf32>
    %504 = vector.shape_cast %503 : vector<1x1x128xf32> to vector<1x128xf32>
    %505 = vector.broadcast %504 : vector<1x128xf32> to vector<16x128xf32>
    %506 = arith.addf %502, %505 : vector<16x128xf32>
    %507 = arith.addf %490, %506 : vector<16x128xf32>
    %c1_240 = arith.constant 1 : index
    %c7_241 = arith.constant 7 : index
    %c0_242 = arith.constant 0 : index
    %508 = vector.load %arg3[%c1_240, %c7_241, %c0_242] : memref<2x8x256xf32, #tpu.memory_space<vmem>>, vector<1x1x128xf32>
    %509 = vector.shape_cast %508 : vector<1x1x128xf32> to vector<1x128xf32>
    %c1_243 = arith.constant 1 : index
    %c7_244 = arith.constant 7 : index
    %c128_245 = arith.constant 128 : index
    %510 = vector.load %arg3[%c1_243, %c7_244, %c128_245] : memref<2x8x256xf32, #tpu.memory_space<vmem>>, vector<1x1x128xf32>
    %511 = vector.shape_cast %510 : vector<1x1x128xf32> to vector<1x128xf32>
    %cst_246 = arith.constant dense<0.000000e+00> : vector<16xf32>
    %512 = vector.multi_reduction <add>, %507, %cst_246 [1] : vector<16x128xf32> to vector<16xf32>
    %513 = vector.shape_cast %512 : vector<16xf32> to vector<16x1xf32>
    %cst_247 = arith.constant 1.280000e+02 : f32
    %514 = vector.broadcast %cst_247 : f32 to vector<16x1xf32>
    %515 = arith.divf %513, %514 : vector<16x1xf32>
    %516 = vector.broadcast %515 : vector<16x1xf32> to vector<16x128xf32>
    %517 = arith.subf %507, %516 : vector<16x128xf32>
    %518 = arith.mulf %517, %517 : vector<16x128xf32>
    %cst_248 = arith.constant dense<0.000000e+00> : vector<16xf32>
    %519 = vector.multi_reduction <add>, %518, %cst_248 [1] : vector<16x128xf32> to vector<16xf32>
    %520 = vector.shape_cast %519 : vector<16xf32> to vector<16x1xf32>
    %cst_249 = arith.constant 1.280000e+02 : f32
    %521 = vector.broadcast %cst_249 : f32 to vector<16x1xf32>
    %522 = arith.divf %520, %521 : vector<16x1xf32>
    %cst_250 = arith.constant 9.99999974E-6 : f32
    %523 = vector.broadcast %cst_250 : f32 to vector<16x1xf32>
    %524 = arith.addf %522, %523 : vector<16x1xf32>
    %525 = math.rsqrt %524 : vector<16x1xf32>
    %526 = vector.broadcast %525 : vector<16x1xf32> to vector<16x128xf32>
    %527 = arith.mulf %517, %526 : vector<16x128xf32>
    %528 = vector.broadcast %509 : vector<1x128xf32> to vector<16x128xf32>
    %529 = arith.mulf %527, %528 : vector<16x128xf32>
    %530 = vector.broadcast %511 : vector<1x128xf32> to vector<16x128xf32>
    %531 = arith.addf %529, %530 : vector<16x128xf32>
    %c0_251 = arith.constant 0 : index
    %c0_252 = arith.constant 0 : index
    %532 = vector.load %arg4[%c0_251, %c0_252] : memref<16x128xf32, #tpu.memory_space<vmem>>, vector<16x128xf32>
    tpu.vector_store %arg4[%c0_251, %c0_252], %531 {strides = array<i32>} : memref<16x128xf32, #tpu.memory_space<vmem>>, vector<16x128xf32>,
    return
  }
}

</mosaic_0001>

<llo_original>
// kernel: image2token_forward_packed.1
$region0: #{image2token_forward_packed.1}
  #allocation0 [shape = 'u32[]', space=smem, size = 0x4, offset = 0x4, fixed_abs, tag = 'smem constant byte address 0x4 - core index']
  #allocation1 [shape = 'u32[72,128]{1,0:T(1,128)}', space=vmem, size = 0x9000, scoped, tag = 'internal scratch']
  %s0 = inlined_call_operand.hbm [shape: f32[32,64], index: 0, kind: input, shape index: {}]
  %s1 = inlined_call_operand.hbm [shape: f32[73,128], index: 1, kind: input, shape index: {}]
  %s2 = inlined_call_operand.hbm [shape: f32[2,896,256], index: 2, kind: input, shape index: {}]
  %s3 = inlined_call_operand.hbm [shape: f32[2,8,256], index: 3, kind: input, shape index: {}]
  %s4 = inlined_call_operand.hbm [shape: f32[16,128], index: 4, kind: output, shape index: {}]
  %s5 = sld [smem:[#allocation0]]
  $region42: #{image2token_forward_packed.1} parent=0
    _
  %s7 = ssub.s32 1, %s5
  %s8 = scalar_select 0, %s7, %s5
  $region1: #{image2token_forward_packed.1} parent=0
    #allocation2 [shape = 'u8[16384]{0}', space=vmem, size = 0x4000, scoped, tag = 'input window, operand 0, single buffered']
    #allocation3 [shape = 's32[1]{0}', space=sflag, size = 0x4, scoped, tag = 'scoped memory for image2token_forward_packed.1']
    #allocation4 [shape = 's32[1]{0}', space=sflag, size = 0x4, scoped, tag = 'scoped memory for image2token_forward_packed.1']
    #allocation5 [shape = 'u8[40960]{0}', space=vmem, size = 0xa000, scoped, tag = 'input window, operand 1, single buffered']
    #allocation6 [shape = 's32[1]{0}', space=sflag, size = 0x4, scoped, tag = 'scoped memory for image2token_forward_packed.1']
    #allocation7 [shape = 'u8[1835008]{0}', space=vmem, size = 0x1c0000, scoped, tag = 'input window, operand 2, single buffered']
    #allocation8 [shape = 'u8[16384]{0}', space=vmem, size = 0x4000, scoped, tag = 'input window, operand 3, single buffered']
    #allocation9 [shape = 's32[1]{0}', space=sflag, size = 0x4, scoped, tag = 'scoped memory for image2token_forward_packed.1']
    #allocation10 [shape = 'u8[8192]{0}', space=vmem, size = 0x2000, scoped, tag = 'output window, operand 0, single buffered']
    %9 = vsyncpa [#allocation3], 0
    %10 = vsyncpa [#allocation6], 0
    %11 = vsyncpa [#allocation9], 0
    %12 = vsyncpa [#allocation4], 0
    // Predicated region
    $region2: #{image2token_forward_packed.1} parent=1 // pred_check
      _
    $region3: #{image2token_forward_packed.1} parent=1 // pred_check_branch
      %14 = sbr.rel (0) target = $region5
    $region4: #{image2token_forward_packed.1} parent=1 // pred_region
      %16 = vsyncadd [#allocation3], 0
      %s17 = sshll.u32 %s0, 4
      %s18 = int_to_ptr.hbm [resolvable:$true] %s17
      %s19 = sshll.u32 [#allocation2], 4
      %s20 = int_to_ptr.vmem [resolvable:$true] %s19
      %25 = dma.hbm_to_vmem [thread:$0]  %s18, 512, %s20, [#allocation3], 128, 128, 8
    $region5: #{image2token_forward_packed.1} parent=1 // pred_fallthru
      _
    // Predicated region
    $region6: #{image2token_forward_packed.1} parent=1 // pred_check
      _
    $region7: #{image2token_forward_packed.1} parent=1 // pred_check_branch
      %27 = sbr.rel (0) target = $region9
    $region8: #{image2token_forward_packed.1} parent=1 // pred_region
      %29 = vsyncadd [#allocation6], 0
      %s30 = sshll.u32 %s1, 4
      %s31 = int_to_ptr.hbm [resolvable:$true] %s30
      %s32 = sshll.u32 [#allocation5], 4
      %s33 = int_to_ptr.vmem [resolvable:$true] %s32
      %38 = dma.hbm_to_vmem [thread:$0]  %s31, 1280, %s33, [#allocation6], 128, 128, 8
    $region9: #{image2token_forward_packed.1} parent=1 // pred_fallthru
      _
    // Predicated region
    $region10: #{image2token_forward_packed.1} parent=1 // pred_check
      _
    $region11: #{image2token_forward_packed.1} parent=1 // pred_check_branch
      %40 = sbr.rel (0) target = $region13
    $region12: #{image2token_forward_packed.1} parent=1 // pred_region
      %42 = vsyncadd [#allocation6], 0
      %s43 = sshll.u32 %s2, 4
      %s44 = int_to_ptr.hbm [resolvable:$true] %s43
      %s45 = sshll.u32 [#allocation7], 4
      %s46 = int_to_ptr.vmem [resolvable:$true] %s45
      %51 = dma.hbm_to_vmem [thread:$0]  %s44, 57344, %s46, [#allocation6], 256, 256, 16
    $region13: #{image2token_forward_packed.1} parent=1 // pred_fallthru
      _
    // Predicated region
    $region14: #{image2token_forward_packed.1} parent=1 // pred_check
      _
    $region15: #{image2token_forward_packed.1} parent=1 // pred_check_branch
      %53 = sbr.rel (0) target = $region17
    $region16: #{image2token_forward_packed.1} parent=1 // pred_region
      %55 = vsyncadd [#allocation9], 0
      %s56 = sshll.u32 %s3, 4
      %s57 = int_to_ptr.hbm [resolvable:$true] %s56
      %s58 = sshll.u32 [#allocation8], 4
      %s59 = int_to_ptr.vmem [resolvable:$true] %s58
      %64 = dma.hbm_to_vmem [thread:$0]  %s57, 512, %s59, [#allocation9], 256, 256, 16
    $region17: #{image2token_forward_packed.1} parent=1 // pred_fallthru
      _
    // Predicated region
    $region18: #{image2token_forward_packed.1} parent=1 // pred_check
      _
    $region19: #{image2token_forward_packed.1} parent=1 // pred_check_branch
      %66 = sbr.rel (0) target = $region21
    $region20: #{image2token_forward_packed.1} parent=1 // pred_region
      %68 = dma.done [#allocation3], 512
    $region21: #{image2token_forward_packed.1} parent=1 // pred_fallthru
      _
    // Predicated region
    $region22: #{image2token_forward_packed.1} parent=1 // pred_check
      _
    $region23: #{image2token_forward_packed.1} parent=1 // pred_check_branch
      %70 = sbr.rel (0) target = $region25
    $region24: #{image2token_forward_packed.1} parent=1 // pred_region
      %72 = dma.done [#allocation6], 1280
    $region25: #{image2token_forward_packed.1} parent=1 // pred_fallthru
      _
    // Predicated region
    $region26: #{image2token_forward_packed.1} parent=1 // pred_check
      _
    $region27: #{image2token_forward_packed.1} parent=1 // pred_check_branch
      %74 = sbr.rel (0) target = $region29
    $region28: #{image2token_forward_packed.1} parent=1 // pred_region
      %76 = dma.done [#allocation6], 57344
    $region29: #{image2token_forward_packed.1} parent=1 // pred_fallthru
      _
    // Predicated region
    $region30: #{image2token_forward_packed.1} parent=1 // pred_check
      _
    $region31: #{image2token_forward_packed.1} parent=1 // pred_check_branch
      %78 = sbr.rel (0) target = $region33
    $region32: #{image2token_forward_packed.1} parent=1 // pred_region
      %80 = dma.done [#allocation9], 512
    $region33: #{image2token_forward_packed.1} parent=1 // pred_fallthru
      _
    %v81 = vlaneseq
    %v82 = vand.u32 %v81, 127
    %vm83 = vcmp.ge.s32.totalorder %v82, 0
    %vm84 = vcmp.lt.s32.totalorder %v82, 64
    %vm85 = vmand %vm83, %vm84
    %vm86 = vcmp.ge.s32.totalorder %v82, 64
    %vm87 = vcmp.lt.s32.totalorder %v82, 128
    %vm88 = vmand %vm86, %vm87
    %v89 = vlaneseq
    %v90 = vshrl.u32 %v89, 7
    %v91 = vadd.s32 %v90, 8
    %v92 = vadd.s32 %v90, 16
    %v93 = vadd.s32 %v90, 24
    %v94 = vadd.s32 %v90, 32
    %v95 = vadd.s32 %v90, 40
    %v96 = vadd.s32 %v90, 48
    %v97 = vadd.s32 %v90, 56
    %v98 = vadd.s32 %v90, 64
    %v99 = vadd.s32 %v90, 72
    %v100 = vadd.s32 %v90, 80
    %v101 = vadd.s32 %v90, 88
    %v102 = vadd.s32 %v90, 96
    %v103 = vadd.s32 %v90, 104
    %v104 = vadd.s32 %v90, 112
    %v105 = vadd.s32 %v90, 120
    %vm106 = vcmp.ge.s32.totalorder %v90, 0
    %vm107 = vcmp.ge.s32.totalorder %v91, 0
    %vm108 = vcmp.ge.s32.totalorder %v92, 0
    %vm109 = vcmp.ge.s32.totalorder %v93, 0
    %vm110 = vcmp.ge.s32.totalorder %v94, 0
    %vm111 = vcmp.ge.s32.totalorder %v95, 0
    %vm112 = vcmp.ge.s32.totalorder %v96, 0
    %vm113 = vcmp.ge.s32.totalorder %v97, 0
    %vm114 = vcmp.ge.s32.totalorder %v98, 0
    %vm115 = vcmp.ge.s32.totalorder %v99, 0
    %vm116 = vcmp.ge.s32.totalorder %v100, 0
    %vm117 = vcmp.ge.s32.totalorder %v101, 0
    %vm118 = vcmp.ge.s32.totalorder %v102, 0
    %vm119 = vcmp.ge.s32.totalorder %v103, 0
    %vm120 = vcmp.ge.s32.totalorder %v104, 0
    %vm121 = vcmp.ge.s32.totalorder %v105, 0
    %vm122 = vcmp.lt.s32.totalorder %v90, 64
    %vm123 = vcmp.lt.s32.totalorder %v91, 64
    %vm124 = vcmp.lt.s32.totalorder %v92, 64
    %vm125 = vcmp.lt.s32.totalorder %v93, 64
    %vm126 = vcmp.lt.s32.totalorder %v94, 64
    %vm127 = vcmp.lt.s32.totalorder %v95, 64
    %vm128 = vcmp.lt.s32.totalorder %v96, 64
    %vm129 = vcmp.lt.s32.totalorder %v97, 64
    %vm130 = vcmp.lt.s32.totalorder %v98, 64
    %vm131 = vcmp.lt.s32.totalorder %v99, 64
    %vm132 = vcmp.lt.s32.totalorder %v100, 64
    %vm133 = vcmp.lt.s32.totalorder %v101, 64
    %vm134 = vcmp.lt.s32.totalorder %v102, 64
    %vm135 = vcmp.lt.s32.totalorder %v103, 64
    %vm136 = vcmp.lt.s32.totalorder %v104, 64
    %vm137 = vcmp.lt.s32.totalorder %v105, 64
    %vm138 = vmand %vm106, %vm122
    %vm139 = vmand %vm107, %vm123
    %vm140 = vmand %vm108, %vm124
    %vm141 = vmand %vm109, %vm125
    %vm142 = vmand %vm110, %vm126
    %vm143 = vmand %vm111, %vm127
    %vm144 = vmand %vm112, %vm128
    %vm145 = vmand %vm113, %vm129
    %vm146 = vmand %vm114, %vm130
    %vm147 = vmand %vm115, %vm131
    %vm148 = vmand %vm116, %vm132
    %vm149 = vmand %vm117, %vm133
    %vm150 = vmand %vm118, %vm134
    %vm151 = vmand %vm119, %vm135
    %vm152 = vmand %vm120, %vm136
    %vm153 = vmand %vm121, %vm137
    %vm154 = vcmp.ge.s32.totalorder %v90, 64
    %vm155 = vcmp.ge.s32.totalorder %v91, 64
    %vm156 = vcmp.ge.s32.totalorder %v92, 64
    %vm157 = vcmp.ge.s32.totalorder %v93, 64
    %vm158 = vcmp.ge.s32.totalorder %v94, 64
    %vm159 = vcmp.ge.s32.totalorder %v95, 64
    %vm160 = vcmp.ge.s32.totalorder %v96, 64
    %vm161 = vcmp.ge.s32.totalorder %v97, 64
    %vm162 = vcmp.ge.s32.totalorder %v98, 64
    %vm163 = vcmp.ge.s32.totalorder %v99, 64
    %vm164 = vcmp.ge.s32.totalorder %v100, 64
    %vm165 = vcmp.ge.s32.totalorder %v101, 64
    %vm166 = vcmp.ge.s32.totalorder %v102, 64
    %vm167 = vcmp.ge.s32.totalorder %v103, 64
    %vm168 = vcmp.ge.s32.totalorder %v104, 64
    %vm169 = vcmp.ge.s32.totalorder %v105, 64
    %vm170 = vcmp.lt.s32.totalorder %v90, 128
    %vm171 = vcmp.lt.s32.totalorder %v91, 128
    %vm172 = vcmp.lt.s32.totalorder %v92, 128
    %vm173 = vcmp.lt.s32.totalorder %v93, 128
    %vm174 = vcmp.lt.s32.totalorder %v94, 128
    %vm175 = vcmp.lt.s32.totalorder %v95, 128
    %vm176 = vcmp.lt.s32.totalorder %v96, 128
    %vm177 = vcmp.lt.s32.totalorder %v97, 128
    %vm178 = vcmp.lt.s32.totalorder %v98, 128
    %vm179 = vcmp.lt.s32.totalorder %v99, 128
    %vm180 = vcmp.lt.s32.totalorder %v100, 128
    %vm181 = vcmp.lt.s32.totalorder %v101, 128
    %vm182 = vcmp.lt.s32.totalorder %v102, 128
    %vm183 = vcmp.lt.s32.totalorder %v103, 128
    %vm184 = vcmp.lt.s32.totalorder %v104, 128
    %vm185 = vcmp.lt.s32.totalorder %v105, 128
    %vm186 = vmand %vm154, %vm170
    %vm187 = vmand %vm155, %vm171
    %vm188 = vmand %vm156, %vm172
    %vm189 = vmand %vm157, %vm173
    %vm190 = vmand %vm158, %vm174
    %vm191 = vmand %vm159, %vm175
    %vm192 = vmand %vm160, %vm176
    %vm193 = vmand %vm161, %vm177
    %vm194 = vmand %vm162, %vm178
    %vm195 = vmand %vm163, %vm179
    %vm196 = vmand %vm164, %vm180
    %vm197 = vmand %vm165, %vm181
    %vm198 = vmand %vm166, %vm182
    %vm199 = vmand %vm167, %vm183
    %vm200 = vmand %vm168, %vm184
    %vm201 = vmand %vm169, %vm185
    %vm202 = vcmp.lt.s32.totalorder %v90, 0
    %vm203 = vcmp.lt.s32.totalorder %v91, 0
    %vm204 = vcmp.lt.s32.totalorder %v90, 8
    %vm205 = vcmp.lt.s32.totalorder %v91, 8
    %vm206 = vmand %vm106, %vm204
    %vm207 = vmand %vm107, %vm205
    %vm208 = vcmp.lt.s32.totalorder %v82, 8
    %vm209 = vmand %vm83, %vm208
    %vm210 = vmand %vm206, %vm209
    %vm211 = vmand %vm207, %vm209
    %vm212 = vmor %vm202, %vm210
    %vm213 = vmor %vm203, %vm211
    %vm214 = vcmp.ge.s32.totalorder %v90, 8
    %vm215 = vcmp.ge.s32.totalorder %v91, 8
    %vm216 = vcmp.lt.s32.totalorder %v90, 16
    %vm217 = vcmp.lt.s32.totalorder %v91, 16
    %vm218 = vmand %vm214, %vm216
    %vm219 = vmand %vm215, %vm217
    %vm220 = vcmp.ge.s32.totalorder %v82, 8
    %vm221 = vcmp.lt.s32.totalorder %v82, 16
    %vm222 = vmand %vm220, %vm221
    %vm223 = vmand %vm218, %vm222
    %vm224 = vmand %vm219, %vm222
    %vm225 = vmor %vm212, %vm223
    %vm226 = vmor %vm213, %vm224
    %v227 = vsel %vm225, 0.0, -1e+30
    %v228 = vsel %vm226, 0.0, -1e+30
    %vm229 = vmand %vm83, %vm221
    %vm230 = vmand %vm206, %vm229
    %vm231 = vmand %vm207, %vm229
    %vm232 = vmor %vm202, %vm230
    %vm233 = vmor %vm203, %vm231
    %vm234 = vcmp.ge.s32.totalorder %v82, 16
    %vm235 = vcmp.lt.s32.totalorder %v82, 32
    %vm236 = vmand %vm234, %vm235
    %vm237 = vmand %vm218, %vm236
    %vm238 = vmand %vm219, %vm236
    %vm239 = vmor %vm232, %vm237
    %vm240 = vmor %vm233, %vm238
    %v241 = vsel %vm239, 0.0, -1e+30
    %v242 = vsel %vm240, 0.0, -1e+30
    %v243 = vld [vmem:[#allocation5] sm:$0xff]
    %v244 = vld [vmem:[#allocation5 + $0x8] sm:$0xff]
    %v245 = vld [vmem:[#allocation5 + $0x10] sm:$0xff]
    %v246 = vld [vmem:[#allocation5 + $0x18] sm:$0xff]
    %v247 = vld [vmem:[#allocation5 + $0x20] sm:$0xff]
    %v248 = vld [vmem:[#allocation5 + $0x28] sm:$0xff]
    %v249 = vld [vmem:[#allocation5 + $0x30] sm:$0xff]
    %v250 = vld [vmem:[#allocation5 + $0x38] sm:$0xff]
    %v251 = vld [vmem:[#allocation5 + $0x40] sm:$0xff]
    %v252 = vld [vmem:[#allocation5 + $0x48] sm:$0x1]
    %v253 = vld [vmem:[#allocation2] sm:$0xff]
    %v254 = vld [vmem:[#allocation2 + $0x8] sm:$0xff]
    %v255 = vld [vmem:[#allocation2 + $0x10] sm:$0xff]
    %v256 = vld [vmem:[#allocation2 + $0x18] sm:$0xff]
    %v257 = vperm.slane %v252, 0
    %vm258 = vcmask 523264
    %v260 = vsel %vm258, %v253, 0
    %v263 = vsel %vm258, %v254, 0
    %v266 = vsel %vm258, %v255, 0
    %v269 = vsel %vm258, %v256, 0
    %271 = vmatpush.msra.mxu0 0.0
    %272 = vmatpush.msra.mxu0 0.0
    %273 = vmatpush.msra.mxu0 0.0
    %274 = vmatpush.msra.mxu0 0.0
    %275 = vmatpush.msra.mxu0 0.0
    %276 = vmatpush.msra.mxu0 0.0
    %277 = vmatpush.msra.mxu0 0.0
    %278 = vmatpush.msra.mxu0 0.0
    %279 = vmatpush.msra.mxu0 %v250
    %280 = vmatpush.msra.mxu0 %v249
    %281 = vmatpush.msra.mxu0 %v248
    %282 = vmatpush.msra.mxu0 %v247
    %283 = vmatpush.msra.mxu0 %v246
    %284 = vmatpush.msra.mxu0 %v245
    %285 = vmatpush.msra.mxu0 %v244
    %286 = vmatpush.msra.mxu0 %v243
    %287 = vmatmul.f32.gmra.mxu0 %v260
    %v288 = vpop.f32.mrf.mxu0
    %v289 = vadd.f32 %v257, %v288
    %290 = vmatmul.f32.gmra.mxu0 %v263
    %v291 = vpop.f32.mrf.mxu0
    %v292 = vadd.f32 %v257, %v291
    %293 = vmatmul.f32.gmra.mxu0 %v266
    %v294 = vpop.f32.mrf.mxu0
    %v295 = vadd.f32 %v257, %v294
    %296 = vmatmul.f32.gmra.mxu0 %v269
    %v297 = vpop.f32.mrf.mxu0
    %v298 = vadd.f32 %v257, %v297
    %299 = vdwg.mxu0
    %v300 = vld [vmem:[#allocation7] sm:$0xff]
    %v301 = vld [vmem:[#allocation7 + $0x8] sm:$0xff]
    %v302 = vld [vmem:[#allocation7 + $0x10] sm:$0xff]
    %v303 = vld [vmem:[#allocation7 + $0x18] sm:$0xff]
    %v304 = vld [vmem:[#allocation7 + $0x20] sm:$0xff]
    %v305 = vld [vmem:[#allocation7 + $0x28] sm:$0xff]
    %v306 = vld [vmem:[#allocation7 + $0x30] sm:$0xff]
    %v307 = vld [vmem:[#allocation7 + $0x38] sm:$0xff]
    %v308 = vld [vmem:[#allocation7 + $0x40] sm:$0xff]
    %v309 = vld [vmem:[#allocation7 + $0x48] sm:$0xff]
    %v310 = vld [vmem:[#allocation7 + $0x50] sm:$0xff]
    %v311 = vld [vmem:[#allocation7 + $0x58] sm:$0xff]
    %v312 = vld [vmem:[#allocation7 + $0x60] sm:$0xff]
    %v313 = vld [vmem:[#allocation7 + $0x68] sm:$0xff]
    %v314 = vld [vmem:[#allocation7 + $0x70] sm:$0xff]
    %v315 = vld [vmem:[#allocation7 + $0x78] sm:$0xff]
    %v316 = vld [vmem:[#allocation7 + $0x80] sm:$0xff]
    %v317 = vld [vmem:[#allocation7 + $0x88] sm:$0xff]
    %v318 = vld [vmem:[#allocation7 + $0x90] sm:$0xff]
    %v319 = vld [vmem:[#allocation7 + $0x98] sm:$0xff]
    %v320 = vld [vmem:[#allocation7 + $0xa0] sm:$0xff]
    %v321 = vld [vmem:[#allocation7 + $0xa8] sm:$0xff]
    %v322 = vld [vmem:[#allocation7 + $0xb0] sm:$0xff]
    %v323 = vld [vmem:[#allocation7 + $0xb8] sm:$0xff]
    %v324 = vld [vmem:[#allocation7 + $0xc0] sm:$0xff]
    %v325 = vld [vmem:[#allocation7 + $0xc8] sm:$0xff]
    %v326 = vld [vmem:[#allocation7 + $0xd0] sm:$0xff]
    %v327 = vld [vmem:[#allocation7 + $0xd8] sm:$0xff]
    %v328 = vld [vmem:[#allocation7 + $0xe0] sm:$0xff]
    %v329 = vld [vmem:[#allocation7 + $0xe8] sm:$0xff]
    %v330 = vld [vmem:[#allocation7 + $0xf0] sm:$0xff]
    %v331 = vld [vmem:[#allocation7 + $0xf8] sm:$0xff]
    %v332 = vld [vmem:[#allocation8] ss:$8 sm:$0x3]
    %v334 = vperm.slane %v332, 0
    %v335 = vperm.slane %v332, 1
    %338 = vmatpush.msra.mxu0 %v330
    %339 = vmatpush.msra.mxu0 %v328
    %340 = vmatpush.msra.mxu0 %v326
    %341 = vmatpush.msra.mxu0 %v324
    %342 = vmatpush.msra.mxu0 %v322
    %343 = vmatpush.msra.mxu0 %v320
    %344 = vmatpush.msra.mxu0 %v318
    %345 = vmatpush.msra.mxu0 %v316
    %346 = vmatpush.msra.mxu0 %v314
    %347 = vmatpush.msra.mxu0 %v312
    %348 = vmatpush.msra.mxu0 %v310
    %349 = vmatpush.msra.mxu0 %v308
    %350 = vmatpush.msra.mxu0 %v306
    %351 = vmatpush.msra.mxu0 %v304
    %352 = vmatpush.msra.mxu0 %v302
    %353 = vmatpush.msra.mxu0 %v300
    %354 = vmatmul.f32.gmra.mxu0 %v251
    %v355 = vpop.f32.mrf.mxu0
    %v356 = vadd.f32 %v334, %v355
    %357 = vmatmul.f32.gmra.mxu0 %v251
    %v358 = vpop.f32.mrf.mxu0
    %v359 = vadd.f32 %v334, %v358
    %360 = vdwg.mxu0
    %361 = vmatpush.msra.mxu0 %v331
    %362 = vmatpush.msra.mxu0 %v329
    %363 = vmatpush.msra.mxu0 %v327
    %364 = vmatpush.msra.mxu0 %v325
    %365 = vmatpush.msra.mxu0 %v323
    %366 = vmatpush.msra.mxu0 %v321
    %367 = vmatpush.msra.mxu0 %v319
    %368 = vmatpush.msra.mxu0 %v317
    %369 = vmatpush.msra.mxu0 %v315
    %370 = vmatpush.msra.mxu0 %v313
    %371 = vmatpush.msra.mxu0 %v311
    %372 = vmatpush.msra.mxu0 %v309
    %373 = vmatpush.msra.mxu0 %v307
    %374 = vmatpush.msra.mxu0 %v305
    %375 = vmatpush.msra.mxu0 %v303
    %376 = vmatpush.msra.mxu0 %v301
    %377 = vmatmul.f32.gmra.mxu0 %v251
    %v378 = vpop.f32.mrf.mxu0
    %v379 = vadd.f32 %v335, %v378
    %380 = vmatmul.f32.gmra.mxu0 %v251
    %v381 = vpop.f32.mrf.mxu0
    %v382 = vadd.f32 %v335, %v381
    %383 = vdwg.mxu0
    %v384 = vld [vmem:[#allocation7 + $0x100] sm:$0xff]
    %v385 = vld [vmem:[#allocation7 + $0x110] sm:$0xff]
    %v386 = vld [vmem:[#allocation7 + $0x120] sm:$0xff]
    %v387 = vld [vmem:[#allocation7 + $0x130] sm:$0xff]
    %v388 = vld [vmem:[#allocation7 + $0x140] sm:$0xff]
    %v389 = vld [vmem:[#allocation7 + $0x150] sm:$0xff]
    %v390 = vld [vmem:[#allocation7 + $0x160] sm:$0xff]
    %v391 = vld [vmem:[#allocation7 + $0x170] sm:$0xff]
    %v392 = vld [vmem:[#allocation7 + $0x180] sm:$0xff]
    %v393 = vld [vmem:[#allocation7 + $0x190] sm:$0xff]
    %v394 = vld [vmem:[#allocation7 + $0x1a0] sm:$0xff]
    %v395 = vld [vmem:[#allocation7 + $0x1b0] sm:$0xff]
    %v396 = vld [vmem:[#allocation7 + $0x1c0] sm:$0xff]
    %v397 = vld [vmem:[#allocation7 + $0x1d0] sm:$0xff]
    %v398 = vld [vmem:[#allocation7 + $0x1e0] sm:$0xff]
    %v399 = vld [vmem:[#allocation7 + $0x1f0] sm:$0xff]
    %400 = vmatpush.xpose.msra.mxu0 0.0
    %401 = vmatpush.xpose.msra.mxu0 0.0
    %402 = vmatpush.xpose.msra.mxu0 0.0
    %403 = vmatpush.xpose.msra.mxu0 0.0
    %404 = vmatpush.xpose.msra.mxu0 0.0
    %405 = vmatpush.xpose.msra.mxu0 0.0
    %406 = vmatpush.xpose.msra.mxu0 0.0
    %407 = vmatpush.xpose.msra.mxu0 0.0
    %408 = vmatpush.xpose.msra.mxu0 0.0
    %409 = vmatpush.xpose.msra.mxu0 0.0
    %410 = vmatpush.xpose.msra.mxu0 0.0
    %411 = vmatpush.xpose.msra.mxu0 0.0
    %412 = vmatpush.xpose.msra.mxu0 0.0
    %413 = vmatpush.xpose.msra.mxu0 0.0
    %414 = vmatpush.xpose.msra.mxu0 %v251
    %415 = vmatpush.xpose.msra.mxu0 %v251
    %416 = vmatmul.f32.gmra.mxu0 %v384
    %v417 = vpop.f32.mrf.mxu0
    %v418 = vadd.f32 0.0, %v417
    %419 = vmatmul.f32.gmra.mxu0 %v385
    %v420 = vpop.f32.mrf.mxu0
    %v421 = vadd.f32 0.0, %v420
    %422 = vmatmul.f32.gmra.mxu0 %v386
    %v423 = vpop.f32.mrf.mxu0
    %v424 = vadd.f32 0.0, %v423
    %425 = vmatmul.f32.gmra.mxu0 %v387
    %v426 = vpop.f32.mrf.mxu0
    %v427 = vadd.f32 0.0, %v426
    %428 = vmatmul.f32.gmra.mxu0 %v388
    %v429 = vpop.f32.mrf.mxu0
    %v430 = vadd.f32 0.0, %v429
    %431 = vmatmul.f32.gmra.mxu0 %v389
    %v432 = vpop.f32.mrf.mxu0
    %v433 = vadd.f32 0.0, %v432
    %434 = vmatmul.f32.gmra.mxu0 %v390
    %v435 = vpop.f32.mrf.mxu0
    %v436 = vadd.f32 0.0, %v435
    %437 = vmatmul.f32.gmra.mxu0 %v391
    %v438 = vpop.f32.mrf.mxu0
    %v439 = vadd.f32 0.0, %v438
    %440 = vmatmul.f32.gmra.mxu0 %v392
    %v441 = vpop.f32.mrf.mxu0
    %v442 = vadd.f32 0.0, %v441
    %443 = vmatmul.f32.gmra.mxu0 %v393
    %v444 = vpop.f32.mrf.mxu0
    %v445 = vadd.f32 0.0, %v444
    %446 = vmatmul.f32.gmra.mxu0 %v394
    %v447 = vpop.f32.mrf.mxu0
    %v448 = vadd.f32 0.0, %v447
    %449 = vmatmul.f32.gmra.mxu0 %v395
    %v450 = vpop.f32.mrf.mxu0
    %v451 = vadd.f32 0.0, %v450
    %452 = vmatmul.f32.gmra.mxu0 %v396
    %v453 = vpop.f32.mrf.mxu0
    %v454 = vadd.f32 0.0, %v453
    %455 = vmatmul.f32.gmra.mxu0 %v397
    %v456 = vpop.f32.mrf.mxu0
    %v457 = vadd.f32 0.0, %v456
    %458 = vmatmul.f32.gmra.mxu0 %v398
    %v459 = vpop.f32.mrf.mxu0
    %v460 = vadd.f32 0.0, %v459
    %461 = vmatmul.f32.gmra.mxu0 %v399
    %v462 = vpop.f32.mrf.mxu0
    %v463 = vadd.f32 0.0, %v462
    %464 = vdwg.mxu0
    %v465 = vsel %vm138, 1, 0
    %v466 = vsel %vm139, 1, 0
    %v467 = vsel %vm140, 1, 0
    %v468 = vsel %vm141, 1, 0
    %v469 = vsel %vm142, 1, 0
    %v470 = vsel %vm143, 1, 0
    %v471 = vsel %vm144, 1, 0
    %v472 = vsel %vm145, 1, 0
    %v473 = vsel %vm146, 1, 0
    %v474 = vsel %vm147, 1, 0
    %v475 = vsel %vm148, 1, 0
    %v476 = vsel %vm149, 1, 0
    %v477 = vsel %vm150, 1, 0
    %v478 = vsel %vm151, 1, 0
    %v479 = vsel %vm152, 1, 0
    %v480 = vsel %vm153, 1, 0
    %vm481 = vcmp.eq.s32.totalorder %v465, 1
    %vm482 = vcmp.eq.s32.totalorder %v466, 1
    %vm483 = vcmp.eq.s32.totalorder %v467, 1
    %vm484 = vcmp.eq.s32.totalorder %v468, 1
    %vm485 = vcmp.eq.s32.totalorder %v469, 1
    %vm486 = vcmp.eq.s32.totalorder %v470, 1
    %vm487 = vcmp.eq.s32.totalorder %v471, 1
    %vm488 = vcmp.eq.s32.totalorder %v472, 1
    %vm489 = vcmp.eq.s32.totalorder %v473, 1
    %vm490 = vcmp.eq.s32.totalorder %v474, 1
    %vm491 = vcmp.eq.s32.totalorder %v475, 1
    %vm492 = vcmp.eq.s32.totalorder %v476, 1
    %vm493 = vcmp.eq.s32.totalorder %v477, 1
    %vm494 = vcmp.eq.s32.totalorder %v478, 1
    %vm495 = vcmp.eq.s32.totalorder %v479, 1
    %vm496 = vcmp.eq.s32.totalorder %v480, 1
    %v497 = vsel %vm481, %v418, 0.0
    %v498 = vsel %vm482, %v421, 0.0
    %v499 = vsel %vm483, %v424, 0.0
    %v500 = vsel %vm484, %v427, 0.0
    %v501 = vsel %vm485, %v430, 0.0
    %v502 = vsel %vm486, %v433, 0.0
    %v503 = vsel %vm487, %v436, 0.0
    %v504 = vsel %vm488, %v439, 0.0
    %v505 = vsel %vm489, %v442, 0.0
    %v506 = vsel %vm490, %v445, 0.0
    %v507 = vsel %vm491, %v448, 0.0
    %v508 = vsel %vm492, %v451, 0.0
    %v509 = vsel %vm493, %v454, 0.0
    %v510 = vsel %vm494, %v457, 0.0
    %v511 = vsel %vm495, %v460, 0.0
    %v512 = vsel %vm496, %v463, 0.0
    %513 = vmatpush.msra.mxu0 %v512
    %514 = vmatpush.msra.mxu0 %v511
    %515 = vmatpush.msra.mxu0 %v510
    %516 = vmatpush.msra.mxu0 %v509
    %517 = vmatpush.msra.mxu0 %v508
    %518 = vmatpush.msra.mxu0 %v507
    %519 = vmatpush.msra.mxu0 %v506
    %520 = vmatpush.msra.mxu0 %v505
    %521 = vmatpush.msra.mxu0 %v504
    %522 = vmatpush.msra.mxu0 %v503
    %523 = vmatpush.msra.mxu0 %v502
    %524 = vmatpush.msra.mxu0 %v501
    %525 = vmatpush.msra.mxu0 %v500
    %526 = vmatpush.msra.mxu0 %v499
    %527 = vmatpush.msra.mxu0 %v498
    %528 = vmatpush.msra.mxu0 %v497
    %529 = vmatmul.f32.gmra.mxu0 %v356
    %v530 = vpop.f32.mrf.mxu0
    %v531 = vadd.f32 %v227, %v530
    %532 = vmatmul.f32.gmra.mxu0 %v359
    %v533 = vpop.f32.mrf.mxu0
    %v534 = vadd.f32 %v228, %v533
    %535 = vdwg.mxu0
    %vm536 = vcmask 130048
    %v537 = vsel %vm536, %v531, -inf
    %538 = vmax.xlane.f32.xlu0 %v537
    %v539 = vpop.xlane.xlu0 %538
    %v540 = vsel %vm536, %v534, -inf
    %541 = vmax.xlane.f32.xlu0 %v540
    %v542 = vpop.xlane.xlu0 %541
    %v543 = vsub.f32 %v531, %v539
    %v544 = vsub.f32 %v534, %v542
    %v545 = vmul.f32 %v543, 1.442695
    %v546 = vpow.pop %v545
    %v547 = vmul.f32 %v544, 1.442695
    %v548 = vpow.pop %v547
    %v549 = vsel %vm536, %v546, 0.0
    %550 = vadd.xlane.f32.xlu0 %v549
    %v551 = vpop.xlane.xlu0 %550
    %v552 = vsel %vm536, %v548, 0.0
    %553 = vadd.xlane.f32.xlu0 %v552
    %v554 = vpop.xlane.xlu0 %553
    %v555 = vrcp.pop %v551
    %v556 = vmul.f32 %v551, %v555
    %v557 = vsub.f32 1.0, %v556
    %v558 = vmul.f32 %v555, %v557
    %v559 = vadd.f32 %v555, %v558
    %vm560 = vweird.f32 %v551
    %vm561 = vweird.f32 %v555
    %vm562 = vmor %vm560, %vm561
    %v563 = vsel %vm562, %v555, %v559
    %v564 = vand.u32 2147483647, %v551
    %vm565 = vcmp.eq.f32.partialorder %v564, 8.507059e+37
    %v566 = vand.u32 %v551, 2147483648
    %v567 = vor.u32 1.1754944e-38, %v566
    %v568 = vsel %vm565, %v567, %v563
    %v569 = vmul.f32 %v546, %v568
    %v570 = vrcp.pop %v554
    %v571 = vmul.f32 %v554, %v570
    %v572 = vsub.f32 1.0, %v571
    %v573 = vmul.f32 %v570, %v572
    %v574 = vadd.f32 %v570, %v573
    %vm575 = vweird.f32 %v554
    %vm576 = vweird.f32 %v570
    %vm577 = vmor %vm575, %vm576
    %v578 = vsel %vm577, %v570, %v574
    %v579 = vand.u32 2147483647, %v554
    %vm580 = vcmp.eq.f32.partialorder %v579, 8.507059e+37
    %v581 = vand.u32 %v554, 2147483648
    %v582 = vor.u32 1.1754944e-38, %v581
    %v583 = vsel %vm580, %v582, %v578
    %v584 = vmul.f32 %v548, %v583
    %v586 = vsel %vm536, %v569, 0
    %v589 = vsel %vm536, %v584, 0
    %591 = vmatpush.msra.mxu0 0.0
    %592 = vmatpush.msra.mxu0 0.0
    %593 = vmatpush.msra.mxu0 0.0
    %594 = vmatpush.msra.mxu0 0.0
    %595 = vmatpush.msra.mxu0 0.0
    %596 = vmatpush.msra.mxu0 0.0
    %597 = vmatpush.msra.mxu0 0.0
    %598 = vmatpush.msra.mxu0 0.0
    %599 = vmatpush.msra.mxu0 0.0
    %600 = vmatpush.msra.mxu0 0.0
    %601 = vmatpush.msra.mxu0 0.0
    %602 = vmatpush.msra.mxu0 0.0
    %603 = vmatpush.msra.mxu0 0.0
    %604 = vmatpush.msra.mxu0 0.0
    %605 = vmatpush.msra.mxu0 %v382
    %606 = vmatpush.msra.mxu0 %v379
    %607 = vmatmul.f32.gmra.mxu0 %v586
    %v608 = vpop.f32.mrf.mxu0
    %v609 = vadd.f32 0.0, %v608
    %610 = vmatmul.f32.gmra.mxu0 %v589
    %v611 = vpop.f32.mrf.mxu0
    %v612 = vadd.f32 0.0, %v611
    %613 = vdwg.mxu0
    %v614 = vsel %vm85, 1, 0
    %vm615 = vcmp.eq.s32.totalorder %v614, 1
    %v616 = vsel %vm615, %v609, 0.0
    %v617 = vsel %vm615, %v612, 0.0
    %v618 = vadd.f32 %v616, 0.0
    %v619 = vadd.f32 %v617, 0.0
    %v620 = vsel %vm186, 1, 0
    %v621 = vsel %vm187, 1, 0
    %v622 = vsel %vm188, 1, 0
    %v623 = vsel %vm189, 1, 0
    %v624 = vsel %vm190, 1, 0
    %v625 = vsel %vm191, 1, 0
    %v626 = vsel %vm192, 1, 0
    %v627 = vsel %vm193, 1, 0
    %v628 = vsel %vm194, 1, 0
    %v629 = vsel %vm195, 1, 0
    %v630 = vsel %vm196, 1, 0
    %v631 = vsel %vm197, 1, 0
    %v632 = vsel %vm198, 1, 0
    %v633 = vsel %vm199, 1, 0
    %v634 = vsel %vm200, 1, 0
    %v635 = vsel %vm201, 1, 0
    %vm636 = vcmp.eq.s32.totalorder %v620, 1
    %vm637 = vcmp.eq.s32.totalorder %v621, 1
    %vm638 = vcmp.eq.s32.totalorder %v622, 1
    %vm639 = vcmp.eq.s32.totalorder %v623, 1
    %vm640 = vcmp.eq.s32.totalorder %v624, 1
    %vm641 = vcmp.eq.s32.totalorder %v625, 1
    %vm642 = vcmp.eq.s32.totalorder %v626, 1
    %vm643 = vcmp.eq.s32.totalorder %v627, 1
    %vm644 = vcmp.eq.s32.totalorder %v628, 1
    %vm645 = vcmp.eq.s32.totalorder %v629, 1
    %vm646 = vcmp.eq.s32.totalorder %v630, 1
    %vm647 = vcmp.eq.s32.totalorder %v631, 1
    %vm648 = vcmp.eq.s32.totalorder %v632, 1
    %vm649 = vcmp.eq.s32.totalorder %v633, 1
    %vm650 = vcmp.eq.s32.totalorder %v634, 1
    %vm651 = vcmp.eq.s32.totalorder %v635, 1
    %v652 = vsel %vm636, %v418, 0.0
    %v653 = vsel %vm637, %v421, 0.0
    %v654 = vsel %vm638, %v424, 0.0
    %v655 = vsel %vm639, %v427, 0.0
    %v656 = vsel %vm640, %v430, 0.0
    %v657 = vsel %vm641, %v433, 0.0
    %v658 = vsel %vm642, %v436, 0.0
    %v659 = vsel %vm643, %v439, 0.0
    %v660 = vsel %vm644, %v442, 0.0
    %v661 = vsel %vm645, %v445, 0.0
    %v662 = vsel %vm646, %v448, 0.0
    %v663 = vsel %vm647, %v451, 0.0
    %v664 = vsel %vm648, %v454, 0.0
    %v665 = vsel %vm649, %v457, 0.0
    %v666 = vsel %vm650, %v460, 0.0
    %v667 = vsel %vm651, %v463, 0.0
    %668 = vmatpush.msra.mxu0 %v667
    %669 = vmatpush.msra.mxu0 %v666
    %670 = vmatpush.msra.mxu0 %v665
    %671 = vmatpush.msra.mxu0 %v664
    %672 = vmatpush.msra.mxu0 %v663
    %673 = vmatpush.msra.mxu0 %v662
    %674 = vmatpush.msra.mxu0 %v661
    %675 = vmatpush.msra.mxu0 %v660
    %676 = vmatpush.msra.mxu0 %v659
    %677 = vmatpush.msra.mxu0 %v658
    %678 = vmatpush.msra.mxu0 %v657
    %679 = vmatpush.msra.mxu0 %v656
    %680 = vmatpush.msra.mxu0 %v655
    %681 = vmatpush.msra.mxu0 %v654
    %682 = vmatpush.msra.mxu0 %v653
    %683 = vmatpush.msra.mxu0 %v652
    %684 = vmatmul.f32.gmra.mxu0 %v356
    %v685 = vpop.f32.mrf.mxu0
    %v686 = vadd.f32 %v227, %v685
    %687 = vmatmul.f32.gmra.mxu0 %v359
    %v688 = vpop.f32.mrf.mxu0
    %v689 = vadd.f32 %v228, %v688
    %690 = vdwg.mxu0
    %v691 = vsel %vm536, %v686, -inf
    %692 = vmax.xlane.f32.xlu0 %v691
    %v693 = vpop.xlane.xlu0 %692
    %v694 = vsel %vm536, %v689, -inf
    %695 = vmax.xlane.f32.xlu0 %v694
    %v696 = vpop.xlane.xlu0 %695
    %v697 = vsub.f32 %v686, %v693
    %v698 = vsub.f32 %v689, %v696
    %v699 = vmul.f32 %v697, 1.442695
    %v700 = vpow.pop %v699
    %v701 = vmul.f32 %v698, 1.442695
    %v702 = vpow.pop %v701
    %v703 = vsel %vm536, %v700, 0.0
    %704 = vadd.xlane.f32.xlu0 %v703
    %v705 = vpop.xlane.xlu0 %704
    %v706 = vsel %vm536, %v702, 0.0
    %707 = vadd.xlane.f32.xlu0 %v706
    %v708 = vpop.xlane.xlu0 %707
    %v709 = vrcp.pop %v705
    %v710 = vmul.f32 %v705, %v709
    %v711 = vsub.f32 1.0, %v710
    %v712 = vmul.f32 %v709, %v711
    %v713 = vadd.f32 %v709, %v712
    %vm714 = vweird.f32 %v705
    %vm715 = vweird.f32 %v709
    %vm716 = vmor %vm714, %vm715
    %v717 = vsel %vm716, %v709, %v713
    %v718 = vand.u32 2147483647, %v705
    %vm719 = vcmp.eq.f32.partialorder %v718, 8.507059e+37
    %v720 = vand.u32 %v705, 2147483648
    %v721 = vor.u32 1.1754944e-38, %v720
    %v722 = vsel %vm719, %v721, %v717
    %v723 = vmul.f32 %v700, %v722
    %v724 = vrcp.pop %v708
    %v725 = vmul.f32 %v708, %v724
    %v726 = vsub.f32 1.0, %v725
    %v727 = vmul.f32 %v724, %v726
    %v728 = vadd.f32 %v724, %v727
    %vm729 = vweird.f32 %v708
    %vm730 = vweird.f32 %v724
    %vm731 = vmor %vm729, %vm730
    %v732 = vsel %vm731, %v724, %v728
    %v733 = vand.u32 2147483647, %v708
    %vm734 = vcmp.eq.f32.partialorder %v733, 8.507059e+37
    %v735 = vand.u32 %v708, 2147483648
    %v736 = vor.u32 1.1754944e-38, %v735
    %v737 = vsel %vm734, %v736, %v732
    %v738 = vmul.f32 %v702, %v737
    %v740 = vsel %vm536, %v723, 0
    %v743 = vsel %vm536, %v738, 0
    %745 = vmatpush.msra.mxu0 0.0
    %746 = vmatpush.msra.mxu0 0.0
    %747 = vmatpush.msra.mxu0 0.0
    %748 = vmatpush.msra.mxu0 0.0
    %749 = vmatpush.msra.mxu0 0.0
    %750 = vmatpush.msra.mxu0 0.0
    %751 = vmatpush.msra.mxu0 0.0
    %752 = vmatpush.msra.mxu0 0.0
    %753 = vmatpush.msra.mxu0 0.0
    %754 = vmatpush.msra.mxu0 0.0
    %755 = vmatpush.msra.mxu0 0.0
    %756 = vmatpush.msra.mxu0 0.0
    %757 = vmatpush.msra.mxu0 0.0
    %758 = vmatpush.msra.mxu0 0.0
    %759 = vmatpush.msra.mxu0 %v382
    %760 = vmatpush.msra.mxu0 %v379
    %761 = vmatmul.f32.gmra.mxu0 %v740
    %v762 = vpop.f32.mrf.mxu0
    %v763 = vadd.f32 0.0, %v762
    %764 = vmatmul.f32.gmra.mxu0 %v743
    %v765 = vpop.f32.mrf.mxu0
    %v766 = vadd.f32 0.0, %v765
    %767 = vdwg.mxu0
    %v768 = vsel %vm88, 1, 0
    %vm769 = vcmp.eq.s32.totalorder %v768, 1
    %v770 = vsel %vm769, %v763, 0.0
    %v771 = vsel %vm769, %v766, 0.0
    %v772 = vadd.f32 %v618, %v770
    %v773 = vadd.f32 %v619, %v771
    %v774 = vld [vmem:[#allocation7 + $0x108] sm:$0xff]
    %v775 = vld [vmem:[#allocation7 + $0x118] sm:$0xff]
    %v776 = vld [vmem:[#allocation7 + $0x128] sm:$0xff]
    %v777 = vld [vmem:[#allocation7 + $0x138] sm:$0xff]
    %v778 = vld [vmem:[#allocation7 + $0x148] sm:$0xff]
    %v779 = vld [vmem:[#allocation7 + $0x158] sm:$0xff]
    %v780 = vld [vmem:[#allocation7 + $0x168] sm:$0xff]
    %v781 = vld [vmem:[#allocation7 + $0x178] sm:$0xff]
    %v782 = vld [vmem:[#allocation7 + $0x188] sm:$0xff]
    %v783 = vld [vmem:[#allocation7 + $0x198] sm:$0xff]
    %v784 = vld [vmem:[#allocation7 + $0x1a8] sm:$0xff]
    %v785 = vld [vmem:[#allocation7 + $0x1b8] sm:$0xff]
    %v786 = vld [vmem:[#allocation7 + $0x1c8] sm:$0xff]
    %v787 = vld [vmem:[#allocation7 + $0x1d8] sm:$0xff]
    %v788 = vld [vmem:[#allocation7 + $0x1e8] sm:$0xff]
    %v789 = vld [vmem:[#allocation7 + $0x1f8] sm:$0xff]
    %v790 = vld [vmem:[#allocation8 + $0x1] ss:$0 sm:$0xff]
    %791 = vmatpush.msra.mxu0 %v789
    %792 = vmatpush.msra.mxu0 %v788
    %793 = vmatpush.msra.mxu0 %v787
    %794 = vmatpush.msra.mxu0 %v786
    %795 = vmatpush.msra.mxu0 %v785
    %796 = vmatpush.msra.mxu0 %v784
    %797 = vmatpush.msra.mxu0 %v783
    %798 = vmatpush.msra.mxu0 %v782
    %799 = vmatpush.msra.mxu0 %v781
    %800 = vmatpush.msra.mxu0 %v780
    %801 = vmatpush.msra.mxu0 %v779
    %802 = vmatpush.msra.mxu0 %v778
    %803 = vmatpush.msra.mxu0 %v777
    %804 = vmatpush.msra.mxu0 %v776
    %805 = vmatpush.msra.mxu0 %v775
    %806 = vmatpush.msra.mxu0 %v774
    %807 = vmatmul.f32.gmra.mxu0 %v772
    %v808 = vpop.f32.mrf.mxu0
    %v809 = vadd.f32 %v790, %v808
    %810 = vmatmul.f32.gmra.mxu0 %v773
    %v811 = vpop.f32.mrf.mxu0
    %v812 = vadd.f32 %v790, %v811
    %813 = vdwg.mxu0
    %v814 = vadd.f32 %v251, %v809
    %v815 = vadd.f32 %v251, %v812
    %v816 = vld [vmem:[#allocation8 + $0x5] ss:$0 sm:$0xff]
    %v817 = vld [vmem:[#allocation8 + $0xd] ss:$0 sm:$0xff]
    %818 = vadd.xlane.f32.xlu0 %v814
    %v819 = vpop.xlane.xlu0 %818
    %820 = vadd.xlane.f32.xlu0 %v815
    %v821 = vpop.xlane.xlu0 %820
    %v822 = vrcp.pop 128.0
    %v823 = vmul.f32 128.0, %v822
    %v824 = vsub.f32 1.0, %v823
    %v825 = vmul.f32 %v822, %v824
    %v826 = vadd.f32 %v822, %v825
    %vm827 = vweird.f32 %v822
    %v828 = vsel %vm827, %v822, %v826
    %v829 = vmul.f32 %v819, %v828
    %v830 = vmul.f32 %v821, %v828
    %v831 = vsub.f32 %v814, %v829
    %v832 = vsub.f32 %v815, %v830
    %v833 = vmul.f32 %v831, %v831
    %v834 = vmul.f32 %v832, %v832
    %835 = vadd.xlane.f32.xlu0 %v833
    %v836 = vpop.xlane.xlu0 %835
    %837 = vadd.xlane.f32.xlu0 %v834
    %v838 = vpop.xlane.xlu0 %837
    %v839 = vmul.f32 %v836, %v828
    %v840 = vmul.f32 %v838, %v828
    %v841 = vadd.f32 %v839, 1e-05
    %v842 = vadd.f32 %v840, 1e-05
    %v843 = vrsqrt.pop %v841
    %v844 = vmul.f32 %v843, %v841
    %v845 = vmul.f32 %v844, %v843
    %v846 = vmul.f32 0.5, %v845
    %v847 = vsub.f32 1.5, %v846
    %v848 = vmul.f32 %v843, %v847
    %vm849 = vweird.f32 %v841
    %vm850 = vweird.f32 %v843
    %vm851 = vmor %vm849, %vm850
    %v852 = vsel %vm851, %v843, %v848
    %v853 = vrsqrt.pop %v842
    %v854 = vmul.f32 %v853, %v842
    %v855 = vmul.f32 %v854, %v853
    %v856 = vmul.f32 0.5, %v855
    %v857 = vsub.f32 1.5, %v856
    %v858 = vmul.f32 %v853, %v857
    %vm859 = vweird.f32 %v842
    %vm860 = vweird.f32 %v853
    %vm861 = vmor %vm859, %vm860
    %v862 = vsel %vm861, %v853, %v858
    %v863 = vmul.f32 %v831, %v852
    %v864 = vmul.f32 %v832, %v862
    %v865 = vmul.f32 %v863, %v816
    %v866 = vmul.f32 %v864, %v816
    %v867 = vadd.f32 %v865, %v817
    %v868 = vadd.f32 %v866, %v817
    %v869 = vld [vmem:[#allocation7 + $0x200] sm:$0xff]
    %v870 = vld [vmem:[#allocation7 + $0x210] sm:$0xff]
    %v871 = vld [vmem:[#allocation7 + $0x220] sm:$0xff]
    %v872 = vld [vmem:[#allocation7 + $0x230] sm:$0xff]
    %v873 = vld [vmem:[#allocation7 + $0x240] sm:$0xff]
    %v874 = vld [vmem:[#allocation7 + $0x250] sm:$0xff]
    %v875 = vld [vmem:[#allocation7 + $0x260] sm:$0xff]
    %v876 = vld [vmem:[#allocation7 + $0x270] sm:$0xff]
    %v877 = vld [vmem:[#allocation7 + $0x280] sm:$0xff]
    %v878 = vld [vmem:[#allocation7 + $0x290] sm:$0xff]
    %v879 = vld [vmem:[#allocation7 + $0x2a0] sm:$0xff]
    %v880 = vld [vmem:[#allocation7 + $0x2b0] sm:$0xff]
    %v881 = vld [vmem:[#allocation7 + $0x2c0] sm:$0xff]
    %v882 = vld [vmem:[#allocation7 + $0x2d0] sm:$0xff]
    %v883 = vld [vmem:[#allocation7 + $0x2e0] sm:$0xff]
    %v884 = vld [vmem:[#allocation7 + $0x2f0] sm:$0xff]
    %v885 = vld [vmem:[#allocation8 + $0x9] ss:$0 sm:$0xff]
    %886 = vmatpush.msra.mxu0 %v884
    %887 = vmatpush.msra.mxu0 %v883
    %888 = vmatpush.msra.mxu0 %v882
    %889 = vmatpush.msra.mxu0 %v881
    %890 = vmatpush.msra.mxu0 %v880
    %891 = vmatpush.msra.mxu0 %v879
    %892 = vmatpush.msra.mxu0 %v878
    %893 = vmatpush.msra.mxu0 %v877
    %894 = vmatpush.msra.mxu0 %v876
    %895 = vmatpush.msra.mxu0 %v875
    %896 = vmatpush.msra.mxu0 %v874
    %897 = vmatpush.msra.mxu0 %v873
    %898 = vmatpush.msra.mxu0 %v872
    %899 = vmatpush.msra.mxu0 %v871
    %900 = vmatpush.msra.mxu0 %v870
    %901 = vmatpush.msra.mxu0 %v869
    %902 = vmatmul.f32.gmra.mxu0 %v867
    %v903 = vpop.f32.mrf.mxu0
    %v904 = vadd.f32 %v885, %v903
    %905 = vmatmul.f32.gmra.mxu0 %v868
    %v906 = vpop.f32.mrf.mxu0
    %v907 = vadd.f32 %v885, %v906
    %908 = vdwg.mxu0
    %v909 = vld [vmem:[#allocation7 + $0x208] sm:$0xff]
    %v910 = vld [vmem:[#allocation7 + $0x218] sm:$0xff]
    %v911 = vld [vmem:[#allocation7 + $0x228] sm:$0xff]
    %v912 = vld [vmem:[#allocation7 + $0x238] sm:$0xff]
    %v913 = vld [vmem:[#allocation7 + $0x248] sm:$0xff]
    %v914 = vld [vmem:[#allocation7 + $0x258] sm:$0xff]
    %v915 = vld [vmem:[#allocation7 + $0x268] sm:$0xff]
    %v916 = vld [vmem:[#allocation7 + $0x278] sm:$0xff]
    %v917 = vld [vmem:[#allocation7 + $0x288] sm:$0xff]
    %v918 = vld [vmem:[#allocation7 + $0x298] sm:$0xff]
    %v919 = vld [vmem:[#allocation7 + $0x2a8] sm:$0xff]
    %v920 = vld [vmem:[#allocation7 + $0x2b8] sm:$0xff]
    %v921 = vld [vmem:[#allocation7 + $0x2c8] sm:$0xff]
    %v922 = vld [vmem:[#allocation7 + $0x2d8] sm:$0xff]
    %v923 = vld [vmem:[#allocation7 + $0x2e8] sm:$0xff]
    %v924 = vld [vmem:[#allocation7 + $0x2f8] sm:$0xff]
    %925 = vmatpush.xpose.msra.mxu0 0.0
    %926 = vmatpush.xpose.msra.mxu0 0.0
    %927 = vmatpush.xpose.msra.mxu0 0.0
    %928 = vmatpush.xpose.msra.mxu0 0.0
    %929 = vmatpush.xpose.msra.mxu0 0.0
    %930 = vmatpush.xpose.msra.mxu0 0.0
    %931 = vmatpush.xpose.msra.mxu0 0.0
    %932 = vmatpush.xpose.msra.mxu0 0.0
    %933 = vmatpush.xpose.msra.mxu0 0.0
    %934 = vmatpush.xpose.msra.mxu0 0.0
    %935 = vmatpush.xpose.msra.mxu0 0.0
    %936 = vmatpush.xpose.msra.mxu0 0.0
    %937 = vmatpush.xpose.msra.mxu0 %v298
    %938 = vmatpush.xpose.msra.mxu0 %v295
    %939 = vmatpush.xpose.msra.mxu0 %v292
    %940 = vmatpush.xpose.msra.mxu0 %v289
    %941 = vmatmul.f32.gmra.mxu0 %v909
    %v942 = vpop.f32.mrf.mxu0
    %v943 = vadd.f32 0.0, %v942
    %944 = vmatmul.f32.gmra.mxu0 %v910
    %v945 = vpop.f32.mrf.mxu0
    %v946 = vadd.f32 0.0, %v945
    %947 = vmatmul.f32.gmra.mxu0 %v911
    %v948 = vpop.f32.mrf.mxu0
    %v949 = vadd.f32 0.0, %v948
    %950 = vmatmul.f32.gmra.mxu0 %v912
    %v951 = vpop.f32.mrf.mxu0
    %v952 = vadd.f32 0.0, %v951
    %953 = vmatmul.f32.gmra.mxu0 %v913
    %v954 = vpop.f32.mrf.mxu0
    %v955 = vadd.f32 0.0, %v954
    %956 = vmatmul.f32.gmra.mxu0 %v914
    %v957 = vpop.f32.mrf.mxu0
    %v958 = vadd.f32 0.0, %v957
    %959 = vmatmul.f32.gmra.mxu0 %v915
    %v960 = vpop.f32.mrf.mxu0
    %v961 = vadd.f32 0.0, %v960
    %962 = vmatmul.f32.gmra.mxu0 %v916
    %v963 = vpop.f32.mrf.mxu0
    %v964 = vadd.f32 0.0, %v963
    %965 = vmatmul.f32.gmra.mxu0 %v917
    %v966 = vpop.f32.mrf.mxu0
    %v967 = vadd.f32 0.0, %v966
    %968 = vmatmul.f32.gmra.mxu0 %v918
    %v969 = vpop.f32.mrf.mxu0
    %v970 = vadd.f32 0.0, %v969
    %971 = vmatmul.f32.gmra.mxu0 %v919
    %v972 = vpop.f32.mrf.mxu0
    %v973 = vadd.f32 0.0, %v972
    %974 = vmatmul.f32.gmra.mxu0 %v920
    %v975 = vpop.f32.mrf.mxu0
    %v976 = vadd.f32 0.0, %v975
    %977 = vmatmul.f32.gmra.mxu0 %v921
    %v978 = vpop.f32.mrf.mxu0
    %v979 = vadd.f32 0.0, %v978
    %980 = vmatmul.f32.gmra.mxu0 %v922
    %v981 = vpop.f32.mrf.mxu0
    %v982 = vadd.f32 0.0, %v981
    %983 = vmatmul.f32.gmra.mxu0 %v923
    %v984 = vpop.f32.mrf.mxu0
    %v985 = vadd.f32 0.0, %v984
    %986 = vmatmul.f32.gmra.mxu0 %v924
    %v987 = vpop.f32.mrf.mxu0
    %v988 = vadd.f32 0.0, %v987
    %989 = vdwg.mxu0
    %v990 = vld [vmem:[#allocation7 + $0x300] sm:$0xff]
    %v991 = vld [vmem:[#allocation7 + $0x310] sm:$0xff]
    %v992 = vld [vmem:[#allocation7 + $0x320] sm:$0xff]
    %v993 = vld [vmem:[#allocation7 + $0x330] sm:$0xff]
    %v994 = vld [vmem:[#allocation7 + $0x340] sm:$0xff]
    %v995 = vld [vmem:[#allocation7 + $0x350] sm:$0xff]
    %v996 = vld [vmem:[#allocation7 + $0x360] sm:$0xff]
    %v997 = vld [vmem:[#allocation7 + $0x370] sm:$0xff]
    %v998 = vld [vmem:[#allocation7 + $0x380] sm:$0xff]
    %v999 = vld [vmem:[#allocation7 + $0x390] sm:$0xff]
    %v1000 = vld [vmem:[#allocation7 + $0x3a0] sm:$0xff]
    %v1001 = vld [vmem:[#allocation7 + $0x3b0] sm:$0xff]
    %v1002 = vld [vmem:[#allocation7 + $0x3c0] sm:$0xff]
    %v1003 = vld [vmem:[#allocation7 + $0x3d0] sm:$0xff]
    %v1004 = vld [vmem:[#allocation7 + $0x3e0] sm:$0xff]
    %v1005 = vld [vmem:[#allocation7 + $0x3f0] sm:$0xff]
    %v1006 = vld [vmem:[#allocation8 + $0x2] ss:$0 sm:$0xff]
    %1007 = vmatpush.msra.mxu0 %v1005
    %1008 = vmatpush.msra.mxu0 %v1004
    %1009 = vmatpush.msra.mxu0 %v1003
    %1010 = vmatpush.msra.mxu0 %v1002
    %1011 = vmatpush.msra.mxu0 %v1001
    %1012 = vmatpush.msra.mxu0 %v1000
    %1013 = vmatpush.msra.mxu0 %v999
    %1014 = vmatpush.msra.mxu0 %v998
    %1015 = vmatpush.msra.mxu0 %v997
    %1016 = vmatpush.msra.mxu0 %v996
    %1017 = vmatpush.msra.mxu0 %v995
    %1018 = vmatpush.msra.mxu0 %v994
    %1019 = vmatpush.msra.mxu0 %v993
    %1020 = vmatpush.msra.mxu0 %v992
    %1021 = vmatpush.msra.mxu0 %v991
    %1022 = vmatpush.msra.mxu0 %v990
    %1023 = vmatmul.f32.gmra.mxu0 %v289
    %v1024 = vpop.f32.mrf.mxu0
    %v1025 = vadd.f32 %v1006, %v1024
    %1026 = vmatmul.f32.gmra.mxu0 %v292
    %v1027 = vpop.f32.mrf.mxu0
    %v1028 = vadd.f32 %v1006, %v1027
    %1029 = vmatmul.f32.gmra.mxu0 %v295
    %v1030 = vpop.f32.mrf.mxu0
    %v1031 = vadd.f32 %v1006, %v1030
    %1032 = vmatmul.f32.gmra.mxu0 %v298
    %v1033 = vpop.f32.mrf.mxu0
    %v1034 = vadd.f32 %v1006, %v1033
    %1035 = vdwg.mxu0
    %v1036 = vsel %vm481, %v943, 0.0
    %v1037 = vsel %vm482, %v946, 0.0
    %v1038 = vsel %vm483, %v949, 0.0
    %v1039 = vsel %vm484, %v952, 0.0
    %v1040 = vsel %vm485, %v955, 0.0
    %v1041 = vsel %vm486, %v958, 0.0
    %v1042 = vsel %vm487, %v961, 0.0
    %v1043 = vsel %vm488, %v964, 0.0
    %v1044 = vsel %vm489, %v967, 0.0
    %v1045 = vsel %vm490, %v970, 0.0
    %v1046 = vsel %vm491, %v973, 0.0
    %v1047 = vsel %vm492, %v976, 0.0
    %v1048 = vsel %vm493, %v979, 0.0
    %v1049 = vsel %vm494, %v982, 0.0
    %v1050 = vsel %vm495, %v985, 0.0
    %v1051 = vsel %vm496, %v988, 0.0
    %1052 = vmatpush.msra.mxu0 %v1051
    %1053 = vmatpush.msra.mxu0 %v1050
    %1054 = vmatpush.msra.mxu0 %v1049
    %1055 = vmatpush.msra.mxu0 %v1048
    %1056 = vmatpush.msra.mxu0 %v1047
    %1057 = vmatpush.msra.mxu0 %v1046
    %1058 = vmatpush.msra.mxu0 %v1045
    %1059 = vmatpush.msra.mxu0 %v1044
    %1060 = vmatpush.msra.mxu0 %v1043
    %1061 = vmatpush.msra.mxu0 %v1042
    %1062 = vmatpush.msra.mxu0 %v1041
    %1063 = vmatpush.msra.mxu0 %v1040
    %1064 = vmatpush.msra.mxu0 %v1039
    %1065 = vmatpush.msra.mxu0 %v1038
    %1066 = vmatpush.msra.mxu0 %v1037
    %1067 = vmatpush.msra.mxu0 %v1036
    %1068 = vmatmul.f32.gmra.mxu0 %v904
    %v1069 = vpop.f32.mrf.mxu0
    %v1070 = vadd.f32 %v241, %v1069
    %1071 = vmatmul.f32.gmra.mxu0 %v907
    %v1072 = vpop.f32.mrf.mxu0
    %v1073 = vadd.f32 %v242, %v1072
    %1074 = vdwg.mxu0
    %vm1075 = vcmask 261120
    %v1076 = vsel %vm1075, %v1070, -inf
    %1077 = vmax.xlane.f32.xlu0 %v1076
    %v1078 = vpop.xlane.xlu0 %1077
    %v1079 = vsel %vm1075, %v1073, -inf
    %1080 = vmax.xlane.f32.xlu0 %v1079
    %v1081 = vpop.xlane.xlu0 %1080
    %v1082 = vsub.f32 %v1070, %v1078
    %v1083 = vsub.f32 %v1073, %v1081
    %v1084 = vmul.f32 %v1082, 1.442695
    %v1085 = vpow.pop %v1084
    %v1086 = vmul.f32 %v1083, 1.442695
    %v1087 = vpow.pop %v1086
    %v1088 = vsel %vm1075, %v1085, 0.0
    %1089 = vadd.xlane.f32.xlu0 %v1088
    %v1090 = vpop.xlane.xlu0 %1089
    %v1091 = vsel %vm1075, %v1087, 0.0
    %1092 = vadd.xlane.f32.xlu0 %v1091
    %v1093 = vpop.xlane.xlu0 %1092
    %v1094 = vrcp.pop %v1090
    %v1095 = vmul.f32 %v1090, %v1094
    %v1096 = vsub.f32 1.0, %v1095
    %v1097 = vmul.f32 %v1094, %v1096
    %v1098 = vadd.f32 %v1094, %v1097
    %vm1099 = vweird.f32 %v1090
    %vm1100 = vweird.f32 %v1094
    %vm1101 = vmor %vm1099, %vm1100
    %v1102 = vsel %vm1101, %v1094, %v1098
    %v1103 = vand.u32 2147483647, %v1090
    %vm1104 = vcmp.eq.f32.partialorder %v1103, 8.507059e+37
    %v1105 = vand.u32 %v1090, 2147483648
    %v1106 = vor.u32 1.1754944e-38, %v1105
    %v1107 = vsel %vm1104, %v1106, %v1102
    %v1108 = vmul.f32 %v1085, %v1107
    %v1109 = vrcp.pop %v1093
    %v1110 = vmul.f32 %v1093, %v1109
    %v1111 = vsub.f32 1.0, %v1110
    %v1112 = vmul.f32 %v1109, %v1111
    %v1113 = vadd.f32 %v1109, %v1112
    %vm1114 = vweird.f32 %v1093
    %vm1115 = vweird.f32 %v1109
    %vm1116 = vmor %vm1114, %vm1115
    %v1117 = vsel %vm1116, %v1109, %v1113
    %v1118 = vand.u32 2147483647, %v1093
    %vm1119 = vcmp.eq.f32.partialorder %v1118, 8.507059e+37
    %v1120 = vand.u32 %v1093, 2147483648
    %v1121 = vor.u32 1.1754944e-38, %v1120
    %v1122 = vsel %vm1119, %v1121, %v1117
    %v1123 = vmul.f32 %v1087, %v1122
    %v1125 = vsel %vm1075, %v1108, 0
    %v1128 = vsel %vm1075, %v1123, 0
    %1130 = vmatpush.msra.mxu0 0.0
    %1131 = vmatpush.msra.mxu0 0.0
    %1132 = vmatpush.msra.mxu0 0.0
    %1133 = vmatpush.msra.mxu0 0.0
    %1134 = vmatpush.msra.mxu0 0.0
    %1135 = vmatpush.msra.mxu0 0.0
    %1136 = vmatpush.msra.mxu0 0.0
    %1137 = vmatpush.msra.mxu0 0.0
    %1138 = vmatpush.msra.mxu0 0.0
    %1139 = vmatpush.msra.mxu0 0.0
    %1140 = vmatpush.msra.mxu0 0.0
    %1141 = vmatpush.msra.mxu0 0.0
    %1142 = vmatpush.msra.mxu0 %v1034
    %1143 = vmatpush.msra.mxu0 %v1031
    %1144 = vmatpush.msra.mxu0 %v1028
    %1145 = vmatpush.msra.mxu0 %v1025
    %1146 = vmatmul.f32.gmra.mxu0 %v1125
    %v1147 = vpop.f32.mrf.mxu0
    %v1148 = vadd.f32 0.0, %v1147
    %1149 = vmatmul.f32.gmra.mxu0 %v1128
    %v1150 = vpop.f32.mrf.mxu0
    %v1151 = vadd.f32 0.0, %v1150
    %1152 = vdwg.mxu0
    %v1153 = vsel %vm615, %v1148, 0.0
    %v1154 = vsel %vm615, %v1151, 0.0
    %v1155 = vadd.f32 %v1153, 0.0
    %v1156 = vadd.f32 %v1154, 0.0
    %v1157 = vsel %vm636, %v943, 0.0
    %v1158 = vsel %vm637, %v946, 0.0
    %v1159 = vsel %vm638, %v949, 0.0
    %v1160 = vsel %vm639, %v952, 0.0
    %v1161 = vsel %vm640, %v955, 0.0
    %v1162 = vsel %vm641, %v958, 0.0
    %v1163 = vsel %vm642, %v961, 0.0
    %v1164 = vsel %vm643, %v964, 0.0
    %v1165 = vsel %vm644, %v967, 0.0
    %v1166 = vsel %vm645, %v970, 0.0
    %v1167 = vsel %vm646, %v973, 0.0
    %v1168 = vsel %vm647, %v976, 0.0
    %v1169 = vsel %vm648, %v979, 0.0
    %v1170 = vsel %vm649, %v982, 0.0
    %v1171 = vsel %vm650, %v985, 0.0
    %v1172 = vsel %vm651, %v988, 0.0
    %1173 = vmatpush.msra.mxu0 %v1172
    %1174 = vmatpush.msra.mxu0 %v1171
    %1175 = vmatpush.msra.mxu0 %v1170
    %1176 = vmatpush.msra.mxu0 %v1169
    %1177 = vmatpush.msra.mxu0 %v1168
    %1178 = vmatpush.msra.mxu0 %v1167
    %1179 = vmatpush.msra.mxu0 %v1166
    %1180 = vmatpush.msra.mxu0 %v1165
    %1181 = vmatpush.msra.mxu0 %v1164
    %1182 = vmatpush.msra.mxu0 %v1163
    %1183 = vmatpush.msra.mxu0 %v1162
    %1184 = vmatpush.msra.mxu0 %v1161
    %1185 = vmatpush.msra.mxu0 %v1160
    %1186 = vmatpush.msra.mxu0 %v1159
    %1187 = vmatpush.msra.mxu0 %v1158
    %1188 = vmatpush.msra.mxu0 %v1157
    %1189 = vmatmul.f32.gmra.mxu0 %v904
    %v1190 = vpop.f32.mrf.mxu0
    %v1191 = vadd.f32 %v241, %v1190
    %1192 = vmatmul.f32.gmra.mxu0 %v907
    %v1193 = vpop.f32.mrf.mxu0
    %v1194 = vadd.f32 %v242, %v1193
    %1195 = vdwg.mxu0
    %v1196 = vsel %vm1075, %v1191, -inf
    %1197 = vmax.xlane.f32.xlu0 %v1196
    %v1198 = vpop.xlane.xlu0 %1197
    %v1199 = vsel %vm1075, %v1194, -inf
    %1200 = vmax.xlane.f32.xlu0 %v1199
    %v1201 = vpop.xlane.xlu0 %1200
    %v1202 = vsub.f32 %v1191, %v1198
    %v1203 = vsub.f32 %v1194, %v1201
    %v1204 = vmul.f32 %v1202, 1.442695
    %v1205 = vpow.pop %v1204
    %v1206 = vmul.f32 %v1203, 1.442695
    %v1207 = vpow.pop %v1206
    %v1208 = vsel %vm1075, %v1205, 0.0
    %1209 = vadd.xlane.f32.xlu0 %v1208
    %v1210 = vpop.xlane.xlu0 %1209
    %v1211 = vsel %vm1075, %v1207, 0.0
    %1212 = vadd.xlane.f32.xlu0 %v1211
    %v1213 = vpop.xlane.xlu0 %1212
    %v1214 = vrcp.pop %v1210
    %v1215 = vmul.f32 %v1210, %v1214
    %v1216 = vsub.f32 1.0, %v1215
    %v1217 = vmul.f32 %v1214, %v1216
    %v1218 = vadd.f32 %v1214, %v1217
    %vm1219 = vweird.f32 %v1210
    %vm1220 = vweird.f32 %v1214
    %vm1221 = vmor %vm1219, %vm1220
    %v1222 = vsel %vm1221, %v1214, %v1218
    %v1223 = vand.u32 2147483647, %v1210
    %vm1224 = vcmp.eq.f32.partialorder %v1223, 8.507059e+37
    %v1225 = vand.u32 %v1210, 2147483648
    %v1226 = vor.u32 1.1754944e-38, %v1225
    %v1227 = vsel %vm1224, %v1226, %v1222
    %v1228 = vmul.f32 %v1205, %v1227
    %v1229 = vrcp.pop %v1213
    %v1230 = vmul.f32 %v1213, %v1229
    %v1231 = vsub.f32 1.0, %v1230
    %v1232 = vmul.f32 %v1229, %v1231
    %v1233 = vadd.f32 %v1229, %v1232
    %vm1234 = vweird.f32 %v1213
    %vm1235 = vweird.f32 %v1229
    %vm1236 = vmor %vm1234, %vm1235
    %v1237 = vsel %vm1236, %v1229, %v1233
    %v1238 = vand.u32 2147483647, %v1213
    %vm1239 = vcmp.eq.f32.partialorder %v1238, 8.507059e+37
    %v1240 = vand.u32 %v1213, 2147483648
    %v1241 = vor.u32 1.1754944e-38, %v1240
    %v1242 = vsel %vm1239, %v1241, %v1237
    %v1243 = vmul.f32 %v1207, %v1242
    %v1245 = vsel %vm1075, %v1228, 0
    %v1248 = vsel %vm1075, %v1243, 0
    %1250 = vmatpush.msra.mxu0 0.0
    %1251 = vmatpush.msra.mxu0 0.0
    %1252 = vmatpush.msra.mxu0 0.0
    %1253 = vmatpush.msra.mxu0 0.0
    %1254 = vmatpush.msra.mxu0 0.0
    %1255 = vmatpush.msra.mxu0 0.0
    %1256 = vmatpush.msra.mxu0 0.0
    %1257 = vmatpush.msra.mxu0 0.0
    %1258 = vmatpush.msra.mxu0 0.0
    %1259 = vmatpush.msra.mxu0 0.0
    %1260 = vmatpush.msra.mxu0 0.0
    %1261 = vmatpush.msra.mxu0 0.0
    %1262 = vmatpush.msra.mxu0 %v1034
    %1263 = vmatpush.msra.mxu0 %v1031
    %1264 = vmatpush.msra.mxu0 %v1028
    %1265 = vmatpush.msra.mxu0 %v1025
    %1266 = vmatmul.f32.gmra.mxu0 %v1245
    %v1267 = vpop.f32.mrf.mxu0
    %v1268 = vadd.f32 0.0, %v1267
    %1269 = vmatmul.f32.gmra.mxu0 %v1248
    %v1270 = vpop.f32.mrf.mxu0
    %v1271 = vadd.f32 0.0, %v1270
    %1272 = vdwg.mxu0
    %v1273 = vsel %vm769, %v1268, 0.0
    %v1274 = vsel %vm769, %v1271, 0.0
    %v1275 = vadd.f32 %v1155, %v1273
    %v1276 = vadd.f32 %v1156, %v1274
    %v1277 = vld [vmem:[#allocation7 + $0x308] sm:$0xff]
    %v1278 = vld [vmem:[#allocation7 + $0x318] sm:$0xff]
    %v1279 = vld [vmem:[#allocation7 + $0x328] sm:$0xff]
    %v1280 = vld [vmem:[#allocation7 + $0x338] sm:$0xff]
    %v1281 = vld [vmem:[#allocation7 + $0x348] sm:$0xff]
    %v1282 = vld [vmem:[#allocation7 + $0x358] sm:$0xff]
    %v1283 = vld [vmem:[#allocation7 + $0x368] sm:$0xff]
    %v1284 = vld [vmem:[#allocation7 + $0x378] sm:$0xff]
    %v1285 = vld [vmem:[#allocation7 + $0x388] sm:$0xff]
    %v1286 = vld [vmem:[#allocation7 + $0x398] sm:$0xff]
    %v1287 = vld [vmem:[#allocation7 + $0x3a8] sm:$0xff]
    %v1288 = vld [vmem:[#allocation7 + $0x3b8] sm:$0xff]
    %v1289 = vld [vmem:[#allocation7 + $0x3c8] sm:$0xff]
    %v1290 = vld [vmem:[#allocation7 + $0x3d8] sm:$0xff]
    %v1291 = vld [vmem:[#allocation7 + $0x3e8] sm:$0xff]
    %v1292 = vld [vmem:[#allocation7 + $0x3f8] sm:$0xff]
    %v1293 = vld [vmem:[#allocation8 + $0xa] ss:$0 sm:$0xff]
    %1294 = vmatpush.msra.mxu0 %v1292
    %1295 = vmatpush.msra.mxu0 %v1291
    %1296 = vmatpush.msra.mxu0 %v1290
    %1297 = vmatpush.msra.mxu0 %v1289
    %1298 = vmatpush.msra.mxu0 %v1288
    %1299 = vmatpush.msra.mxu0 %v1287
    %1300 = vmatpush.msra.mxu0 %v1286
    %1301 = vmatpush.msra.mxu0 %v1285
    %1302 = vmatpush.msra.mxu0 %v1284
    %1303 = vmatpush.msra.mxu0 %v1283
    %1304 = vmatpush.msra.mxu0 %v1282
    %1305 = vmatpush.msra.mxu0 %v1281
    %1306 = vmatpush.msra.mxu0 %v1280
    %1307 = vmatpush.msra.mxu0 %v1279
    %1308 = vmatpush.msra.mxu0 %v1278
    %1309 = vmatpush.msra.mxu0 %v1277
    %1310 = vmatmul.f32.gmra.mxu0 %v1275
    %v1311 = vpop.f32.mrf.mxu0
    %v1312 = vadd.f32 %v1293, %v1311
    %1313 = vmatmul.f32.gmra.mxu0 %v1276
    %v1314 = vpop.f32.mrf.mxu0
    %v1315 = vadd.f32 %v1293, %v1314
    %1316 = vdwg.mxu0
    %v1317 = vadd.f32 %v867, %v1312
    %v1318 = vadd.f32 %v868, %v1315
    %v1319 = vld [vmem:[#allocation8 + $0x6] ss:$0 sm:$0xff]
    %v1320 = vld [vmem:[#allocation8 + $0xe] ss:$0 sm:$0xff]
    %1321 = vadd.xlane.f32.xlu0 %v1317
    %v1322 = vpop.xlane.xlu0 %1321
    %1323 = vadd.xlane.f32.xlu0 %v1318
    %v1324 = vpop.xlane.xlu0 %1323
    %v1325 = vmul.f32 %v1322, %v828
    %v1326 = vmul.f32 %v1324, %v828
    %v1327 = vsub.f32 %v1317, %v1325
    %v1328 = vsub.f32 %v1318, %v1326
    %v1329 = vmul.f32 %v1327, %v1327
    %v1330 = vmul.f32 %v1328, %v1328
    %1331 = vadd.xlane.f32.xlu0 %v1329
    %v1332 = vpop.xlane.xlu0 %1331
    %1333 = vadd.xlane.f32.xlu0 %v1330
    %v1334 = vpop.xlane.xlu0 %1333
    %v1335 = vmul.f32 %v1332, %v828
    %v1336 = vmul.f32 %v1334, %v828
    %v1337 = vadd.f32 %v1335, 1e-05
    %v1338 = vadd.f32 %v1336, 1e-05
    %v1339 = vrsqrt.pop %v1337
    %v1340 = vmul.f32 %v1339, %v1337
    %v1341 = vmul.f32 %v1340, %v1339
    %v1342 = vmul.f32 0.5, %v1341
    %v1343 = vsub.f32 1.5, %v1342
    %v1344 = vmul.f32 %v1339, %v1343
    %vm1345 = vweird.f32 %v1337
    %vm1346 = vweird.f32 %v1339
    %vm1347 = vmor %vm1345, %vm1346
    %v1348 = vsel %vm1347, %v1339, %v1344
    %v1349 = vrsqrt.pop %v1338
    %v1350 = vmul.f32 %v1349, %v1338
    %v1351 = vmul.f32 %v1350, %v1349
    %v1352 = vmul.f32 0.5, %v1351
    %v1353 = vsub.f32 1.5, %v1352
    %v1354 = vmul.f32 %v1349, %v1353
    %vm1355 = vweird.f32 %v1338
    %vm1356 = vweird.f32 %v1349
    %vm1357 = vmor %vm1355, %vm1356
    %v1358 = vsel %vm1357, %v1349, %v1354
    %v1359 = vmul.f32 %v1327, %v1348
    %v1360 = vmul.f32 %v1328, %v1358
    %v1361 = vmul.f32 %v1359, %v1319
    %v1362 = vmul.f32 %v1360, %v1319
    %v1363 = vadd.f32 %v1361, %v1320
    %v1364 = vadd.f32 %v1362, %v1320
    %v1365 = vld [vmem:[#allocation7 + $0x400] sm:$0xff]
    %v1366 = vld [vmem:[#allocation7 + $0x408] sm:$0xff]
    %v1367 = vld [vmem:[#allocation7 + $0x410] sm:$0xff]
    %v1368 = vld [vmem:[#allocation7 + $0x418] sm:$0xff]
    %v1369 = vld [vmem:[#allocation7 + $0x420] sm:$0xff]
    %v1370 = vld [vmem:[#allocation7 + $0x428] sm:$0xff]
    %v1371 = vld [vmem:[#allocation7 + $0x430] sm:$0xff]
    %v1372 = vld [vmem:[#allocation7 + $0x438] sm:$0xff]
    %v1373 = vld [vmem:[#allocation7 + $0x440] sm:$0xff]
    %v1374 = vld [vmem:[#allocation7 + $0x448] sm:$0xff]
    %v1375 = vld [vmem:[#allocation7 + $0x450] sm:$0xff]
    %v1376 = vld [vmem:[#allocation7 + $0x458] sm:$0xff]
    %v1377 = vld [vmem:[#allocation7 + $0x460] sm:$0xff]
    %v1378 = vld [vmem:[#allocation7 + $0x468] sm:$0xff]
    %v1379 = vld [vmem:[#allocation7 + $0x470] sm:$0xff]
    %v1380 = vld [vmem:[#allocation7 + $0x478] sm:$0xff]
    %v1381 = vld [vmem:[#allocation7 + $0x480] sm:$0xff]
    %v1382 = vld [vmem:[#allocation7 + $0x488] sm:$0xff]
    %v1383 = vld [vmem:[#allocation7 + $0x490] sm:$0xff]
    %v1384 = vld [vmem:[#allocation7 + $0x498] sm:$0xff]
    %v1385 = vld [vmem:[#allocation7 + $0x4a0] sm:$0xff]
    %v1386 = vld [vmem:[#allocation7 + $0x4a8] sm:$0xff]
    %v1387 = vld [vmem:[#allocation7 + $0x4b0] sm:$0xff]
    %v1388 = vld [vmem:[#allocation7 + $0x4b8] sm:$0xff]
    %v1389 = vld [vmem:[#allocation7 + $0x4c0] sm:$0xff]
    %v1390 = vld [vmem:[#allocation7 + $0x4c8] sm:$0xff]
    %v1391 = vld [vmem:[#allocation7 + $0x4d0] sm:$0xff]
    %v1392 = vld [vmem:[#allocation7 + $0x4d8] sm:$0xff]
    %v1393 = vld [vmem:[#allocation7 + $0x4e0] sm:$0xff]
    %v1394 = vld [vmem:[#allocation7 + $0x4e8] sm:$0xff]
    %v1395 = vld [vmem:[#allocation7 + $0x4f0] sm:$0xff]
    %v1396 = vld [vmem:[#allocation7 + $0x4f8] sm:$0xff]
    %s1397 = scalar_lea.vmem [#allocation8], 3
    %v1398 = vld [vmem:[%s1397] ss:$8 sm:$0x3]
    %v1400 = vperm.slane %v1398, 0
    %v1401 = vperm.slane %v1398, 1
    %1404 = vmatpush.msra.mxu0 %v1395
    %1405 = vmatpush.msra.mxu0 %v1393
    %1406 = vmatpush.msra.mxu0 %v1391
    %1407 = vmatpush.msra.mxu0 %v1389
    %1408 = vmatpush.msra.mxu0 %v1387
    %1409 = vmatpush.msra.mxu0 %v1385
    %1410 = vmatpush.msra.mxu0 %v1383
    %1411 = vmatpush.msra.mxu0 %v1381
    %1412 = vmatpush.msra.mxu0 %v1379
    %1413 = vmatpush.msra.mxu0 %v1377
    %1414 = vmatpush.msra.mxu0 %v1375
    %1415 = vmatpush.msra.mxu0 %v1373
    %1416 = vmatpush.msra.mxu0 %v1371
    %1417 = vmatpush.msra.mxu0 %v1369
    %1418 = vmatpush.msra.mxu0 %v1367
    %1419 = vmatpush.msra.mxu0 %v1365
    %1420 = vmatmul.f32.gmra.mxu0 %v1363
    %v1421 = vpop.f32.mrf.mxu0
    %v1422 = vadd.f32 %v1400, %v1421
    %1423 = vmatmul.f32.gmra.mxu0 %v1364
    %v1424 = vpop.f32.mrf.mxu0
    %v1425 = vadd.f32 %v1400, %v1424
    %1426 = vdwg.mxu0
    %1427 = vmatpush.msra.mxu0 %v1396
    %1428 = vmatpush.msra.mxu0 %v1394
    %1429 = vmatpush.msra.mxu0 %v1392
    %1430 = vmatpush.msra.mxu0 %v1390
    %1431 = vmatpush.msra.mxu0 %v1388
    %1432 = vmatpush.msra.mxu0 %v1386
    %1433 = vmatpush.msra.mxu0 %v1384
    %1434 = vmatpush.msra.mxu0 %v1382
    %1435 = vmatpush.msra.mxu0 %v1380
    %1436 = vmatpush.msra.mxu0 %v1378
    %1437 = vmatpush.msra.mxu0 %v1376
    %1438 = vmatpush.msra.mxu0 %v1374
    %1439 = vmatpush.msra.mxu0 %v1372
    %1440 = vmatpush.msra.mxu0 %v1370
    %1441 = vmatpush.msra.mxu0 %v1368
    %1442 = vmatpush.msra.mxu0 %v1366
    %1443 = vmatmul.f32.gmra.mxu0 %v1363
    %v1444 = vpop.f32.mrf.mxu0
    %v1445 = vadd.f32 %v1401, %v1444
    %1446 = vmatmul.f32.gmra.mxu0 %v1364
    %v1447 = vpop.f32.mrf.mxu0
    %v1448 = vadd.f32 %v1401, %v1447
    %1449 = vdwg.mxu0
    %v1450 = vmax.f32 %v1422, 0.0
    %v1451 = vmax.f32 %v1445, 0.0
    %v1452 = vmax.f32 %v1425, 0.0
    %v1453 = vmax.f32 %v1448, 0.0
    %v1454 = vld [vmem:[#allocation7 + $0x500] sm:$0xff]
    %v1455 = vld [vmem:[#allocation7 + $0x510] sm:$0xff]
    %v1456 = vld [vmem:[#allocation7 + $0x520] sm:$0xff]
    %v1457 = vld [vmem:[#allocation7 + $0x530] sm:$0xff]
    %v1458 = vld [vmem:[#allocation7 + $0x540] sm:$0xff]
    %v1459 = vld [vmem:[#allocation7 + $0x550] sm:$0xff]
    %v1460 = vld [vmem:[#allocation7 + $0x560] sm:$0xff]
    %v1461 = vld [vmem:[#allocation7 + $0x570] sm:$0xff]
    %v1462 = vld [vmem:[#allocation7 + $0x580] sm:$0xff]
    %v1463 = vld [vmem:[#allocation7 + $0x590] sm:$0xff]
    %v1464 = vld [vmem:[#allocation7 + $0x5a0] sm:$0xff]
    %v1465 = vld [vmem:[#allocation7 + $0x5b0] sm:$0xff]
    %v1466 = vld [vmem:[#allocation7 + $0x5c0] sm:$0xff]
    %v1467 = vld [vmem:[#allocation7 + $0x5d0] sm:$0xff]
    %v1468 = vld [vmem:[#allocation7 + $0x5e0] sm:$0xff]
    %v1469 = vld [vmem:[#allocation7 + $0x5f0] sm:$0xff]
    %v1470 = vld [vmem:[#allocation7 + $0x600] sm:$0xff]
    %v1471 = vld [vmem:[#allocation7 + $0x610] sm:$0xff]
    %v1472 = vld [vmem:[#allocation7 + $0x620] sm:$0xff]
    %v1473 = vld [vmem:[#allocation7 + $0x630] sm:$0xff]
    %v1474 = vld [vmem:[#allocation7 + $0x640] sm:$0xff]
    %v1475 = vld [vmem:[#allocation7 + $0x650] sm:$0xff]
    %v1476 = vld [vmem:[#allocation7 + $0x660] sm:$0xff]
    %v1477 = vld [vmem:[#allocation7 + $0x670] sm:$0xff]
    %v1478 = vld [vmem:[#allocation7 + $0x680] sm:$0xff]
    %v1479 = vld [vmem:[#allocation7 + $0x690] sm:$0xff]
    %v1480 = vld [vmem:[#allocation7 + $0x6a0] sm:$0xff]
    %v1481 = vld [vmem:[#allocation7 + $0x6b0] sm:$0xff]
    %v1482 = vld [vmem:[#allocation7 + $0x6c0] sm:$0xff]
    %v1483 = vld [vmem:[#allocation7 + $0x6d0] sm:$0xff]
    %v1484 = vld [vmem:[#allocation7 + $0x6e0] sm:$0xff]
    %v1485 = vld [vmem:[#allocation7 + $0x6f0] sm:$0xff]
    %v1486 = vld [vmem:[#allocation8 + $0x4] ss:$0 sm:$0xff]
    %1487 = vmatpush.msra.mxu0 %v1469
    %1488 = vmatpush.msra.mxu0 %v1468
    %1489 = vmatpush.msra.mxu0 %v1467
    %1490 = vmatpush.msra.mxu0 %v1466
    %1491 = vmatpush.msra.mxu0 %v1465
    %1492 = vmatpush.msra.mxu0 %v1464
    %1493 = vmatpush.msra.mxu0 %v1463
    %1494 = vmatpush.msra.mxu0 %v1462
    %1495 = vmatpush.msra.mxu0 %v1461
    %1496 = vmatpush.msra.mxu0 %v1460
    %1497 = vmatpush.msra.mxu0 %v1459
    %1498 = vmatpush.msra.mxu0 %v1458
    %1499 = vmatpush.msra.mxu0 %v1457
    %1500 = vmatpush.msra.mxu0 %v1456
    %1501 = vmatpush.msra.mxu0 %v1455
    %1502 = vmatpush.msra.mxu0 %v1454
    %1503 = vmatmul.f32.gmra.mxu0 %v1450
    %v1504 = vpop.f32.mrf.mxu0
    %v1505 = vadd.f32 %v1486, %v1504
    %1506 = vmatmul.f32.gmra.mxu0 %v1452
    %v1507 = vpop.f32.mrf.mxu0
    %v1508 = vadd.f32 %v1486, %v1507
    %1509 = vdwg.mxu0
    %1510 = vmatpush.msra.mxu0 %v1485
    %1511 = vmatpush.msra.mxu0 %v1484
    %1512 = vmatpush.msra.mxu0 %v1483
    %1513 = vmatpush.msra.mxu0 %v1482
    %1514 = vmatpush.msra.mxu0 %v1481
    %1515 = vmatpush.msra.mxu0 %v1480
    %1516 = vmatpush.msra.mxu0 %v1479
    %1517 = vmatpush.msra.mxu0 %v1478
    %1518 = vmatpush.msra.mxu0 %v1477
    %1519 = vmatpush.msra.mxu0 %v1476
    %1520 = vmatpush.msra.mxu0 %v1475
    %1521 = vmatpush.msra.mxu0 %v1474
    %1522 = vmatpush.msra.mxu0 %v1473
    %1523 = vmatpush.msra.mxu0 %v1472
    %1524 = vmatpush.msra.mxu0 %v1471
    %1525 = vmatpush.msra.mxu0 %v1470
    %1526 = vmatmul.f32.gmra.mxu0 %v1451
    %v1527 = vpop.f32.mrf.mxu0
    %v1528 = vadd.f32 %v1505, %v1527
    %1529 = vmatmul.f32.gmra.mxu0 %v1453
    %v1530 = vpop.f32.mrf.mxu0
    %v1531 = vadd.f32 %v1508, %v1530
    %1532 = vdwg.mxu0
    %v1533 = vadd.f32 %v1363, %v1528
    %v1534 = vadd.f32 %v1364, %v1531
    %v1535 = vld [vmem:[#allocation8 + $0x7] ss:$0 sm:$0xff]
    %v1536 = vld [vmem:[#allocation8 + $0xf] ss:$0 sm:$0xff]
    %1537 = vadd.xlane.f32.xlu0 %v1533
    %v1538 = vpop.xlane.xlu0 %1537
    %1539 = vadd.xlane.f32.xlu0 %v1534
    %v1540 = vpop.xlane.xlu0 %1539
    %v1541 = vmul.f32 %v1538, %v828
    %v1542 = vmul.f32 %v1540, %v828
    %v1543 = vsub.f32 %v1533, %v1541
    %v1544 = vsub.f32 %v1534, %v1542
    %v1545 = vmul.f32 %v1543, %v1543
    %v1546 = vmul.f32 %v1544, %v1544
    %1547 = vadd.xlane.f32.xlu0 %v1545
    %v1548 = vpop.xlane.xlu0 %1547
    %1549 = vadd.xlane.f32.xlu0 %v1546
    %v1550 = vpop.xlane.xlu0 %1549
    %v1551 = vmul.f32 %v1548, %v828
    %v1552 = vmul.f32 %v1550, %v828
    %v1553 = vadd.f32 %v1551, 1e-05
    %v1554 = vadd.f32 %v1552, 1e-05
    %v1555 = vrsqrt.pop %v1553
    %v1556 = vmul.f32 %v1555, %v1553
    %v1557 = vmul.f32 %v1556, %v1555
    %v1558 = vmul.f32 0.5, %v1557
    %v1559 = vsub.f32 1.5, %v1558
    %v1560 = vmul.f32 %v1555, %v1559
    %vm1561 = vweird.f32 %v1553
    %vm1562 = vweird.f32 %v1555
    %vm1563 = vmor %vm1561, %vm1562
    %v1564 = vsel %vm1563, %v1555, %v1560
    %v1565 = vrsqrt.pop %v1554
    %v1566 = vmul.f32 %v1565, %v1554
    %v1567 = vmul.f32 %v1566, %v1565
    %v1568 = vmul.f32 0.5, %v1567
    %v1569 = vsub.f32 1.5, %v1568
    %v1570 = vmul.f32 %v1565, %v1569
    %vm1571 = vweird.f32 %v1554
    %vm1572 = vweird.f32 %v1565
    %vm1573 = vmor %vm1571, %vm1572
    %v1574 = vsel %vm1573, %v1565, %v1570
    %v1575 = vmul.f32 %v1543, %v1564
    %v1576 = vmul.f32 %v1544, %v1574
    %v1577 = vmul.f32 %v1575, %v1535
    %v1578 = vmul.f32 %v1576, %v1535
    %v1579 = vadd.f32 %v1577, %v1536
    %v1580 = vadd.f32 %v1578, %v1536
    %s1581 = scalar_lea.vmem [#allocation7], 1792
    %v1582 = vld [vmem:[%s1581] sm:$0xff]
    %v1583 = vld [vmem:[%s1581 + $0x8] sm:$0xff]
    %v1584 = vld [vmem:[%s1581 + $0x10] sm:$0xff]
    %v1585 = vld [vmem:[%s1581 + $0x18] sm:$0xff]
    %v1586 = vld [vmem:[%s1581 + $0x20] sm:$0xff]
    %v1587 = vld [vmem:[%s1581 + $0x28] sm:$0xff]
    %v1588 = vld [vmem:[%s1581 + $0x30] sm:$0xff]
    %v1589 = vld [vmem:[%s1581 + $0x38] sm:$0xff]
    %v1590 = vld [vmem:[%s1581 + $0x40] sm:$0xff]
    %v1591 = vld [vmem:[%s1581 + $0x48] sm:$0xff]
    %v1592 = vld [vmem:[%s1581 + $0x50] sm:$0xff]
    %v1593 = vld [vmem:[%s1581 + $0x58] sm:$0xff]
    %v1594 = vld [vmem:[%s1581 + $0x60] sm:$0xff]
    %v1595 = vld [vmem:[%s1581 + $0x68] sm:$0xff]
    %v1596 = vld [vmem:[%s1581 + $0x70] sm:$0xff]
    %v1597 = vld [vmem:[%s1581 + $0x78] sm:$0xff]
    %v1598 = vld [vmem:[%s1581 + $0x80] sm:$0xff]
    %v1599 = vld [vmem:[%s1581 + $0x88] sm:$0xff]
    %v1600 = vld [vmem:[%s1581 + $0x90] sm:$0xff]
    %v1601 = vld [vmem:[%s1581 + $0x98] sm:$0xff]
    %v1602 = vld [vmem:[%s1581 + $0xa0] sm:$0xff]
    %v1603 = vld [vmem:[%s1581 + $0xa8] sm:$0xff]
    %v1604 = vld [vmem:[%s1581 + $0xb0] sm:$0xff]
    %v1605 = vld [vmem:[%s1581 + $0xb8] sm:$0xff]
    %v1606 = vld [vmem:[%s1581 + $0xc0] sm:$0xff]
    %v1607 = vld [vmem:[%s1581 + $0xc8] sm:$0xff]
    %v1608 = vld [vmem:[%s1581 + $0xd0] sm:$0xff]
    %v1609 = vld [vmem:[%s1581 + $0xd8] sm:$0xff]
    %v1610 = vld [vmem:[%s1581 + $0xe0] sm:$0xff]
    %v1611 = vld [vmem:[%s1581 + $0xe8] sm:$0xff]
    %v1612 = vld [vmem:[%s1581 + $0xf0] sm:$0xff]
    %v1613 = vld [vmem:[%s1581 + $0xf8] sm:$0xff]
    %s1614 = scalar_lea.vmem [#allocation8], 16
    %v1615 = vld [vmem:[%s1614] ss:$8 sm:$0x3]
    %v1617 = vperm.slane %v1615, 0
    %v1618 = vperm.slane %v1615, 1
    %1621 = vmatpush.msra.mxu0 %v1612
    %1622 = vmatpush.msra.mxu0 %v1610
    %1623 = vmatpush.msra.mxu0 %v1608
    %1624 = vmatpush.msra.mxu0 %v1606
    %1625 = vmatpush.msra.mxu0 %v1604
    %1626 = vmatpush.msra.mxu0 %v1602
    %1627 = vmatpush.msra.mxu0 %v1600
    %1628 = vmatpush.msra.mxu0 %v1598
    %1629 = vmatpush.msra.mxu0 %v1596
    %1630 = vmatpush.msra.mxu0 %v1594
    %1631 = vmatpush.msra.mxu0 %v1592
    %1632 = vmatpush.msra.mxu0 %v1590
    %1633 = vmatpush.msra.mxu0 %v1588
    %1634 = vmatpush.msra.mxu0 %v1586
    %1635 = vmatpush.msra.mxu0 %v1584
    %1636 = vmatpush.msra.mxu0 %v1582
    %1637 = vmatmul.f32.gmra.mxu0 %v1579
    %v1638 = vpop.f32.mrf.mxu0
    %v1639 = vadd.f32 %v1617, %v1638
    %1640 = vmatmul.f32.gmra.mxu0 %v1580
    %v1641 = vpop.f32.mrf.mxu0
    %v1642 = vadd.f32 %v1617, %v1641
    %1643 = vdwg.mxu0
    %1644 = vmatpush.msra.mxu0 %v1613
    %1645 = vmatpush.msra.mxu0 %v1611
    %1646 = vmatpush.msra.mxu0 %v1609
    %1647 = vmatpush.msra.mxu0 %v1607
    %1648 = vmatpush.msra.mxu0 %v1605
    %1649 = vmatpush.msra.mxu0 %v1603
    %1650 = vmatpush.msra.mxu0 %v1601
    %1651 = vmatpush.msra.mxu0 %v1599
    %1652 = vmatpush.msra.mxu0 %v1597
    %1653 = vmatpush.msra.mxu0 %v1595
    %1654 = vmatpush.msra.mxu0 %v1593
    %1655 = vmatpush.msra.mxu0 %v1591
    %1656 = vmatpush.msra.mxu0 %v1589
    %1657 = vmatpush.msra.mxu0 %v1587
    %1658 = vmatpush.msra.mxu0 %v1585
    %1659 = vmatpush.msra.mxu0 %v1583
    %1660 = vmatmul.f32.gmra.mxu0 %v1579
    %v1661 = vpop.f32.mrf.mxu0
    %v1662 = vadd.f32 %v1618, %v1661
    %1663 = vmatmul.f32.gmra.mxu0 %v1580
    %v1664 = vpop.f32.mrf.mxu0
    %v1665 = vadd.f32 %v1618, %v1664
    %1666 = vdwg.mxu0
    %v1667 = vld [vmem:[%s1581 + $0x100] sm:$0xff]
    %v1668 = vld [vmem:[%s1581 + $0x110] sm:$0xff]
    %v1669 = vld [vmem:[%s1581 + $0x120] sm:$0xff]
    %v1670 = vld [vmem:[%s1581 + $0x130] sm:$0xff]
    %v1671 = vld [vmem:[%s1581 + $0x140] sm:$0xff]
    %v1672 = vld [vmem:[%s1581 + $0x150] sm:$0xff]
    %v1673 = vld [vmem:[%s1581 + $0x160] sm:$0xff]
    %v1674 = vld [vmem:[%s1581 + $0x170] sm:$0xff]
    %v1675 = vld [vmem:[%s1581 + $0x180] sm:$0xff]
    %v1676 = vld [vmem:[%s1581 + $0x190] sm:$0xff]
    %v1677 = vld [vmem:[%s1581 + $0x1a0] sm:$0xff]
    %v1678 = vld [vmem:[%s1581 + $0x1b0] sm:$0xff]
    %v1679 = vld [vmem:[%s1581 + $0x1c0] sm:$0xff]
    %v1680 = vld [vmem:[%s1581 + $0x1d0] sm:$0xff]
    %v1681 = vld [vmem:[%s1581 + $0x1e0] sm:$0xff]
    %v1682 = vld [vmem:[%s1581 + $0x1f0] sm:$0xff]
    %1683 = vmatpush.xpose.msra.mxu0 0.0
    %1684 = vmatpush.xpose.msra.mxu0 0.0
    %1685 = vmatpush.xpose.msra.mxu0 0.0
    %1686 = vmatpush.xpose.msra.mxu0 0.0
    %1687 = vmatpush.xpose.msra.mxu0 0.0
    %1688 = vmatpush.xpose.msra.mxu0 0.0
    %1689 = vmatpush.xpose.msra.mxu0 0.0
    %1690 = vmatpush.xpose.msra.mxu0 0.0
    %1691 = vmatpush.xpose.msra.mxu0 0.0
    %1692 = vmatpush.xpose.msra.mxu0 0.0
    %1693 = vmatpush.xpose.msra.mxu0 0.0
    %1694 = vmatpush.xpose.msra.mxu0 0.0
    %1695 = vmatpush.xpose.msra.mxu0 0.0
    %1696 = vmatpush.xpose.msra.mxu0 0.0
    %1697 = vmatpush.xpose.msra.mxu0 %v1580
    %1698 = vmatpush.xpose.msra.mxu0 %v1579
    %1699 = vmatmul.f32.gmra.mxu0 %v1667
    %v1700 = vpop.f32.mrf.mxu0
    %v1701 = vadd.f32 0.0, %v1700
    %1702 = vmatmul.f32.gmra.mxu0 %v1668
    %v1703 = vpop.f32.mrf.mxu0
    %v1704 = vadd.f32 0.0, %v1703
    %1705 = vmatmul.f32.gmra.mxu0 %v1669
    %v1706 = vpop.f32.mrf.mxu0
    %v1707 = vadd.f32 0.0, %v1706
    %1708 = vmatmul.f32.gmra.mxu0 %v1670
    %v1709 = vpop.f32.mrf.mxu0
    %v1710 = vadd.f32 0.0, %v1709
    %1711 = vmatmul.f32.gmra.mxu0 %v1671
    %v1712 = vpop.f32.mrf.mxu0
    %v1713 = vadd.f32 0.0, %v1712
    %1714 = vmatmul.f32.gmra.mxu0 %v1672
    %v1715 = vpop.f32.mrf.mxu0
    %v1716 = vadd.f32 0.0, %v1715
    %1717 = vmatmul.f32.gmra.mxu0 %v1673
    %v1718 = vpop.f32.mrf.mxu0
    %v1719 = vadd.f32 0.0, %v1718
    %1720 = vmatmul.f32.gmra.mxu0 %v1674
    %v1721 = vpop.f32.mrf.mxu0
    %v1722 = vadd.f32 0.0, %v1721
    %1723 = vmatmul.f32.gmra.mxu0 %v1675
    %v1724 = vpop.f32.mrf.mxu0
    %v1725 = vadd.f32 0.0, %v1724
    %1726 = vmatmul.f32.gmra.mxu0 %v1676
    %v1727 = vpop.f32.mrf.mxu0
    %v1728 = vadd.f32 0.0, %v1727
    %1729 = vmatmul.f32.gmra.mxu0 %v1677
    %v1730 = vpop.f32.mrf.mxu0
    %v1731 = vadd.f32 0.0, %v1730
    %1732 = vmatmul.f32.gmra.mxu0 %v1678
    %v1733 = vpop.f32.mrf.mxu0
    %v1734 = vadd.f32 0.0, %v1733
    %1735 = vmatmul.f32.gmra.mxu0 %v1679
    %v1736 = vpop.f32.mrf.mxu0
    %v1737 = vadd.f32 0.0, %v1736
    %1738 = vmatmul.f32.gmra.mxu0 %v1680
    %v1739 = vpop.f32.mrf.mxu0
    %v1740 = vadd.f32 0.0, %v1739
    %1741 = vmatmul.f32.gmra.mxu0 %v1681
    %v1742 = vpop.f32.mrf.mxu0
    %v1743 = vadd.f32 0.0, %v1742
    %1744 = vmatmul.f32.gmra.mxu0 %v1682
    %v1745 = vpop.f32.mrf.mxu0
    %v1746 = vadd.f32 0.0, %v1745
    %1747 = vdwg.mxu0
    %v1748 = vsel %vm481, %v1701, 0.0
    %v1749 = vsel %vm482, %v1704, 0.0
    %v1750 = vsel %vm483, %v1707, 0.0
    %v1751 = vsel %vm484, %v1710, 0.0
    %v1752 = vsel %vm485, %v1713, 0.0
    %v1753 = vsel %vm486, %v1716, 0.0
    %v1754 = vsel %vm487, %v1719, 0.0
    %v1755 = vsel %vm488, %v1722, 0.0
    %v1756 = vsel %vm489, %v1725, 0.0
    %v1757 = vsel %vm490, %v1728, 0.0
    %v1758 = vsel %vm491, %v1731, 0.0
    %v1759 = vsel %vm492, %v1734, 0.0
    %v1760 = vsel %vm493, %v1737, 0.0
    %v1761 = vsel %vm494, %v1740, 0.0
    %v1762 = vsel %vm495, %v1743, 0.0
    %v1763 = vsel %vm496, %v1746, 0.0
    %1764 = vmatpush.msra.mxu0 %v1763
    %1765 = vmatpush.msra.mxu0 %v1762
    %1766 = vmatpush.msra.mxu0 %v1761
    %1767 = vmatpush.msra.mxu0 %v1760
    %1768 = vmatpush.msra.mxu0 %v1759
    %1769 = vmatpush.msra.mxu0 %v1758
    %1770 = vmatpush.msra.mxu0 %v1757
    %1771 = vmatpush.msra.mxu0 %v1756
    %1772 = vmatpush.msra.mxu0 %v1755
    %1773 = vmatpush.msra.mxu0 %v1754
    %1774 = vmatpush.msra.mxu0 %v1753
    %1775 = vmatpush.msra.mxu0 %v1752
    %1776 = vmatpush.msra.mxu0 %v1751
    %1777 = vmatpush.msra.mxu0 %v1750
    %1778 = vmatpush.msra.mxu0 %v1749
    %1779 = vmatpush.msra.mxu0 %v1748
    %1780 = vmatmul.f32.gmra.mxu0 %v1639
    %v1781 = vpop.f32.mrf.mxu0
    %v1782 = vadd.f32 %v227, %v1781
    %1783 = vmatmul.f32.gmra.mxu0 %v1642
    %v1784 = vpop.f32.mrf.mxu0
    %v1785 = vadd.f32 %v228, %v1784
    %1786 = vdwg.mxu0
    %v1787 = vsel %vm536, %v1782, -inf
    %1788 = vmax.xlane.f32.xlu0 %v1787
    %v1789 = vpop.xlane.xlu0 %1788
    %v1790 = vsel %vm536, %v1785, -inf
    %1791 = vmax.xlane.f32.xlu0 %v1790
    %v1792 = vpop.xlane.xlu0 %1791
    %v1793 = vsub.f32 %v1782, %v1789
    %v1794 = vsub.f32 %v1785, %v1792
    %v1795 = vmul.f32 %v1793, 1.442695
    %v1796 = vpow.pop %v1795
    %v1797 = vmul.f32 %v1794, 1.442695
    %v1798 = vpow.pop %v1797
    %v1799 = vsel %vm536, %v1796, 0.0
    %1800 = vadd.xlane.f32.xlu0 %v1799
    %v1801 = vpop.xlane.xlu0 %1800
    %v1802 = vsel %vm536, %v1798, 0.0
    %1803 = vadd.xlane.f32.xlu0 %v1802
    %v1804 = vpop.xlane.xlu0 %1803
    %v1805 = vrcp.pop %v1801
    %v1806 = vmul.f32 %v1801, %v1805
    %v1807 = vsub.f32 1.0, %v1806
    %v1808 = vmul.f32 %v1805, %v1807
    %v1809 = vadd.f32 %v1805, %v1808
    %vm1810 = vweird.f32 %v1801
    %vm1811 = vweird.f32 %v1805
    %vm1812 = vmor %vm1810, %vm1811
    %v1813 = vsel %vm1812, %v1805, %v1809
    %v1814 = vand.u32 2147483647, %v1801
    %vm1815 = vcmp.eq.f32.partialorder %v1814, 8.507059e+37
    %v1816 = vand.u32 %v1801, 2147483648
    %v1817 = vor.u32 1.1754944e-38, %v1816
    %v1818 = vsel %vm1815, %v1817, %v1813
    %v1819 = vmul.f32 %v1796, %v1818
    %v1820 = vrcp.pop %v1804
    %v1821 = vmul.f32 %v1804, %v1820
    %v1822 = vsub.f32 1.0, %v1821
    %v1823 = vmul.f32 %v1820, %v1822
    %v1824 = vadd.f32 %v1820, %v1823
    %vm1825 = vweird.f32 %v1804
    %vm1826 = vweird.f32 %v1820
    %vm1827 = vmor %vm1825, %vm1826
    %v1828 = vsel %vm1827, %v1820, %v1824
    %v1829 = vand.u32 2147483647, %v1804
    %vm1830 = vcmp.eq.f32.partialorder %v1829, 8.507059e+37
    %v1831 = vand.u32 %v1804, 2147483648
    %v1832 = vor.u32 1.1754944e-38, %v1831
    %v1833 = vsel %vm1830, %v1832, %v1828
    %v1834 = vmul.f32 %v1798, %v1833
    %v1836 = vsel %vm536, %v1819, 0
    %v1839 = vsel %vm536, %v1834, 0
    %1841 = vmatpush.msra.mxu0 0.0
    %1842 = vmatpush.msra.mxu0 0.0
    %1843 = vmatpush.msra.mxu0 0.0
    %1844 = vmatpush.msra.mxu0 0.0
    %1845 = vmatpush.msra.mxu0 0.0
    %1846 = vmatpush.msra.mxu0 0.0
    %1847 = vmatpush.msra.mxu0 0.0
    %1848 = vmatpush.msra.mxu0 0.0
    %1849 = vmatpush.msra.mxu0 0.0
    %1850 = vmatpush.msra.mxu0 0.0
    %1851 = vmatpush.msra.mxu0 0.0
    %1852 = vmatpush.msra.mxu0 0.0
    %1853 = vmatpush.msra.mxu0 0.0
    %1854 = vmatpush.msra.mxu0 0.0
    %1855 = vmatpush.msra.mxu0 %v1665
    %1856 = vmatpush.msra.mxu0 %v1662
    %1857 = vmatmul.f32.gmra.mxu0 %v1836
    %v1858 = vpop.f32.mrf.mxu0
    %v1859 = vadd.f32 0.0, %v1858
    %1860 = vmatmul.f32.gmra.mxu0 %v1839
    %v1861 = vpop.f32.mrf.mxu0
    %v1862 = vadd.f32 0.0, %v1861
    %1863 = vdwg.mxu0
    %v1864 = vsel %vm615, %v1859, 0.0
    %v1865 = vsel %vm615, %v1862, 0.0
    %v1866 = vadd.f32 %v1864, 0.0
    %v1867 = vadd.f32 %v1865, 0.0
    %v1868 = vsel %vm636, %v1701, 0.0
    %v1869 = vsel %vm637, %v1704, 0.0
    %v1870 = vsel %vm638, %v1707, 0.0
    %v1871 = vsel %vm639, %v1710, 0.0
    %v1872 = vsel %vm640, %v1713, 0.0
    %v1873 = vsel %vm641, %v1716, 0.0
    %v1874 = vsel %vm642, %v1719, 0.0
    %v1875 = vsel %vm643, %v1722, 0.0
    %v1876 = vsel %vm644, %v1725, 0.0
    %v1877 = vsel %vm645, %v1728, 0.0
    %v1878 = vsel %vm646, %v1731, 0.0
    %v1879 = vsel %vm647, %v1734, 0.0
    %v1880 = vsel %vm648, %v1737, 0.0
    %v1881 = vsel %vm649, %v1740, 0.0
    %v1882 = vsel %vm650, %v1743, 0.0
    %v1883 = vsel %vm651, %v1746, 0.0
    %1884 = vmatpush.msra.mxu0 %v1883
    %1885 = vmatpush.msra.mxu0 %v1882
    %1886 = vmatpush.msra.mxu0 %v1881
    %1887 = vmatpush.msra.mxu0 %v1880
    %1888 = vmatpush.msra.mxu0 %v1879
    %1889 = vmatpush.msra.mxu0 %v1878
    %1890 = vmatpush.msra.mxu0 %v1877
    %1891 = vmatpush.msra.mxu0 %v1876
    %1892 = vmatpush.msra.mxu0 %v1875
    %1893 = vmatpush.msra.mxu0 %v1874
    %1894 = vmatpush.msra.mxu0 %v1873
    %1895 = vmatpush.msra.mxu0 %v1872
    %1896 = vmatpush.msra.mxu0 %v1871
    %1897 = vmatpush.msra.mxu0 %v1870
    %1898 = vmatpush.msra.mxu0 %v1869
    %1899 = vmatpush.msra.mxu0 %v1868
    %1900 = vmatmul.f32.gmra.mxu0 %v1639
    %v1901 = vpop.f32.mrf.mxu0
    %v1902 = vadd.f32 %v227, %v1901
    %1903 = vmatmul.f32.gmra.mxu0 %v1642
    %v1904 = vpop.f32.mrf.mxu0
    %v1905 = vadd.f32 %v228, %v1904
    %1906 = vdwg.mxu0
    %v1907 = vsel %vm536, %v1902, -inf
    %1908 = vmax.xlane.f32.xlu0 %v1907
    %v1909 = vpop.xlane.xlu0 %1908
    %v1910 = vsel %vm536, %v1905, -inf
    %1911 = vmax.xlane.f32.xlu0 %v1910
    %v1912 = vpop.xlane.xlu0 %1911
    %v1913 = vsub.f32 %v1902, %v1909
    %v1914 = vsub.f32 %v1905, %v1912
    %v1915 = vmul.f32 %v1913, 1.442695
    %v1916 = vpow.pop %v1915
    %v1917 = vmul.f32 %v1914, 1.442695
    %v1918 = vpow.pop %v1917
    %v1919 = vsel %vm536, %v1916, 0.0
    %1920 = vadd.xlane.f32.xlu0 %v1919
    %v1921 = vpop.xlane.xlu0 %1920
    %v1922 = vsel %vm536, %v1918, 0.0
    %1923 = vadd.xlane.f32.xlu0 %v1922
    %v1924 = vpop.xlane.xlu0 %1923
    %v1925 = vrcp.pop %v1921
    %v1926 = vmul.f32 %v1921, %v1925
    %v1927 = vsub.f32 1.0, %v1926
    %v1928 = vmul.f32 %v1925, %v1927
    %v1929 = vadd.f32 %v1925, %v1928
    %vm1930 = vweird.f32 %v1921
    %vm1931 = vweird.f32 %v1925
    %vm1932 = vmor %vm1930, %vm1931
    %v1933 = vsel %vm1932, %v1925, %v1929
    %v1934 = vand.u32 2147483647, %v1921
    %vm1935 = vcmp.eq.f32.partialorder %v1934, 8.507059e+37
    %v1936 = vand.u32 %v1921, 2147483648
    %v1937 = vor.u32 1.1754944e-38, %v1936
    %v1938 = vsel %vm1935, %v1937, %v1933
    %v1939 = vmul.f32 %v1916, %v1938
    %v1940 = vrcp.pop %v1924
    %v1941 = vmul.f32 %v1924, %v1940
    %v1942 = vsub.f32 1.0, %v1941
    %v1943 = vmul.f32 %v1940, %v1942
    %v1944 = vadd.f32 %v1940, %v1943
    %vm1945 = vweird.f32 %v1924
    %vm1946 = vweird.f32 %v1940
    %vm1947 = vmor %vm1945, %vm1946
    %v1948 = vsel %vm1947, %v1940, %v1944
    %v1949 = vand.u32 2147483647, %v1924
    %vm1950 = vcmp.eq.f32.partialorder %v1949, 8.507059e+37
    %v1951 = vand.u32 %v1924, 2147483648
    %v1952 = vor.u32 1.1754944e-38, %v1951
    %v1953 = vsel %vm1950, %v1952, %v1948
    %v1954 = vmul.f32 %v1918, %v1953
    %v1956 = vsel %vm536, %v1939, 0
    %v1959 = vsel %vm536, %v1954, 0
    %1961 = vmatpush.msra.mxu0 0.0
    %1962 = vmatpush.msra.mxu0 0.0
    %1963 = vmatpush.msra.mxu0 0.0
    %1964 = vmatpush.msra.mxu0 0.0
    %1965 = vmatpush.msra.mxu0 0.0
    %1966 = vmatpush.msra.mxu0 0.0
    %1967 = vmatpush.msra.mxu0 0.0
    %1968 = vmatpush.msra.mxu0 0.0
    %1969 = vmatpush.msra.mxu0 0.0
    %1970 = vmatpush.msra.mxu0 0.0
    %1971 = vmatpush.msra.mxu0 0.0
    %1972 = vmatpush.msra.mxu0 0.0
    %1973 = vmatpush.msra.mxu0 0.0
    %1974 = vmatpush.msra.mxu0 0.0
    %1975 = vmatpush.msra.mxu0 %v1665
    %1976 = vmatpush.msra.mxu0 %v1662
    %1977 = vmatmul.f32.gmra.mxu0 %v1956
    %v1978 = vpop.f32.mrf.mxu0
    %v1979 = vadd.f32 0.0, %v1978
    %1980 = vmatmul.f32.gmra.mxu0 %v1959
    %v1981 = vpop.f32.mrf.mxu0
    %v1982 = vadd.f32 0.0, %v1981
    %1983 = vdwg.mxu0
    %v1984 = vsel %vm769, %v1979, 0.0
    %v1985 = vsel %vm769, %v1982, 0.0
    %v1986 = vadd.f32 %v1866, %v1984
    %v1987 = vadd.f32 %v1867, %v1985
    %v1988 = vld [vmem:[%s1581 + $0x108] sm:$0xff]
    %v1989 = vld [vmem:[%s1581 + $0x118] sm:$0xff]
    %v1990 = vld [vmem:[%s1581 + $0x128] sm:$0xff]
    %v1991 = vld [vmem:[%s1581 + $0x138] sm:$0xff]
    %v1992 = vld [vmem:[%s1581 + $0x148] sm:$0xff]
    %v1993 = vld [vmem:[%s1581 + $0x158] sm:$0xff]
    %v1994 = vld [vmem:[%s1581 + $0x168] sm:$0xff]
    %v1995 = vld [vmem:[%s1581 + $0x178] sm:$0xff]
    %v1996 = vld [vmem:[%s1581 + $0x188] sm:$0xff]
    %v1997 = vld [vmem:[%s1581 + $0x198] sm:$0xff]
    %v1998 = vld [vmem:[%s1581 + $0x1a8] sm:$0xff]
    %v1999 = vld [vmem:[%s1581 + $0x1b8] sm:$0xff]
    %v2000 = vld [vmem:[%s1581 + $0x1c8] sm:$0xff]
    %v2001 = vld [vmem:[%s1581 + $0x1d8] sm:$0xff]
    %v2002 = vld [vmem:[%s1581 + $0x1e8] sm:$0xff]
    %v2003 = vld [vmem:[%s1581 + $0x1f8] sm:$0xff]
    %v2004 = vld [vmem:[%s1614 + $0x1] ss:$0 sm:$0xff]
    %2005 = vmatpush.msra.mxu0 %v2003
    %2006 = vmatpush.msra.mxu0 %v2002
    %2007 = vmatpush.msra.mxu0 %v2001
    %2008 = vmatpush.msra.mxu0 %v2000
    %2009 = vmatpush.msra.mxu0 %v1999
    %2010 = vmatpush.msra.mxu0 %v1998
    %2011 = vmatpush.msra.mxu0 %v1997
    %2012 = vmatpush.msra.mxu0 %v1996
    %2013 = vmatpush.msra.mxu0 %v1995
    %2014 = vmatpush.msra.mxu0 %v1994
    %2015 = vmatpush.msra.mxu0 %v1993
    %2016 = vmatpush.msra.mxu0 %v1992
    %2017 = vmatpush.msra.mxu0 %v1991
    %2018 = vmatpush.msra.mxu0 %v1990
    %2019 = vmatpush.msra.mxu0 %v1989
    %2020 = vmatpush.msra.mxu0 %v1988
    %2021 = vmatmul.f32.gmra.mxu0 %v1986
    %v2022 = vpop.f32.mrf.mxu0
    %v2023 = vadd.f32 %v2004, %v2022
    %2024 = vmatmul.f32.gmra.mxu0 %v1987
    %v2025 = vpop.f32.mrf.mxu0
    %v2026 = vadd.f32 %v2004, %v2025
    %2027 = vdwg.mxu0
    %v2028 = vadd.f32 %v1579, %v2023
    %v2029 = vadd.f32 %v1580, %v2026
    %v2030 = vld [vmem:[%s1614 + $0x5] ss:$0 sm:$0xff]
    %v2031 = vld [vmem:[%s1614 + $0xd] ss:$0 sm:$0xff]
    %2032 = vadd.xlane.f32.xlu0 %v2028
    %v2033 = vpop.xlane.xlu0 %2032
    %2034 = vadd.xlane.f32.xlu0 %v2029
    %v2035 = vpop.xlane.xlu0 %2034
    %v2036 = vmul.f32 %v2033, %v828
    %v2037 = vmul.f32 %v2035, %v828
    %v2038 = vsub.f32 %v2028, %v2036
    %v2039 = vsub.f32 %v2029, %v2037
    %v2040 = vmul.f32 %v2038, %v2038
    %v2041 = vmul.f32 %v2039, %v2039
    %2042 = vadd.xlane.f32.xlu0 %v2040
    %v2043 = vpop.xlane.xlu0 %2042
    %2044 = vadd.xlane.f32.xlu0 %v2041
    %v2045 = vpop.xlane.xlu0 %2044
    %v2046 = vmul.f32 %v2043, %v828
    %v2047 = vmul.f32 %v2045, %v828
    %v2048 = vadd.f32 %v2046, 1e-05
    %v2049 = vadd.f32 %v2047, 1e-05
    %v2050 = vrsqrt.pop %v2048
    %v2051 = vmul.f32 %v2050, %v2048
    %v2052 = vmul.f32 %v2051, %v2050
    %v2053 = vmul.f32 0.5, %v2052
    %v2054 = vsub.f32 1.5, %v2053
    %v2055 = vmul.f32 %v2050, %v2054
    %vm2056 = vweird.f32 %v2048
    %vm2057 = vweird.f32 %v2050
    %vm2058 = vmor %vm2056, %vm2057
    %v2059 = vsel %vm2058, %v2050, %v2055
    %v2060 = vrsqrt.pop %v2049
    %v2061 = vmul.f32 %v2060, %v2049
    %v2062 = vmul.f32 %v2061, %v2060
    %v2063 = vmul.f32 0.5, %v2062
    %v2064 = vsub.f32 1.5, %v2063
    %v2065 = vmul.f32 %v2060, %v2064
    %vm2066 = vweird.f32 %v2049
    %vm2067 = vweird.f32 %v2060
    %vm2068 = vmor %vm2066, %vm2067
    %v2069 = vsel %vm2068, %v2060, %v2065
    %v2070 = vmul.f32 %v2038, %v2059
    %v2071 = vmul.f32 %v2039, %v2069
    %v2072 = vmul.f32 %v2070, %v2030
    %v2073 = vmul.f32 %v2071, %v2030
    %v2074 = vadd.f32 %v2072, %v2031
    %v2075 = vadd.f32 %v2073, %v2031
    %v2076 = vld [vmem:[%s1581 + $0x200] sm:$0xff]
    %v2077 = vld [vmem:[%s1581 + $0x210] sm:$0xff]
    %v2078 = vld [vmem:[%s1581 + $0x220] sm:$0xff]
    %v2079 = vld [vmem:[%s1581 + $0x230] sm:$0xff]
    %v2080 = vld [vmem:[%s1581 + $0x240] sm:$0xff]
    %v2081 = vld [vmem:[%s1581 + $0x250] sm:$0xff]
    %v2082 = vld [vmem:[%s1581 + $0x260] sm:$0xff]
    %v2083 = vld [vmem:[%s1581 + $0x270] sm:$0xff]
    %v2084 = vld [vmem:[%s1581 + $0x280] sm:$0xff]
    %v2085 = vld [vmem:[%s1581 + $0x290] sm:$0xff]
    %v2086 = vld [vmem:[%s1581 + $0x2a0] sm:$0xff]
    %v2087 = vld [vmem:[%s1581 + $0x2b0] sm:$0xff]
    %v2088 = vld [vmem:[%s1581 + $0x2c0] sm:$0xff]
    %v2089 = vld [vmem:[%s1581 + $0x2d0] sm:$0xff]
    %v2090 = vld [vmem:[%s1581 + $0x2e0] sm:$0xff]
    %v2091 = vld [vmem:[%s1581 + $0x2f0] sm:$0xff]
    %v2092 = vld [vmem:[%s1614 + $0x9] ss:$0 sm:$0xff]
    %2093 = vmatpush.msra.mxu0 %v2091
    %2094 = vmatpush.msra.mxu0 %v2090
    %2095 = vmatpush.msra.mxu0 %v2089
    %2096 = vmatpush.msra.mxu0 %v2088
    %2097 = vmatpush.msra.mxu0 %v2087
    %2098 = vmatpush.msra.mxu0 %v2086
    %2099 = vmatpush.msra.mxu0 %v2085
    %2100 = vmatpush.msra.mxu0 %v2084
    %2101 = vmatpush.msra.mxu0 %v2083
    %2102 = vmatpush.msra.mxu0 %v2082
    %2103 = vmatpush.msra.mxu0 %v2081
    %2104 = vmatpush.msra.mxu0 %v2080
    %2105 = vmatpush.msra.mxu0 %v2079
    %2106 = vmatpush.msra.mxu0 %v2078
    %2107 = vmatpush.msra.mxu0 %v2077
    %2108 = vmatpush.msra.mxu0 %v2076
    %2109 = vmatmul.f32.gmra.mxu0 %v2074
    %v2110 = vpop.f32.mrf.mxu0
    %v2111 = vadd.f32 %v2092, %v2110
    %2112 = vmatmul.f32.gmra.mxu0 %v2075
    %v2113 = vpop.f32.mrf.mxu0
    %v2114 = vadd.f32 %v2092, %v2113
    %2115 = vdwg.mxu0
    %v2116 = vld [vmem:[%s1581 + $0x208] sm:$0xff]
    %v2117 = vld [vmem:[%s1581 + $0x218] sm:$0xff]
    %v2118 = vld [vmem:[%s1581 + $0x228] sm:$0xff]
    %v2119 = vld [vmem:[%s1581 + $0x238] sm:$0xff]
    %v2120 = vld [vmem:[%s1581 + $0x248] sm:$0xff]
    %v2121 = vld [vmem:[%s1581 + $0x258] sm:$0xff]
    %v2122 = vld [vmem:[%s1581 + $0x268] sm:$0xff]
    %v2123 = vld [vmem:[%s1581 + $0x278] sm:$0xff]
    %v2124 = vld [vmem:[%s1581 + $0x288] sm:$0xff]
    %v2125 = vld [vmem:[%s1581 + $0x298] sm:$0xff]
    %v2126 = vld [vmem:[%s1581 + $0x2a8] sm:$0xff]
    %v2127 = vld [vmem:[%s1581 + $0x2b8] sm:$0xff]
    %v2128 = vld [vmem:[%s1581 + $0x2c8] sm:$0xff]
    %v2129 = vld [vmem:[%s1581 + $0x2d8] sm:$0xff]
    %v2130 = vld [vmem:[%s1581 + $0x2e8] sm:$0xff]
    %v2131 = vld [vmem:[%s1581 + $0x2f8] sm:$0xff]
    %2132 = vmatpush.xpose.msra.mxu0 0.0
    %2133 = vmatpush.xpose.msra.mxu0 0.0
    %2134 = vmatpush.xpose.msra.mxu0 0.0
    %2135 = vmatpush.xpose.msra.mxu0 0.0
    %2136 = vmatpush.xpose.msra.mxu0 0.0
    %2137 = vmatpush.xpose.msra.mxu0 0.0
    %2138 = vmatpush.xpose.msra.mxu0 0.0
    %2139 = vmatpush.xpose.msra.mxu0 0.0
    %2140 = vmatpush.xpose.msra.mxu0 0.0
    %2141 = vmatpush.xpose.msra.mxu0 0.0
    %2142 = vmatpush.xpose.msra.mxu0 0.0
    %2143 = vmatpush.xpose.msra.mxu0 0.0
    %2144 = vmatpush.xpose.msra.mxu0 %v298
    %2145 = vmatpush.xpose.msra.mxu0 %v295
    %2146 = vmatpush.xpose.msra.mxu0 %v292
    %2147 = vmatpush.xpose.msra.mxu0 %v289
    %2148 = vmatmul.f32.gmra.mxu0 %v2116
    %v2149 = vpop.f32.mrf.mxu0
    %v2150 = vadd.f32 0.0, %v2149
    %2151 = vmatmul.f32.gmra.mxu0 %v2117
    %v2152 = vpop.f32.mrf.mxu0
    %v2153 = vadd.f32 0.0, %v2152
    %2154 = vmatmul.f32.gmra.mxu0 %v2118
    %v2155 = vpop.f32.mrf.mxu0
    %v2156 = vadd.f32 0.0, %v2155
    %2157 = vmatmul.f32.gmra.mxu0 %v2119
    %v2158 = vpop.f32.mrf.mxu0
    %v2159 = vadd.f32 0.0, %v2158
    %2160 = vmatmul.f32.gmra.mxu0 %v2120
    %v2161 = vpop.f32.mrf.mxu0
    %v2162 = vadd.f32 0.0, %v2161
    %2163 = vmatmul.f32.gmra.mxu0 %v2121
    %v2164 = vpop.f32.mrf.mxu0
    %v2165 = vadd.f32 0.0, %v2164
    %2166 = vmatmul.f32.gmra.mxu0 %v2122
    %v2167 = vpop.f32.mrf.mxu0
    %v2168 = vadd.f32 0.0, %v2167
    %2169 = vmatmul.f32.gmra.mxu0 %v2123
    %v2170 = vpop.f32.mrf.mxu0
    %v2171 = vadd.f32 0.0, %v2170
    %2172 = vmatmul.f32.gmra.mxu0 %v2124
    %v2173 = vpop.f32.mrf.mxu0
    %v2174 = vadd.f32 0.0, %v2173
    %2175 = vmatmul.f32.gmra.mxu0 %v2125
    %v2176 = vpop.f32.mrf.mxu0
    %v2177 = vadd.f32 0.0, %v2176
    %2178 = vmatmul.f32.gmra.mxu0 %v2126
    %v2179 = vpop.f32.mrf.mxu0
    %v2180 = vadd.f32 0.0, %v2179
    %2181 = vmatmul.f32.gmra.mxu0 %v2127
    %v2182 = vpop.f32.mrf.mxu0
    %v2183 = vadd.f32 0.0, %v2182
    %2184 = vmatmul.f32.gmra.mxu0 %v2128
    %v2185 = vpop.f32.mrf.mxu0
    %v2186 = vadd.f32 0.0, %v2185
    %2187 = vmatmul.f32.gmra.mxu0 %v2129
    %v2188 = vpop.f32.mrf.mxu0
    %v2189 = vadd.f32 0.0, %v2188
    %2190 = vmatmul.f32.gmra.mxu0 %v2130
    %v2191 = vpop.f32.mrf.mxu0
    %v2192 = vadd.f32 0.0, %v2191
    %2193 = vmatmul.f32.gmra.mxu0 %v2131
    %v2194 = vpop.f32.mrf.mxu0
    %v2195 = vadd.f32 0.0, %v2194
    %2196 = vdwg.mxu0
    %v2197 = vld [vmem:[%s1581 + $0x300] sm:$0xff]
    %v2198 = vld [vmem:[%s1581 + $0x310] sm:$0xff]
    %v2199 = vld [vmem:[%s1581 + $0x320] sm:$0xff]
    %v2200 = vld [vmem:[%s1581 + $0x330] sm:$0xff]
    %v2201 = vld [vmem:[%s1581 + $0x340] sm:$0xff]
    %v2202 = vld [vmem:[%s1581 + $0x350] sm:$0xff]
    %v2203 = vld [vmem:[%s1581 + $0x360] sm:$0xff]
    %v2204 = vld [vmem:[%s1581 + $0x370] sm:$0xff]
    %v2205 = vld [vmem:[%s1581 + $0x380] sm:$0xff]
    %v2206 = vld [vmem:[%s1581 + $0x390] sm:$0xff]
    %v2207 = vld [vmem:[%s1581 + $0x3a0] sm:$0xff]
    %v2208 = vld [vmem:[%s1581 + $0x3b0] sm:$0xff]
    %v2209 = vld [vmem:[%s1581 + $0x3c0] sm:$0xff]
    %v2210 = vld [vmem:[%s1581 + $0x3d0] sm:$0xff]
    %v2211 = vld [vmem:[%s1581 + $0x3e0] sm:$0xff]
    %v2212 = vld [vmem:[%s1581 + $0x3f0] sm:$0xff]
    %v2213 = vld [vmem:[%s1614 + $0x2] ss:$0 sm:$0xff]
    %2214 = vmatpush.msra.mxu0 %v2212
    %2215 = vmatpush.msra.mxu0 %v2211
    %2216 = vmatpush.msra.mxu0 %v2210
    %2217 = vmatpush.msra.mxu0 %v2209
    %2218 = vmatpush.msra.mxu0 %v2208
    %2219 = vmatpush.msra.mxu0 %v2207
    %2220 = vmatpush.msra.mxu0 %v2206
    %2221 = vmatpush.msra.mxu0 %v2205
    %2222 = vmatpush.msra.mxu0 %v2204
    %2223 = vmatpush.msra.mxu0 %v2203
    %2224 = vmatpush.msra.mxu0 %v2202
    %2225 = vmatpush.msra.mxu0 %v2201
    %2226 = vmatpush.msra.mxu0 %v2200
    %2227 = vmatpush.msra.mxu0 %v2199
    %2228 = vmatpush.msra.mxu0 %v2198
    %2229 = vmatpush.msra.mxu0 %v2197
    %2230 = vmatmul.f32.gmra.mxu0 %v289
    %v2231 = vpop.f32.mrf.mxu0
    %v2232 = vadd.f32 %v2213, %v2231
    %2233 = vmatmul.f32.gmra.mxu0 %v292
    %v2234 = vpop.f32.mrf.mxu0
    %v2235 = vadd.f32 %v2213, %v2234
    %2236 = vmatmul.f32.gmra.mxu0 %v295
    %v2237 = vpop.f32.mrf.mxu0
    %v2238 = vadd.f32 %v2213, %v2237
    %2239 = vmatmul.f32.gmra.mxu0 %v298
    %v2240 = vpop.f32.mrf.mxu0
    %v2241 = vadd.f32 %v2213, %v2240
    %2242 = vdwg.mxu0
    %v2243 = vsel %vm481, %v2150, 0.0
    %v2244 = vsel %vm482, %v2153, 0.0
    %v2245 = vsel %vm483, %v2156, 0.0
    %v2246 = vsel %vm484, %v2159, 0.0
    %v2247 = vsel %vm485, %v2162, 0.0
    %v2248 = vsel %vm486, %v2165, 0.0
    %v2249 = vsel %vm487, %v2168, 0.0
    %v2250 = vsel %vm488, %v2171, 0.0
    %v2251 = vsel %vm489, %v2174, 0.0
    %v2252 = vsel %vm490, %v2177, 0.0
    %v2253 = vsel %vm491, %v2180, 0.0
    %v2254 = vsel %vm492, %v2183, 0.0
    %v2255 = vsel %vm493, %v2186, 0.0
    %v2256 = vsel %vm494, %v2189, 0.0
    %v2257 = vsel %vm495, %v2192, 0.0
    %v2258 = vsel %vm496, %v2195, 0.0
    %2259 = vmatpush.msra.mxu0 %v2258
    %2260 = vmatpush.msra.mxu0 %v2257
    %2261 = vmatpush.msra.mxu0 %v2256
    %2262 = vmatpush.msra.mxu0 %v2255
    %2263 = vmatpush.msra.mxu0 %v2254
    %2264 = vmatpush.msra.mxu0 %v2253
    %2265 = vmatpush.msra.mxu0 %v2252
    %2266 = vmatpush.msra.mxu0 %v2251
    %2267 = vmatpush.msra.mxu0 %v2250
    %2268 = vmatpush.msra.mxu0 %v2249
    %2269 = vmatpush.msra.mxu0 %v2248
    %2270 = vmatpush.msra.mxu0 %v2247
    %2271 = vmatpush.msra.mxu0 %v2246
    %2272 = vmatpush.msra.mxu0 %v2245
    %2273 = vmatpush.msra.mxu0 %v2244
    %2274 = vmatpush.msra.mxu0 %v2243
    %2275 = vmatmul.f32.gmra.mxu0 %v2111
    %v2276 = vpop.f32.mrf.mxu0
    %v2277 = vadd.f32 %v241, %v2276
    %2278 = vmatmul.f32.gmra.mxu0 %v2114
    %v2279 = vpop.f32.mrf.mxu0
    %v2280 = vadd.f32 %v242, %v2279
    %2281 = vdwg.mxu0
    %v2282 = vsel %vm1075, %v2277, -inf
    %2283 = vmax.xlane.f32.xlu0 %v2282
    %v2284 = vpop.xlane.xlu0 %2283
    %v2285 = vsel %vm1075, %v2280, -inf
    %2286 = vmax.xlane.f32.xlu0 %v2285
    %v2287 = vpop.xlane.xlu0 %2286
    %v2288 = vsub.f32 %v2277, %v2284
    %v2289 = vsub.f32 %v2280, %v2287
    %v2290 = vmul.f32 %v2288, 1.442695
    %v2291 = vpow.pop %v2290
    %v2292 = vmul.f32 %v2289, 1.442695
    %v2293 = vpow.pop %v2292
    %v2294 = vsel %vm1075, %v2291, 0.0
    %2295 = vadd.xlane.f32.xlu0 %v2294
    %v2296 = vpop.xlane.xlu0 %2295
    %v2297 = vsel %vm1075, %v2293, 0.0
    %2298 = vadd.xlane.f32.xlu0 %v2297
    %v2299 = vpop.xlane.xlu0 %2298
    %v2300 = vrcp.pop %v2296
    %v2301 = vmul.f32 %v2296, %v2300
    %v2302 = vsub.f32 1.0, %v2301
    %v2303 = vmul.f32 %v2300, %v2302
    %v2304 = vadd.f32 %v2300, %v2303
    %vm2305 = vweird.f32 %v2296
    %vm2306 = vweird.f32 %v2300
    %vm2307 = vmor %vm2305, %vm2306
    %v2308 = vsel %vm2307, %v2300, %v2304
    %v2309 = vand.u32 2147483647, %v2296
    %vm2310 = vcmp.eq.f32.partialorder %v2309, 8.507059e+37
    %v2311 = vand.u32 %v2296, 2147483648
    %v2312 = vor.u32 1.1754944e-38, %v2311
    %v2313 = vsel %vm2310, %v2312, %v2308
    %v2314 = vmul.f32 %v2291, %v2313
    %v2315 = vrcp.pop %v2299
    %v2316 = vmul.f32 %v2299, %v2315
    %v2317 = vsub.f32 1.0, %v2316
    %v2318 = vmul.f32 %v2315, %v2317
    %v2319 = vadd.f32 %v2315, %v2318
    %vm2320 = vweird.f32 %v2299
    %vm2321 = vweird.f32 %v2315
    %vm2322 = vmor %vm2320, %vm2321
    %v2323 = vsel %vm2322, %v2315, %v2319
    %v2324 = vand.u32 2147483647, %v2299
    %vm2325 = vcmp.eq.f32.partialorder %v2324, 8.507059e+37
    %v2326 = vand.u32 %v2299, 2147483648
    %v2327 = vor.u32 1.1754944e-38, %v2326
    %v2328 = vsel %vm2325, %v2327, %v2323
    %v2329 = vmul.f32 %v2293, %v2328
    %v2331 = vsel %vm1075, %v2314, 0
    %v2334 = vsel %vm1075, %v2329, 0
    %2336 = vmatpush.msra.mxu0 0.0
    %2337 = vmatpush.msra.mxu0 0.0
    %2338 = vmatpush.msra.mxu0 0.0
    %2339 = vmatpush.msra.mxu0 0.0
    %2340 = vmatpush.msra.mxu0 0.0
    %2341 = vmatpush.msra.mxu0 0.0
    %2342 = vmatpush.msra.mxu0 0.0
    %2343 = vmatpush.msra.mxu0 0.0
    %2344 = vmatpush.msra.mxu0 0.0
    %2345 = vmatpush.msra.mxu0 0.0
    %2346 = vmatpush.msra.mxu0 0.0
    %2347 = vmatpush.msra.mxu0 0.0
    %2348 = vmatpush.msra.mxu0 %v2241
    %2349 = vmatpush.msra.mxu0 %v2238
    %2350 = vmatpush.msra.mxu0 %v2235
    %2351 = vmatpush.msra.mxu0 %v2232
    %2352 = vmatmul.f32.gmra.mxu0 %v2331
    %v2353 = vpop.f32.mrf.mxu0
    %v2354 = vadd.f32 0.0, %v2353
    %2355 = vmatmul.f32.gmra.mxu0 %v2334
    %v2356 = vpop.f32.mrf.mxu0
    %v2357 = vadd.f32 0.0, %v2356
    %2358 = vdwg.mxu0
    %v2359 = vsel %vm615, %v2354, 0.0
    %v2360 = vsel %vm615, %v2357, 0.0
    %v2361 = vadd.f32 %v2359, 0.0
    %v2362 = vadd.f32 %v2360, 0.0
    %v2363 = vsel %vm636, %v2150, 0.0
    %v2364 = vsel %vm637, %v2153, 0.0
    %v2365 = vsel %vm638, %v2156, 0.0
    %v2366 = vsel %vm639, %v2159, 0.0
    %v2367 = vsel %vm640, %v2162, 0.0
    %v2368 = vsel %vm641, %v2165, 0.0
    %v2369 = vsel %vm642, %v2168, 0.0
    %v2370 = vsel %vm643, %v2171, 0.0
    %v2371 = vsel %vm644, %v2174, 0.0
    %v2372 = vsel %vm645, %v2177, 0.0
    %v2373 = vsel %vm646, %v2180, 0.0
    %v2374 = vsel %vm647, %v2183, 0.0
    %v2375 = vsel %vm648, %v2186, 0.0
    %v2376 = vsel %vm649, %v2189, 0.0
    %v2377 = vsel %vm650, %v2192, 0.0
    %v2378 = vsel %vm651, %v2195, 0.0
    %2379 = vmatpush.msra.mxu0 %v2378
    %2380 = vmatpush.msra.mxu0 %v2377
    %2381 = vmatpush.msra.mxu0 %v2376
    %2382 = vmatpush.msra.mxu0 %v2375
    %2383 = vmatpush.msra.mxu0 %v2374
    %2384 = vmatpush.msra.mxu0 %v2373
    %2385 = vmatpush.msra.mxu0 %v2372
    %2386 = vmatpush.msra.mxu0 %v2371
    %2387 = vmatpush.msra.mxu0 %v2370
    %2388 = vmatpush.msra.mxu0 %v2369
    %2389 = vmatpush.msra.mxu0 %v2368
    %2390 = vmatpush.msra.mxu0 %v2367
    %2391 = vmatpush.msra.mxu0 %v2366
    %2392 = vmatpush.msra.mxu0 %v2365
    %2393 = vmatpush.msra.mxu0 %v2364
    %2394 = vmatpush.msra.mxu0 %v2363
    %2395 = vmatmul.f32.gmra.mxu0 %v2111
    %v2396 = vpop.f32.mrf.mxu0
    %v2397 = vadd.f32 %v241, %v2396
    %2398 = vmatmul.f32.gmra.mxu0 %v2114
    %v2399 = vpop.f32.mrf.mxu0
    %v2400 = vadd.f32 %v242, %v2399
    %2401 = vdwg.mxu0
    %v2402 = vsel %vm1075, %v2397, -inf
    %2403 = vmax.xlane.f32.xlu0 %v2402
    %v2404 = vpop.xlane.xlu0 %2403
    %v2405 = vsel %vm1075, %v2400, -inf
    %2406 = vmax.xlane.f32.xlu0 %v2405
    %v2407 = vpop.xlane.xlu0 %2406
    %v2408 = vsub.f32 %v2397, %v2404
    %v2409 = vsub.f32 %v2400, %v2407
    %v2410 = vmul.f32 %v2408, 1.442695
    %v2411 = vpow.pop %v2410
    %v2412 = vmul.f32 %v2409, 1.442695
    %v2413 = vpow.pop %v2412
    %v2414 = vsel %vm1075, %v2411, 0.0
    %2415 = vadd.xlane.f32.xlu0 %v2414
    %v2416 = vpop.xlane.xlu0 %2415
    %v2417 = vsel %vm1075, %v2413, 0.0
    %2418 = vadd.xlane.f32.xlu0 %v2417
    %v2419 = vpop.xlane.xlu0 %2418
    %v2420 = vrcp.pop %v2416
    %v2421 = vmul.f32 %v2416, %v2420
    %v2422 = vsub.f32 1.0, %v2421
    %v2423 = vmul.f32 %v2420, %v2422
    %v2424 = vadd.f32 %v2420, %v2423
    %vm2425 = vweird.f32 %v2416
    %vm2426 = vweird.f32 %v2420
    %vm2427 = vmor %vm2425, %vm2426
    %v2428 = vsel %vm2427, %v2420, %v2424
    %v2429 = vand.u32 2147483647, %v2416
    %vm2430 = vcmp.eq.f32.partialorder %v2429, 8.507059e+37
    %v2431 = vand.u32 %v2416, 2147483648
    %v2432 = vor.u32 1.1754944e-38, %v2431
    %v2433 = vsel %vm2430, %v2432, %v2428
    %v2434 = vmul.f32 %v2411, %v2433
    %v2435 = vrcp.pop %v2419
    %v2436 = vmul.f32 %v2419, %v2435
    %v2437 = vsub.f32 1.0, %v2436
    %v2438 = vmul.f32 %v2435, %v2437
    %v2439 = vadd.f32 %v2435, %v2438
    %vm2440 = vweird.f32 %v2419
    %vm2441 = vweird.f32 %v2435
    %vm2442 = vmor %vm2440, %vm2441
    %v2443 = vsel %vm2442, %v2435, %v2439
    %v2444 = vand.u32 2147483647, %v2419
    %vm2445 = vcmp.eq.f32.partialorder %v2444, 8.507059e+37
    %v2446 = vand.u32 %v2419, 2147483648
    %v2447 = vor.u32 1.1754944e-38, %v2446
    %v2448 = vsel %vm2445, %v2447, %v2443
    %v2449 = vmul.f32 %v2413, %v2448
    %v2451 = vsel %vm1075, %v2434, 0
    %v2454 = vsel %vm1075, %v2449, 0
    %2456 = vmatpush.msra.mxu0 0.0
    %2457 = vmatpush.msra.mxu0 0.0
    %2458 = vmatpush.msra.mxu0 0.0
    %2459 = vmatpush.msra.mxu0 0.0
    %2460 = vmatpush.msra.mxu0 0.0
    %2461 = vmatpush.msra.mxu0 0.0
    %2462 = vmatpush.msra.mxu0 0.0
    %2463 = vmatpush.msra.mxu0 0.0
    %2464 = vmatpush.msra.mxu0 0.0
    %2465 = vmatpush.msra.mxu0 0.0
    %2466 = vmatpush.msra.mxu0 0.0
    %2467 = vmatpush.msra.mxu0 0.0
    %2468 = vmatpush.msra.mxu0 %v2241
    %2469 = vmatpush.msra.mxu0 %v2238
    %2470 = vmatpush.msra.mxu0 %v2235
    %2471 = vmatpush.msra.mxu0 %v2232
    %2472 = vmatmul.f32.gmra.mxu0 %v2451
    %v2473 = vpop.f32.mrf.mxu0
    %v2474 = vadd.f32 0.0, %v2473
    %2475 = vmatmul.f32.gmra.mxu0 %v2454
    %v2476 = vpop.f32.mrf.mxu0
    %v2477 = vadd.f32 0.0, %v2476
    %2478 = vdwg.mxu0
    %v2479 = vsel %vm769, %v2474, 0.0
    %v2480 = vsel %vm769, %v2477, 0.0
    %v2481 = vadd.f32 %v2361, %v2479
    %v2482 = vadd.f32 %v2362, %v2480
    %v2483 = vld [vmem:[%s1581 + $0x308] sm:$0xff]
    %v2484 = vld [vmem:[%s1581 + $0x318] sm:$0xff]
    %v2485 = vld [vmem:[%s1581 + $0x328] sm:$0xff]
    %v2486 = vld [vmem:[%s1581 + $0x338] sm:$0xff]
    %v2487 = vld [vmem:[%s1581 + $0x348] sm:$0xff]
    %v2488 = vld [vmem:[%s1581 + $0x358] sm:$0xff]
    %v2489 = vld [vmem:[%s1581 + $0x368] sm:$0xff]
    %v2490 = vld [vmem:[%s1581 + $0x378] sm:$0xff]
    %v2491 = vld [vmem:[%s1581 + $0x388] sm:$0xff]
    %v2492 = vld [vmem:[%s1581 + $0x398] sm:$0xff]
    %v2493 = vld [vmem:[%s1581 + $0x3a8] sm:$0xff]
    %v2494 = vld [vmem:[%s1581 + $0x3b8] sm:$0xff]
    %v2495 = vld [vmem:[%s1581 + $0x3c8] sm:$0xff]
    %v2496 = vld [vmem:[%s1581 + $0x3d8] sm:$0xff]
    %v2497 = vld [vmem:[%s1581 + $0x3e8] sm:$0xff]
    %v2498 = vld [vmem:[%s1581 + $0x3f8] sm:$0xff]
    %v2499 = vld [vmem:[%s1614 + $0xa] ss:$0 sm:$0xff]
    %2500 = vmatpush.msra.mxu0 %v2498
    %2501 = vmatpush.msra.mxu0 %v2497
    %2502 = vmatpush.msra.mxu0 %v2496
    %2503 = vmatpush.msra.mxu0 %v2495
    %2504 = vmatpush.msra.mxu0 %v2494
    %2505 = vmatpush.msra.mxu0 %v2493
    %2506 = vmatpush.msra.mxu0 %v2492
    %2507 = vmatpush.msra.mxu0 %v2491
    %2508 = vmatpush.msra.mxu0 %v2490
    %2509 = vmatpush.msra.mxu0 %v2489
    %2510 = vmatpush.msra.mxu0 %v2488
    %2511 = vmatpush.msra.mxu0 %v2487
    %2512 = vmatpush.msra.mxu0 %v2486
    %2513 = vmatpush.msra.mxu0 %v2485
    %2514 = vmatpush.msra.mxu0 %v2484
    %2515 = vmatpush.msra.mxu0 %v2483
    %2516 = vmatmul.f32.gmra.mxu0 %v2481
    %v2517 = vpop.f32.mrf.mxu0
    %v2518 = vadd.f32 %v2499, %v2517
    %2519 = vmatmul.f32.gmra.mxu0 %v2482
    %v2520 = vpop.f32.mrf.mxu0
    %v2521 = vadd.f32 %v2499, %v2520
    %2522 = vdwg.mxu0
    %v2523 = vadd.f32 %v2074, %v2518
    %v2524 = vadd.f32 %v2075, %v2521
    %v2525 = vld [vmem:[%s1614 + $0x6] ss:$0 sm:$0xff]
    %v2526 = vld [vmem:[%s1614 + $0xe] ss:$0 sm:$0xff]
    %2527 = vadd.xlane.f32.xlu0 %v2523
    %v2528 = vpop.xlane.xlu0 %2527
    %2529 = vadd.xlane.f32.xlu0 %v2524
    %v2530 = vpop.xlane.xlu0 %2529
    %v2531 = vmul.f32 %v2528, %v828
    %v2532 = vmul.f32 %v2530, %v828
    %v2533 = vsub.f32 %v2523, %v2531
    %v2534 = vsub.f32 %v2524, %v2532
    %v2535 = vmul.f32 %v2533, %v2533
    %v2536 = vmul.f32 %v2534, %v2534
    %2537 = vadd.xlane.f32.xlu0 %v2535
    %v2538 = vpop.xlane.xlu0 %2537
    %2539 = vadd.xlane.f32.xlu0 %v2536
    %v2540 = vpop.xlane.xlu0 %2539
    %v2541 = vmul.f32 %v2538, %v828
    %v2542 = vmul.f32 %v2540, %v828
    %v2543 = vadd.f32 %v2541, 1e-05
    %v2544 = vadd.f32 %v2542, 1e-05
    %v2545 = vrsqrt.pop %v2543
    %v2546 = vmul.f32 %v2545, %v2543
    %v2547 = vmul.f32 %v2546, %v2545
    %v2548 = vmul.f32 0.5, %v2547
    %v2549 = vsub.f32 1.5, %v2548
    %v2550 = vmul.f32 %v2545, %v2549
    %vm2551 = vweird.f32 %v2543
    %vm2552 = vweird.f32 %v2545
    %vm2553 = vmor %vm2551, %vm2552
    %v2554 = vsel %vm2553, %v2545, %v2550
    %v2555 = vrsqrt.pop %v2544
    %v2556 = vmul.f32 %v2555, %v2544
    %v2557 = vmul.f32 %v2556, %v2555
    %v2558 = vmul.f32 0.5, %v2557
    %v2559 = vsub.f32 1.5, %v2558
    %v2560 = vmul.f32 %v2555, %v2559
    %vm2561 = vweird.f32 %v2544
    %vm2562 = vweird.f32 %v2555
    %vm2563 = vmor %vm2561, %vm2562
    %v2564 = vsel %vm2563, %v2555, %v2560
    %v2565 = vmul.f32 %v2533, %v2554
    %v2566 = vmul.f32 %v2534, %v2564
    %v2567 = vmul.f32 %v2565, %v2525
    %v2568 = vmul.f32 %v2566, %v2525
    %v2569 = vadd.f32 %v2567, %v2526
    %v2570 = vadd.f32 %v2568, %v2526
    %v2571 = vld [vmem:[%s1581 + $0x400] sm:$0xff]
    %v2572 = vld [vmem:[%s1581 + $0x408] sm:$0xff]
    %v2573 = vld [vmem:[%s1581 + $0x410] sm:$0xff]
    %v2574 = vld [vmem:[%s1581 + $0x418] sm:$0xff]
    %v2575 = vld [vmem:[%s1581 + $0x420] sm:$0xff]
    %v2576 = vld [vmem:[%s1581 + $0x428] sm:$0xff]
    %v2577 = vld [vmem:[%s1581 + $0x430] sm:$0xff]
    %v2578 = vld [vmem:[%s1581 + $0x438] sm:$0xff]
    %v2579 = vld [vmem:[%s1581 + $0x440] sm:$0xff]
    %v2580 = vld [vmem:[%s1581 + $0x448] sm:$0xff]
    %v2581 = vld [vmem:[%s1581 + $0x450] sm:$0xff]
    %v2582 = vld [vmem:[%s1581 + $0x458] sm:$0xff]
    %v2583 = vld [vmem:[%s1581 + $0x460] sm:$0xff]
    %v2584 = vld [vmem:[%s1581 + $0x468] sm:$0xff]
    %v2585 = vld [vmem:[%s1581 + $0x470] sm:$0xff]
    %v2586 = vld [vmem:[%s1581 + $0x478] sm:$0xff]
    %v2587 = vld [vmem:[%s1581 + $0x480] sm:$0xff]
    %v2588 = vld [vmem:[%s1581 + $0x488] sm:$0xff]
    %v2589 = vld [vmem:[%s1581 + $0x490] sm:$0xff]
    %v2590 = vld [vmem:[%s1581 + $0x498] sm:$0xff]
    %v2591 = vld [vmem:[%s1581 + $0x4a0] sm:$0xff]
    %v2592 = vld [vmem:[%s1581 + $0x4a8] sm:$0xff]
    %v2593 = vld [vmem:[%s1581 + $0x4b0] sm:$0xff]
    %v2594 = vld [vmem:[%s1581 + $0x4b8] sm:$0xff]
    %v2595 = vld [vmem:[%s1581 + $0x4c0] sm:$0xff]
    %v2596 = vld [vmem:[%s1581 + $0x4c8] sm:$0xff]
    %v2597 = vld [vmem:[%s1581 + $0x4d0] sm:$0xff]
    %v2598 = vld [vmem:[%s1581 + $0x4d8] sm:$0xff]
    %v2599 = vld [vmem:[%s1581 + $0x4e0] sm:$0xff]
    %v2600 = vld [vmem:[%s1581 + $0x4e8] sm:$0xff]
    %v2601 = vld [vmem:[%s1581 + $0x4f0] sm:$0xff]
    %v2602 = vld [vmem:[%s1581 + $0x4f8] sm:$0xff]
    %s2603 = scalar_lea.vmem %s1614, 3 [#allocation8]
    %v2604 = vld [vmem:[%s2603] ss:$8 sm:$0x3]
    %v2606 = vperm.slane %v2604, 0
    %v2607 = vperm.slane %v2604, 1
    %2610 = vmatpush.msra.mxu0 %v2601
    %2611 = vmatpush.msra.mxu0 %v2599
    %2612 = vmatpush.msra.mxu0 %v2597
    %2613 = vmatpush.msra.mxu0 %v2595
    %2614 = vmatpush.msra.mxu0 %v2593
    %2615 = vmatpush.msra.mxu0 %v2591
    %2616 = vmatpush.msra.mxu0 %v2589
    %2617 = vmatpush.msra.mxu0 %v2587
    %2618 = vmatpush.msra.mxu0 %v2585
    %2619 = vmatpush.msra.mxu0 %v2583
    %2620 = vmatpush.msra.mxu0 %v2581
    %2621 = vmatpush.msra.mxu0 %v2579
    %2622 = vmatpush.msra.mxu0 %v2577
    %2623 = vmatpush.msra.mxu0 %v2575
    %2624 = vmatpush.msra.mxu0 %v2573
    %2625 = vmatpush.msra.mxu0 %v2571
    %2626 = vmatmul.f32.gmra.mxu0 %v2569
    %v2627 = vpop.f32.mrf.mxu0
    %v2628 = vadd.f32 %v2606, %v2627
    %2629 = vmatmul.f32.gmra.mxu0 %v2570
    %v2630 = vpop.f32.mrf.mxu0
    %v2631 = vadd.f32 %v2606, %v2630
    %2632 = vdwg.mxu0
    %2633 = vmatpush.msra.mxu0 %v2602
    %2634 = vmatpush.msra.mxu0 %v2600
    %2635 = vmatpush.msra.mxu0 %v2598
    %2636 = vmatpush.msra.mxu0 %v2596
    %2637 = vmatpush.msra.mxu0 %v2594
    %2638 = vmatpush.msra.mxu0 %v2592
    %2639 = vmatpush.msra.mxu0 %v2590
    %2640 = vmatpush.msra.mxu0 %v2588
    %2641 = vmatpush.msra.mxu0 %v2586
    %2642 = vmatpush.msra.mxu0 %v2584
    %2643 = vmatpush.msra.mxu0 %v2582
    %2644 = vmatpush.msra.mxu0 %v2580
    %2645 = vmatpush.msra.mxu0 %v2578
    %2646 = vmatpush.msra.mxu0 %v2576
    %2647 = vmatpush.msra.mxu0 %v2574
    %2648 = vmatpush.msra.mxu0 %v2572
    %2649 = vmatmul.f32.gmra.mxu0 %v2569
    %v2650 = vpop.f32.mrf.mxu0
    %v2651 = vadd.f32 %v2607, %v2650
    %2652 = vmatmul.f32.gmra.mxu0 %v2570
    %v2653 = vpop.f32.mrf.mxu0
    %v2654 = vadd.f32 %v2607, %v2653
    %2655 = vdwg.mxu0
    %v2656 = vmax.f32 %v2628, 0.0
    %v2657 = vmax.f32 %v2651, 0.0
    %v2658 = vmax.f32 %v2631, 0.0
    %v2659 = vmax.f32 %v2654, 0.0
    %v2660 = vld [vmem:[%s1581 + $0x500] sm:$0xff]
    %v2661 = vld [vmem:[%s1581 + $0x510] sm:$0xff]
    %v2662 = vld [vmem:[%s1581 + $0x520] sm:$0xff]
    %v2663 = vld [vmem:[%s1581 + $0x530] sm:$0xff]
    %v2664 = vld [vmem:[%s1581 + $0x540] sm:$0xff]
    %v2665 = vld [vmem:[%s1581 + $0x550] sm:$0xff]
    %v2666 = vld [vmem:[%s1581 + $0x560] sm:$0xff]
    %v2667 = vld [vmem:[%s1581 + $0x570] sm:$0xff]
    %v2668 = vld [vmem:[%s1581 + $0x580] sm:$0xff]
    %v2669 = vld [vmem:[%s1581 + $0x590] sm:$0xff]
    %v2670 = vld [vmem:[%s1581 + $0x5a0] sm:$0xff]
    %v2671 = vld [vmem:[%s1581 + $0x5b0] sm:$0xff]
    %v2672 = vld [vmem:[%s1581 + $0x5c0] sm:$0xff]
    %v2673 = vld [vmem:[%s1581 + $0x5d0] sm:$0xff]
    %v2674 = vld [vmem:[%s1581 + $0x5e0] sm:$0xff]
    %v2675 = vld [vmem:[%s1581 + $0x5f0] sm:$0xff]
    %v2676 = vld [vmem:[%s1581 + $0x600] sm:$0xff]
    %v2677 = vld [vmem:[%s1581 + $0x610] sm:$0xff]
    %v2678 = vld [vmem:[%s1581 + $0x620] sm:$0xff]
    %v2679 = vld [vmem:[%s1581 + $0x630] sm:$0xff]
    %v2680 = vld [vmem:[%s1581 + $0x640] sm:$0xff]
    %v2681 = vld [vmem:[%s1581 + $0x650] sm:$0xff]
    %v2682 = vld [vmem:[%s1581 + $0x660] sm:$0xff]
    %v2683 = vld [vmem:[%s1581 + $0x670] sm:$0xff]
    %v2684 = vld [vmem:[%s1581 + $0x680] sm:$0xff]
    %v2685 = vld [vmem:[%s1581 + $0x690] sm:$0xff]
    %v2686 = vld [vmem:[%s1581 + $0x6a0] sm:$0xff]
    %v2687 = vld [vmem:[%s1581 + $0x6b0] sm:$0xff]
    %v2688 = vld [vmem:[%s1581 + $0x6c0] sm:$0xff]
    %v2689 = vld [vmem:[%s1581 + $0x6d0] sm:$0xff]
    %v2690 = vld [vmem:[%s1581 + $0x6e0] sm:$0xff]
    %v2691 = vld [vmem:[%s1581 + $0x6f0] sm:$0xff]
    %v2692 = vld [vmem:[%s1614 + $0x4] ss:$0 sm:$0xff]
    %2693 = vmatpush.msra.mxu0 %v2675
    %2694 = vmatpush.msra.mxu0 %v2674
    %2695 = vmatpush.msra.mxu0 %v2673
    %2696 = vmatpush.msra.mxu0 %v2672
    %2697 = vmatpush.msra.mxu0 %v2671
    %2698 = vmatpush.msra.mxu0 %v2670
    %2699 = vmatpush.msra.mxu0 %v2669
    %2700 = vmatpush.msra.mxu0 %v2668
    %2701 = vmatpush.msra.mxu0 %v2667
    %2702 = vmatpush.msra.mxu0 %v2666
    %2703 = vmatpush.msra.mxu0 %v2665
    %2704 = vmatpush.msra.mxu0 %v2664
    %2705 = vmatpush.msra.mxu0 %v2663
    %2706 = vmatpush.msra.mxu0 %v2662
    %2707 = vmatpush.msra.mxu0 %v2661
    %2708 = vmatpush.msra.mxu0 %v2660
    %2709 = vmatmul.f32.gmra.mxu0 %v2656
    %v2710 = vpop.f32.mrf.mxu0
    %v2711 = vadd.f32 %v2692, %v2710
    %2712 = vmatmul.f32.gmra.mxu0 %v2658
    %v2713 = vpop.f32.mrf.mxu0
    %v2714 = vadd.f32 %v2692, %v2713
    %2715 = vdwg.mxu0
    %2716 = vmatpush.msra.mxu0 %v2691
    %2717 = vmatpush.msra.mxu0 %v2690
    %2718 = vmatpush.msra.mxu0 %v2689
    %2719 = vmatpush.msra.mxu0 %v2688
    %2720 = vmatpush.msra.mxu0 %v2687
    %2721 = vmatpush.msra.mxu0 %v2686
    %2722 = vmatpush.msra.mxu0 %v2685
    %2723 = vmatpush.msra.mxu0 %v2684
    %2724 = vmatpush.msra.mxu0 %v2683
    %2725 = vmatpush.msra.mxu0 %v2682
    %2726 = vmatpush.msra.mxu0 %v2681
    %2727 = vmatpush.msra.mxu0 %v2680
    %2728 = vmatpush.msra.mxu0 %v2679
    %2729 = vmatpush.msra.mxu0 %v2678
    %2730 = vmatpush.msra.mxu0 %v2677
    %2731 = vmatpush.msra.mxu0 %v2676
    %2732 = vmatmul.f32.gmra.mxu0 %v2657
    %v2733 = vpop.f32.mrf.mxu0
    %v2734 = vadd.f32 %v2711, %v2733
    %2735 = vmatmul.f32.gmra.mxu0 %v2659
    %v2736 = vpop.f32.mrf.mxu0
    %v2737 = vadd.f32 %v2714, %v2736
    %2738 = vdwg.mxu0
    %v2739 = vadd.f32 %v2569, %v2734
    %v2740 = vadd.f32 %v2570, %v2737
    %v2741 = vld [vmem:[%s1614 + $0x7] ss:$0 sm:$0xff]
    %v2742 = vld [vmem:[%s1614 + $0xf] ss:$0 sm:$0xff]
    %2743 = vadd.xlane.f32.xlu0 %v2739
    %v2744 = vpop.xlane.xlu0 %2743
    %2745 = vadd.xlane.f32.xlu0 %v2740
    %v2746 = vpop.xlane.xlu0 %2745
    %v2747 = vmul.f32 %v2744, %v828
    %v2748 = vmul.f32 %v2746, %v828
    %v2749 = vsub.f32 %v2739, %v2747
    %v2750 = vsub.f32 %v2740, %v2748
    %v2751 = vmul.f32 %v2749, %v2749
    %v2752 = vmul.f32 %v2750, %v2750
    %2753 = vadd.xlane.f32.xlu0 %v2751
    %v2754 = vpop.xlane.xlu0 %2753
    %2755 = vadd.xlane.f32.xlu0 %v2752
    %v2756 = vpop.xlane.xlu0 %2755
    %v2757 = vmul.f32 %v2754, %v828
    %v2758 = vmul.f32 %v2756, %v828
    %v2759 = vadd.f32 %v2757, 1e-05
    %v2760 = vadd.f32 %v2758, 1e-05
    %v2761 = vrsqrt.pop %v2759
    %v2762 = vmul.f32 %v2761, %v2759
    %v2763 = vmul.f32 %v2762, %v2761
    %v2764 = vmul.f32 0.5, %v2763
    %v2765 = vsub.f32 1.5, %v2764
    %v2766 = vmul.f32 %v2761, %v2765
    %vm2767 = vweird.f32 %v2759
    %vm2768 = vweird.f32 %v2761
    %vm2769 = vmor %vm2767, %vm2768
    %v2770 = vsel %vm2769, %v2761, %v2766
    %v2771 = vrsqrt.pop %v2760
    %v2772 = vmul.f32 %v2771, %v2760
    %v2773 = vmul.f32 %v2772, %v2771
    %v2774 = vmul.f32 0.5, %v2773
    %v2775 = vsub.f32 1.5, %v2774
    %v2776 = vmul.f32 %v2771, %v2775
    %vm2777 = vweird.f32 %v2760
    %vm2778 = vweird.f32 %v2771
    %vm2779 = vmor %vm2777, %vm2778
    %v2780 = vsel %vm2779, %v2771, %v2776
    %v2781 = vmul.f32 %v2749, %v2770
    %v2782 = vmul.f32 %v2750, %v2780
    %v2783 = vmul.f32 %v2781, %v2741
    %v2784 = vmul.f32 %v2782, %v2741
    %v2785 = vadd.f32 %v2783, %v2742
    %v2786 = vadd.f32 %v2784, %v2742
    %2787 = vst [vmem:[#allocation10] sm:$0xff] %v2785
    %2788 = vst [vmem:[#allocation10 + $0x8] sm:$0xff] %v2786
    // Predicated region
    $region34: #{image2token_forward_packed.1} parent=1 // pred_check
      _
    $region35: #{image2token_forward_packed.1} parent=1 // pred_check_branch
      %2790 = sbr.rel (0) target = $region37
    $region36: #{image2token_forward_packed.1} parent=1 // pred_region
      %2792 = vsyncadd [#allocation4], 0
      %s2793 = sshll.u32 [#allocation10], 4
      %s2794 = int_to_ptr.vmem [resolvable:$true] %s2793
      %s2795 = sshll.u32 %s4, 4
      %s2796 = int_to_ptr.hbm [resolvable:$true] %s2795
      %2801 = dma.vmem_to_hbm [thread:$0]  %s2794, 256, %s2796, [#allocation4], 128, 128, 8
    $region37: #{image2token_forward_packed.1} parent=1 // pred_fallthru
      _
    // Predicated region
    $region38: #{image2token_forward_packed.1} parent=1 // pred_check
      _
    $region39: #{image2token_forward_packed.1} parent=1 // pred_check_branch
      %2803 = sbr.rel (0) target = $region41
    $region40: #{image2token_forward_packed.1} parent=1 // pred_region
      %2805 = dma.done [#allocation4], 256
    $region41: #{image2token_forward_packed.1} parent=1 // pred_fallthru
      _
    %2806 = vsyncpa [#allocation3], 1
    %2807 = vsyncpa [#allocation6], 1
    %2808 = vsyncpa [#allocation9], 1
    %2809 = vsyncpa [#allocation4], 1

</llo_original>
